<compile_context>
chip_gen: v6e
topology: v6e:2x2x1
jax: 0.10.0
libtpu: 0.0.40
codegen_flags: <defaults>
</compile_context>

<pallas_src>
import functools

import jax
import jax.numpy as jnp
from jax.experimental import pallas as pl
from jax.experimental.pallas import tpu as pltpu


def _round_up(x, m):
    return ((x + m - 1) // m) * m


def _fused_gru_kernel(x_ref, wih_ref, whh_ref, bgi_ref, bhhn_ref, o_ref,
                      h_state, gi_buf, act_buf,
                      *, n_layers, t_chunk, h_pad, compute_dtype):
    """All GRU layers for one (batch_tile, time_chunk) block.

    x_ref:    (t_chunk, b_tile, H_pad)      f32  embedding chunk
    wih_ref:  (L, H_pad, 3*H_pad)           cdtype  input-hidden weights (pre-T, padded)
    whh_ref:  (L, H_pad, 3*H_pad)           cdtype  hidden-hidden weights (pre-T, padded)
    bgi_ref:  (L, 1, 3*H_pad)               f32  b_ih (+ b_hh folded for r,z gates)
    bhhn_ref: (L, 1, H_pad)                 f32  b_hh for the n gate
    o_ref:    (t_chunk, b_tile, H_pad)      f32  last-layer hidden states
    h_state:  (L, b_tile, H_pad)            f32  recurrent states, persist across chunks
    gi_buf:   (t_chunk, b_tile, 3*H_pad)    f32  hoisted input projection for the chunk
    act_buf:  (t_chunk, b_tile, H_pad)      f32  per-layer chunk activations
    """
    c = pl.program_id(1)                       # time-chunk index (sequential axis)
    b_tile = x_ref.shape[1]
    tb = t_chunk * b_tile
    H = h_pad

    @pl.when(c == 0)
    def _():
        # New batch tile -> reset recurrent state of every layer (h0 = 0).
        h_state[...] = jnp.zeros_like(h_state)

    cur = x_ref[...]                           # (t_chunk, b_tile, H_pad) f32

    for l in range(n_layers):
        # ---- Hoisted input projection: one MXU matmul for the whole chunk ----
        # (M = t_chunk*b_tile instead of T tiny M=B matmuls on the serial path.)
        x2d = cur.reshape(tb, H).astype(compute_dtype)
        gi = jnp.dot(x2d, wih_ref[l], preferred_element_type=jnp.float32) + bgi_ref[l]
        gi_buf[...] = gi.reshape(t_chunk, b_tile, 3 * H)

        # ---- Serial recurrence over the chunk (only h @ W_hh remains here) ----
        def step(t, h):
            gi_t = gi_buf[t]                                          # (b_tile, 3H)
            gh = jnp.dot(h.astype(compute_dtype), whh_ref[l],
                         preferred_element_type=jnp.float32)          # (b_tile, 3H)
            # Gate slices land exactly on 128-lane boundaries (H is padded to 128k).
            r = jax.nn.sigmoid(gi_t[:, :H] + gh[:, :H])
            z = jax.nn.sigmoid(gi_t[:, H:2 * H] + gh[:, H:2 * H])
            n = jnp.tanh(gi_t[:, 2 * H:] + r * (gh[:, 2 * H:] + bhhn_ref[l]))
            h_new = (1.0 - z) * n + z * h
            act_buf[t] = h_new
            return h_new

        h_fin = jax.lax.fori_loop(0, t_chunk, step, h_state[l], unroll=True)
        h_state[l] = h_fin
        cur = act_buf[...]                     # input of the next layer (stays in VMEM)

    o_ref[...] = cur.astype(o_ref.dtype)       # only the last layer hits HBM


def prepare_gru_params(params, compute_dtype=jnp.float32):
    """One-time weight prep: transpose, pad to (8,128)-friendly shapes, stack layers.

    compute_dtype=jnp.bfloat16 is recommended on v6e/v7x (MXU-native; halves weight
    VMEM/DMA); accumulation and gate math stay f32 inside the kernel.
    """
    emb = params["embedding"].astype(jnp.float32)
    H = emb.shape[1]
    H_pad = _round_up(H, 128)
    L = len(params["gru_layers"])

    emb_pad = jnp.zeros((emb.shape[0], H_pad), jnp.float32).at[:, :H].set(emb)

    w_ih_all, w_hh_all, b_gi_all, b_hhn_all = [], [], [], []
    for layer in params["gru_layers"]:
        w_ih = layer["w_ih"].astype(jnp.float32)      # (3H, D_in)  gate order [r, z, n]
        w_hh = layer["w_hh"].astype(jnp.float32)      # (3H, H)
        b_ih = layer["b_ih"].astype(jnp.float32)      # (3H,)
        b_hh = layer["b_hh"].astype(jnp.float32)      # (3H,)
        d_in = w_ih.shape[1]
        assert d_in == H, "time2vec_k=None path: input_size == hidden_size for all layers"

        wi = jnp.zeros((H_pad, 3 * H_pad), jnp.float32)
        wh = jnp.zeros((H_pad, 3 * H_pad), jnp.float32)
        bg = jnp.zeros((1, 3 * H_pad), jnp.float32)
        for g in range(3):
            wi = wi.at[:d_in, g * H_pad:g * H_pad + H].set(w_ih[g * H:(g + 1) * H, :].T)
            wh = wh.at[:H, g * H_pad:g * H_pad + H].set(w_hh[g * H:(g + 1) * H, :].T)
        # Fold b_hh into b_ih for the r and z gates; keep b_hh_n separate (r*(...) term).
        bg = bg.at[0, 0 * H_pad:0 * H_pad + H].set(b_ih[0 * H:1 * H] + b_hh[0 * H:1 * H])
        bg = bg.at[0, 1 * H_pad:1 * H_pad + H].set(b_ih[1 * H:2 * H] + b_hh[1 * H:2 * H])
        bg = bg.at[0, 2 * H_pad:2 * H_pad + H].set(b_ih[2 * H:3 * H])
        bn = jnp.zeros((1, H_pad), jnp.float32).at[0, :H].set(b_hh[2 * H:3 * H])

        w_ih_all.append(wi)
        w_hh_all.append(wh)
        b_gi_all.append(bg)
        b_hhn_all.append(bn)

    return {
        "embedding": emb_pad,                                    # (V, H_pad) f32
        "w_ih": jnp.stack(w_ih_all).astype(compute_dtype),       # (L, H_pad, 3*H_pad)
        "w_hh": jnp.stack(w_hh_all).astype(compute_dtype),       # (L, H_pad, 3*H_pad)
        "b_gi": jnp.stack(b_gi_all),                             # (L, 1, 3*H_pad) f32
        "b_hhn": jnp.stack(b_hhn_all),                           # (L, 1, H_pad)   f32
        "hidden_size": H,
        "h_pad": H_pad,
        "num_layers": L,
    }


def gru_embedder_forward(prepared, event_activities, *, t_chunk=16, b_tile_cap=128):
    """GRUEmbedder.forward (time2vec_k=None path).

    event_activities: (T, B) int32  ->  returns (T, B, hidden_size) float32

    b_tile_cap: per-core batch tile (M of the recurrent matmul); 128 is a good default
    (raise to 256 on v6e/v7x if the workload has that much batch).
    """
    T, B = event_activities.shape
    H = prepared["hidden_size"]
    H_pad = prepared["h_pad"]
    L = prepared["num_layers"]
    cdtype = prepared["w_ih"].dtype

    # Sublane/lane alignment: B -> multiple of 8 (f32 sublane tile), batch tiled for
    # megacore; H already padded to a multiple of 128 in prepare_gru_params.
    b8 = _round_up(max(B, 1), 8)
    b_tile = b8 if b8 <= b_tile_cap else b_tile_cap
    B_pad = _round_up(b8, b_tile)
    t_chunk = max(1, min(t_chunk, T))
    T_pad = _round_up(T, t_chunk)

    # Embedding lookup (plain-JAX gather glue).  Padded time steps / batch rows use
    # index 0 and are discarded after the kernel.
    ids = jnp.zeros((T_pad, B_pad), jnp.int32).at[:T, :B].set(event_activities.astype(jnp.int32))
    x = jnp.take(prepared["embedding"], ids, axis=0)             # (T_pad, B_pad, H_pad) f32

    grid = (B_pad // b_tile, T_pad // t_chunk)
    kernel = functools.partial(
        _fused_gru_kernel,
        n_layers=L, t_chunk=t_chunk, h_pad=H_pad, compute_dtype=cdtype)

    # VMEM footprint at these shapes is far below the scoped default; for large H /
    # long t_chunk (esp. v7x: 64 MiB physical) use bf16 weights, shrink t_chunk and
    # set pltpu.CompilerParams(vmem_limit_bytes=...) explicitly.
    out_pad = pl.pallas_call(
        kernel,
        out_shape=jax.ShapeDtypeStruct((T_pad, B_pad, H_pad), jnp.float32),
        grid_spec=pltpu.PrefetchScalarGridSpec(
            num_scalar_prefetch=0,
            grid=grid,
            in_specs=[
                pl.BlockSpec((t_chunk, b_tile, H_pad), lambda b, c: (c, b, 0)),
                # Weights/biases: constant index_map -> fetched once, VMEM-resident.
                pl.BlockSpec((L, H_pad, 3 * H_pad), lambda b, c: (0, 0, 0)),
                pl.BlockSpec((L, H_pad, 3 * H_pad), lambda b, c: (0, 0, 0)),
                pl.BlockSpec((L, 1, 3 * H_pad), lambda b, c: (0, 0, 0)),
                pl.BlockSpec((L, 1, H_pad), lambda b, c: (0, 0, 0)),
            ],
            out_specs=pl.BlockSpec((t_chunk, b_tile, H_pad), lambda b, c: (c, b, 0)),
            scratch_shapes=[
                pltpu.VMEM((L, b_tile, H_pad), jnp.float32),            # recurrent h per layer
                pltpu.VMEM((t_chunk, b_tile, 3 * H_pad), jnp.float32),  # hoisted input proj
                pltpu.VMEM((t_chunk, b_tile, H_pad), jnp.float32),      # per-layer chunk acts
            ],
        ),
        compiler_params=pltpu.CompilerParams(
            # batch tiles independent (2x on v7x's 2 TCs); time is the recurrence.
            dimension_semantics=("parallel", "arbitrary"),
        ),
    )(x, prepared["w_ih"], prepared["w_hh"], prepared["b_gi"], prepared["b_hhn"])

    return out_pad[:T, :B, :H]


def init_params(key, num_activities, hidden_size, num_gru_layers):
    """Deterministic parameter init mirroring nn.Embedding / nn.GRU shapes (PyTorch layout)."""
    keys = jax.random.split(key, 1 + 4 * num_gru_layers)
    k = 1.0 / jnp.sqrt(jnp.float32(hidden_size))
    params = {
        "embedding": jax.random.normal(keys[0], (num_activities, hidden_size), jnp.float32),
        "gru_layers": [],
    }
    for l in range(num_gru_layers):
        in_size = hidden_size  # no time2vec -> input_size == hidden_size for all layers
        kw = keys[1 + 4 * l: 1 + 4 * (l + 1)]
        params["gru_layers"].append({
            "w_ih": jax.random.uniform(kw[0], (3 * hidden_size, in_size), jnp.float32, -k, k),
            "w_hh": jax.random.uniform(kw[1], (3 * hidden_size, hidden_size), jnp.float32, -k, k),
            "b_ih": jax.random.uniform(kw[2], (3 * hidden_size,), jnp.float32, -k, k),
            "b_hh": jax.random.uniform(kw[3], (3 * hidden_size,), jnp.float32, -k, k),
        })
    return params


def _gru_layer_ref(x, w_ih, w_hh, b_ih, b_hh):
    """Pure-JAX reference (lax.scan), PyTorch eval semantics, for correctness checking."""
    H = w_hh.shape[1]

    def step(h, x_t):
        gi = x_t @ w_ih.T + b_ih
        gh = h @ w_hh.T + b_hh
        r = jax.nn.sigmoid(gi[:, :H] + gh[:, :H])
        z = jax.nn.sigmoid(gi[:, H:2 * H] + gh[:, H:2 * H])
        n = jnp.tanh(gi[:, 2 * H:] + r * gh[:, 2 * H:])
        h_new = (1.0 - z) * n + z * h
        return h_new, h_new

    h0 = jnp.zeros((x.shape[1], H), jnp.float32)
    _, ys = jax.lax.scan(step, h0, x)
    return ys


if __name__ == "__main__":
    num_activities = 10
    hidden_size = 32
    num_gru_layers = 2
    T, B = 8, 2

    key = jax.random.PRNGKey(0)
    pkey, ikey = jax.random.split(key)
    params = init_params(pkey, num_activities, hidden_size, num_gru_layers)
    event_activities = jax.random.randint(ikey, (T, B), 0, num_activities, jnp.int32)

    # Pure-JAX reference (eval-mode PyTorch semantics).
    x_ref = jnp.take(params["embedding"], event_activities, axis=0)
    for layer in params["gru_layers"]:
        x_ref = _gru_layer_ref(x_ref, layer["w_ih"], layer["w_hh"], layer["b_ih"], layer["b_hh"])

    # f32 path: tight cross-check.
    prepared_f32 = prepare_gru_params(params, compute_dtype=jnp.float32)
    out = gru_embedder_forward(prepared_f32, event_activities, t_chunk=8)
    out = jax.block_until_ready(out)
    assert out.shape == (T, B, hidden_size), out.shape
    max_err = float(jnp.max(jnp.abs(out - x_ref)))
    assert jnp.allclose(out, x_ref, atol=1e-5, rtol=1e-5), max_err

    # bf16-weight path (v6e/v7x recommendation): MXU operands bf16, f32 accumulation
    # and gate math; loose tolerance covers weight rounding only.
    prepared_bf16 = prepare_gru_params(params, compute_dtype=jnp.bfloat16)
    out_bf16 = jax.block_until_ready(
        gru_embedder_forward(prepared_bf16, event_activities, t_chunk=8))
    assert out_bf16.shape == (T, B, hidden_size)
    assert bool(jnp.all(jnp.isfinite(out_bf16)))
    assert jnp.allclose(out_bf16, x_ref, atol=1e-1, rtol=1e-1), \
        float(jnp.max(jnp.abs(out_bf16 - x_ref)))

    print("KERNEL_OK")
</pallas_src>

<mosaic_0001>
module attributes {stable_mosaic.version = 11 : i64} {
  func.func @_fused_gru_kernel(%arg0: i32, %arg1: i32, %arg2: memref<8x8x128xf32, #tpu.memory_space<vmem>>, %arg3: memref<2x128x384xf32, #tpu.memory_space<vmem>>, %arg4: memref<2x128x384xf32, #tpu.memory_space<vmem>>, %arg5: memref<2x1x384xf32, #tpu.memory_space<vmem>>, %arg6: memref<2x1x128xf32, #tpu.memory_space<vmem>>, %arg7: memref<8x8x128xf32, #tpu.memory_space<vmem>>, %arg8: memref<2x8x128xf32, #tpu.memory_space<vmem>>, %arg9: memref<8x8x384xf32, #tpu.memory_space<vmem>>, %arg10: memref<8x8x128xf32, #tpu.memory_space<vmem>>) attributes {dimension_semantics = [#tpu.dimension_semantics<parallel>, #tpu.dimension_semantics<arbitrary>], iteration_bounds = array<i64: 1, 1>, scalar_prefetch = 0 : i64, scratch_operands = 3 : i64, tpu.core_type = #tpu.core_type<tc>, window_params = [{transform_indices = @transform_0, window_bounds = array<i64: 8, 8, 128>}, {pipeline_mode = #tpu.pipeline_mode<synchronous>, transform_indices = @transform_1, window_bounds = array<i64: 2, 128, 384>}, {pipeline_mode = #tpu.pipeline_mode<synchronous>, transform_indices = @transform_2, window_bounds = array<i64: 2, 128, 384>}, {pipeline_mode = #tpu.pipeline_mode<synchronous>, transform_indices = @transform_3, window_bounds = array<i64: 2, 1, 384>}, {pipeline_mode = #tpu.pipeline_mode<synchronous>, transform_indices = @transform_4, window_bounds = array<i64: 2, 1, 128>}, {transform_indices = @transform_5, window_bounds = array<i64: 8, 8, 128>}]} {
    %c0_i32 = arith.constant 0 : i32
    %0 = arith.cmpi eq, %arg1, %c0_i32 : i32
    %1 = arith.extui %0 : i1 to i32
    %c0_i32_0 = arith.constant 0 : i32
    %2 = arith.cmpi ne, %1, %c0_i32_0 : i32
    scf.if %2 {
      %cst_276 = arith.constant 0.000000e+00 : f32
      %677 = vector.broadcast %cst_276 : f32 to vector<2x8x128xf32>
      %c0_277 = arith.constant 0 : index
      %c0_278 = arith.constant 0 : index
      %c0_279 = arith.constant 0 : index
      %678 = vector.load %arg8[%c0_277, %c0_278, %c0_279] : memref<2x8x128xf32, #tpu.memory_space<vmem>>, vector<2x8x128xf32>
      tpu.vector_store %arg8[%c0_277, %c0_278, %c0_279], %677 {strides = array<i32>} : memref<2x8x128xf32, #tpu.memory_space<vmem>>, vector<2x8x128xf32>,
    } else {
    }
    %c0 = arith.constant 0 : index
    %c0_1 = arith.constant 0 : index
    %c0_2 = arith.constant 0 : index
    %3 = vector.load %arg2[%c0, %c0_1, %c0_2] : memref<8x8x128xf32, #tpu.memory_space<vmem>>, vector<8x8x128xf32>
    %4 = vector.shape_cast %3 : vector<8x8x128xf32> to vector<64x128xf32>
    %c0_3 = arith.constant 0 : index
    %c0_4 = arith.constant 0 : index
    %c0_5 = arith.constant 0 : index
    %5 = vector.load %arg3[%c0_3, %c0_4, %c0_5] : memref<2x128x384xf32, #tpu.memory_space<vmem>>, vector<1x128x384xf32>
    %6 = vector.shape_cast %5 : vector<1x128x384xf32> to vector<128x384xf32>
    %cst = arith.constant dense<0.000000e+00> : vector<64x384xf32>
    %7 = tpu.matmul %4, %6, %cst {dimension_numbers = #tpu.dot_dimension_numbers<[1], [0], [0], [1], [0, 0, 1, 1], [], []>} : vector<64x128xf32>, vector<128x384xf32>, vector<64x384xf32> -> vector<64x384xf32>
    %c0_6 = arith.constant 0 : index
    %c0_7 = arith.constant 0 : index
    %c0_8 = arith.constant 0 : index
    %8 = vector.load %arg5[%c0_6, %c0_7, %c0_8] : memref<2x1x384xf32, #tpu.memory_space<vmem>>, vector<1x1x384xf32>
    %9 = vector.shape_cast %8 : vector<1x1x384xf32> to vector<1x384xf32>
    %10 = vector.broadcast %9 : vector<1x384xf32> to vector<64x384xf32>
    %11 = arith.addf %7, %10 : vector<64x384xf32>
    %12 = vector.shape_cast %11 : vector<64x384xf32> to vector<8x8x384xf32>
    %c0_9 = arith.constant 0 : index
    %c0_10 = arith.constant 0 : index
    %c0_11 = arith.constant 0 : index
    %13 = vector.load %arg9[%c0_9, %c0_10, %c0_11] : memref<8x8x384xf32, #tpu.memory_space<vmem>>, vector<8x8x384xf32>
    tpu.vector_store %arg9[%c0_9, %c0_10, %c0_11], %12 {strides = array<i32>} : memref<8x8x384xf32, #tpu.memory_space<vmem>>, vector<8x8x384xf32>,
    %c0_12 = arith.constant 0 : index
    %c0_13 = arith.constant 0 : index
    %c0_14 = arith.constant 0 : index
    %14 = vector.load %arg8[%c0_12, %c0_13, %c0_14] : memref<2x8x128xf32, #tpu.memory_space<vmem>>, vector<1x8x128xf32>
    %15 = vector.shape_cast %14 : vector<1x8x128xf32> to vector<8x128xf32>
    %c0_i32_15 = arith.constant 0 : i32
    %16 = arith.index_cast %c0_i32_15 : i32 to index
    %c0_16 = arith.constant 0 : index
    %c0_17 = arith.constant 0 : index
    %17 = vector.load %arg9[%16, %c0_16, %c0_17] : memref<8x8x384xf32, #tpu.memory_space<vmem>>, vector<1x8x384xf32>
    %18 = vector.shape_cast %17 : vector<1x8x384xf32> to vector<8x384xf32>
    %c0_18 = arith.constant 0 : index
    %c0_19 = arith.constant 0 : index
    %c0_20 = arith.constant 0 : index
    %19 = vector.load %arg4[%c0_18, %c0_19, %c0_20] : memref<2x128x384xf32, #tpu.memory_space<vmem>>, vector<1x128x384xf32>
    %20 = vector.shape_cast %19 : vector<1x128x384xf32> to vector<128x384xf32>
    %cst_21 = arith.constant dense<0.000000e+00> : vector<8x384xf32>
    %21 = tpu.matmul %15, %20, %cst_21 {dimension_numbers = #tpu.dot_dimension_numbers<[1], [0], [0], [1], [0, 0, 1, 1], [], []>} : vector<8x128xf32>, vector<128x384xf32>, vector<8x384xf32> -> vector<8x384xf32>
    %22 = vector.extract_strided_slice %18 {offsets = [0, 0], sizes = [8, 128], strides = [1, 1]} : vector<8x384xf32> to vector<8x128xf32>
    %23 = vector.extract_strided_slice %21 {offsets = [0, 0], sizes = [8, 128], strides = [1, 1]} : vector<8x384xf32> to vector<8x128xf32>
    %24 = arith.addf %22, %23 : vector<8x128xf32>
    %25 = arith.negf %24 : vector<8x128xf32>
    %26 = math.exp %25 : vector<8x128xf32>
    %cst_22 = arith.constant 1.000000e+00 : f32
    %27 = vector.broadcast %cst_22 : f32 to vector<8x128xf32>
    %28 = arith.addf %27, %26 : vector<8x128xf32>
    %29 = arith.divf %27, %28 : vector<8x128xf32>
    %30 = vector.extract_strided_slice %18 {offsets = [0, 128], sizes = [8, 128], strides = [1, 1]} : vector<8x384xf32> to vector<8x128xf32>
    %31 = vector.extract_strided_slice %21 {offsets = [0, 128], sizes = [8, 128], strides = [1, 1]} : vector<8x384xf32> to vector<8x128xf32>
    %32 = arith.addf %30, %31 : vector<8x128xf32>
    %33 = arith.negf %32 : vector<8x128xf32>
    %34 = math.exp %33 : vector<8x128xf32>
    %cst_23 = arith.constant 1.000000e+00 : f32
    %35 = vector.broadcast %cst_23 : f32 to vector<8x128xf32>
    %36 = arith.addf %35, %34 : vector<8x128xf32>
    %37 = arith.divf %35, %36 : vector<8x128xf32>
    %38 = vector.extract_strided_slice %18 {offsets = [0, 256], sizes = [8, 128], strides = [1, 1]} : vector<8x384xf32> to vector<8x128xf32>
    %39 = vector.extract_strided_slice %21 {offsets = [0, 256], sizes = [8, 128], strides = [1, 1]} : vector<8x384xf32> to vector<8x128xf32>
    %c0_24 = arith.constant 0 : index
    %c0_25 = arith.constant 0 : index
    %c0_26 = arith.constant 0 : index
    %40 = vector.load %arg6[%c0_24, %c0_25, %c0_26] : memref<2x1x128xf32, #tpu.memory_space<vmem>>, vector<1x1x128xf32>
    %41 = vector.shape_cast %40 : vector<1x1x128xf32> to vector<1x128xf32>
    %42 = vector.broadcast %41 : vector<1x128xf32> to vector<8x128xf32>
    %43 = arith.addf %39, %42 : vector<8x128xf32>
    %44 = arith.mulf %29, %43 : vector<8x128xf32>
    %45 = arith.addf %38, %44 : vector<8x128xf32>
    %46 = math.tanh %45 : vector<8x128xf32>
    %cst_27 = arith.constant 1.000000e+00 : f32
    %47 = vector.broadcast %cst_27 : f32 to vector<8x128xf32>
    %48 = arith.subf %47, %37 : vector<8x128xf32>
    %49 = arith.mulf %48, %46 : vector<8x128xf32>
    %50 = arith.mulf %37, %15 : vector<8x128xf32>
    %51 = arith.addf %49, %50 : vector<8x128xf32>
    %52 = arith.index_cast %c0_i32_15 : i32 to index
    %c0_28 = arith.constant 0 : index
    %c0_29 = arith.constant 0 : index
    %53 = vector.load %arg10[%52, %c0_28, %c0_29] : memref<8x8x128xf32, #tpu.memory_space<vmem>>, vector<1x8x128xf32>
    %54 = vector.shape_cast %53 : vector<1x8x128xf32> to vector<8x128xf32>
    %55 = vector.shape_cast %51 : vector<8x128xf32> to vector<1x8x128xf32>
    tpu.vector_store %arg10[%52, %c0_28, %c0_29], %55 {strides = array<i32>} : memref<8x8x128xf32, #tpu.memory_space<vmem>>, vector<1x8x128xf32>,
    %c1_i32 = arith.constant 1 : i32
    %56 = arith.index_cast %c1_i32 : i32 to index
    %c0_30 = arith.constant 0 : index
    %c0_31 = arith.constant 0 : index
    %57 = vector.load %arg9[%56, %c0_30, %c0_31] : memref<8x8x384xf32, #tpu.memory_space<vmem>>, vector<1x8x384xf32>
    %58 = vector.shape_cast %57 : vector<1x8x384xf32> to vector<8x384xf32>
    %c0_32 = arith.constant 0 : index
    %c0_33 = arith.constant 0 : index
    %c0_34 = arith.constant 0 : index
    %59 = vector.load %arg4[%c0_32, %c0_33, %c0_34] : memref<2x128x384xf32, #tpu.memory_space<vmem>>, vector<1x128x384xf32>
    %60 = vector.shape_cast %59 : vector<1x128x384xf32> to vector<128x384xf32>
    %cst_35 = arith.constant dense<0.000000e+00> : vector<8x384xf32>
    %61 = tpu.matmul %51, %60, %cst_35 {dimension_numbers = #tpu.dot_dimension_numbers<[1], [0], [0], [1], [0, 0, 1, 1], [], []>} : vector<8x128xf32>, vector<128x384xf32>, vector<8x384xf32> -> vector<8x384xf32>
    %62 = vector.extract_strided_slice %58 {offsets = [0, 0], sizes = [8, 128], strides = [1, 1]} : vector<8x384xf32> to vector<8x128xf32>
    %63 = vector.extract_strided_slice %61 {offsets = [0, 0], sizes = [8, 128], strides = [1, 1]} : vector<8x384xf32> to vector<8x128xf32>
    %64 = arith.addf %62, %63 : vector<8x128xf32>
    %65 = arith.negf %64 : vector<8x128xf32>
    %66 = math.exp %65 : vector<8x128xf32>
    %cst_36 = arith.constant 1.000000e+00 : f32
    %67 = vector.broadcast %cst_36 : f32 to vector<8x128xf32>
    %68 = arith.addf %67, %66 : vector<8x128xf32>
    %69 = arith.divf %67, %68 : vector<8x128xf32>
    %70 = vector.extract_strided_slice %58 {offsets = [0, 128], sizes = [8, 128], strides = [1, 1]} : vector<8x384xf32> to vector<8x128xf32>
    %71 = vector.extract_strided_slice %61 {offsets = [0, 128], sizes = [8, 128], strides = [1, 1]} : vector<8x384xf32> to vector<8x128xf32>
    %72 = arith.addf %70, %71 : vector<8x128xf32>
    %73 = arith.negf %72 : vector<8x128xf32>
    %74 = math.exp %73 : vector<8x128xf32>
    %cst_37 = arith.constant 1.000000e+00 : f32
    %75 = vector.broadcast %cst_37 : f32 to vector<8x128xf32>
    %76 = arith.addf %75, %74 : vector<8x128xf32>
    %77 = arith.divf %75, %76 : vector<8x128xf32>
    %78 = vector.extract_strided_slice %58 {offsets = [0, 256], sizes = [8, 128], strides = [1, 1]} : vector<8x384xf32> to vector<8x128xf32>
    %79 = vector.extract_strided_slice %61 {offsets = [0, 256], sizes = [8, 128], strides = [1, 1]} : vector<8x384xf32> to vector<8x128xf32>
    %c0_38 = arith.constant 0 : index
    %c0_39 = arith.constant 0 : index
    %c0_40 = arith.constant 0 : index
    %80 = vector.load %arg6[%c0_38, %c0_39, %c0_40] : memref<2x1x128xf32, #tpu.memory_space<vmem>>, vector<1x1x128xf32>
    %81 = vector.shape_cast %80 : vector<1x1x128xf32> to vector<1x128xf32>
    %82 = vector.broadcast %81 : vector<1x128xf32> to vector<8x128xf32>
    %83 = arith.addf %79, %82 : vector<8x128xf32>
    %84 = arith.mulf %69, %83 : vector<8x128xf32>
    %85 = arith.addf %78, %84 : vector<8x128xf32>
    %86 = math.tanh %85 : vector<8x128xf32>
    %cst_41 = arith.constant 1.000000e+00 : f32
    %87 = vector.broadcast %cst_41 : f32 to vector<8x128xf32>
    %88 = arith.subf %87, %77 : vector<8x128xf32>
    %89 = arith.mulf %88, %86 : vector<8x128xf32>
    %90 = arith.mulf %77, %51 : vector<8x128xf32>
    %91 = arith.addf %89, %90 : vector<8x128xf32>
    %92 = arith.index_cast %c1_i32 : i32 to index
    %c0_42 = arith.constant 0 : index
    %c0_43 = arith.constant 0 : index
    %93 = vector.load %arg10[%92, %c0_42, %c0_43] : memref<8x8x128xf32, #tpu.memory_space<vmem>>, vector<1x8x128xf32>
    %94 = vector.shape_cast %93 : vector<1x8x128xf32> to vector<8x128xf32>
    %95 = vector.shape_cast %91 : vector<8x128xf32> to vector<1x8x128xf32>
    tpu.vector_store %arg10[%92, %c0_42, %c0_43], %95 {strides = array<i32>} : memref<8x8x128xf32, #tpu.memory_space<vmem>>, vector<1x8x128xf32>,
    %c2_i32 = arith.constant 2 : i32
    %96 = arith.index_cast %c2_i32 : i32 to index
    %c0_44 = arith.constant 0 : index
    %c0_45 = arith.constant 0 : index
    %97 = vector.load %arg9[%96, %c0_44, %c0_45] : memref<8x8x384xf32, #tpu.memory_space<vmem>>, vector<1x8x384xf32>
    %98 = vector.shape_cast %97 : vector<1x8x384xf32> to vector<8x384xf32>
    %c0_46 = arith.constant 0 : index
    %c0_47 = arith.constant 0 : index
    %c0_48 = arith.constant 0 : index
    %99 = vector.load %arg4[%c0_46, %c0_47, %c0_48] : memref<2x128x384xf32, #tpu.memory_space<vmem>>, vector<1x128x384xf32>
    %100 = vector.shape_cast %99 : vector<1x128x384xf32> to vector<128x384xf32>
    %cst_49 = arith.constant dense<0.000000e+00> : vector<8x384xf32>
    %101 = tpu.matmul %91, %100, %cst_49 {dimension_numbers = #tpu.dot_dimension_numbers<[1], [0], [0], [1], [0, 0, 1, 1], [], []>} : vector<8x128xf32>, vector<128x384xf32>, vector<8x384xf32> -> vector<8x384xf32>
    %102 = vector.extract_strided_slice %98 {offsets = [0, 0], sizes = [8, 128], strides = [1, 1]} : vector<8x384xf32> to vector<8x128xf32>
    %103 = vector.extract_strided_slice %101 {offsets = [0, 0], sizes = [8, 128], strides = [1, 1]} : vector<8x384xf32> to vector<8x128xf32>
    %104 = arith.addf %102, %103 : vector<8x128xf32>
    %105 = arith.negf %104 : vector<8x128xf32>
    %106 = math.exp %105 : vector<8x128xf32>
    %cst_50 = arith.constant 1.000000e+00 : f32
    %107 = vector.broadcast %cst_50 : f32 to vector<8x128xf32>
    %108 = arith.addf %107, %106 : vector<8x128xf32>
    %109 = arith.divf %107, %108 : vector<8x128xf32>
    %110 = vector.extract_strided_slice %98 {offsets = [0, 128], sizes = [8, 128], strides = [1, 1]} : vector<8x384xf32> to vector<8x128xf32>
    %111 = vector.extract_strided_slice %101 {offsets = [0, 128], sizes = [8, 128], strides = [1, 1]} : vector<8x384xf32> to vector<8x128xf32>
    %112 = arith.addf %110, %111 : vector<8x128xf32>
    %113 = arith.negf %112 : vector<8x128xf32>
    %114 = math.exp %113 : vector<8x128xf32>
    %cst_51 = arith.constant 1.000000e+00 : f32
    %115 = vector.broadcast %cst_51 : f32 to vector<8x128xf32>
    %116 = arith.addf %115, %114 : vector<8x128xf32>
    %117 = arith.divf %115, %116 : vector<8x128xf32>
    %118 = vector.extract_strided_slice %98 {offsets = [0, 256], sizes = [8, 128], strides = [1, 1]} : vector<8x384xf32> to vector<8x128xf32>
    %119 = vector.extract_strided_slice %101 {offsets = [0, 256], sizes = [8, 128], strides = [1, 1]} : vector<8x384xf32> to vector<8x128xf32>
    %c0_52 = arith.constant 0 : index
    %c0_53 = arith.constant 0 : index
    %c0_54 = arith.constant 0 : index
    %120 = vector.load %arg6[%c0_52, %c0_53, %c0_54] : memref<2x1x128xf32, #tpu.memory_space<vmem>>, vector<1x1x128xf32>
    %121 = vector.shape_cast %120 : vector<1x1x128xf32> to vector<1x128xf32>
    %122 = vector.broadcast %121 : vector<1x128xf32> to vector<8x128xf32>
    %123 = arith.addf %119, %122 : vector<8x128xf32>
    %124 = arith.mulf %109, %123 : vector<8x128xf32>
    %125 = arith.addf %118, %124 : vector<8x128xf32>
    %126 = math.tanh %125 : vector<8x128xf32>
    %cst_55 = arith.constant 1.000000e+00 : f32
    %127 = vector.broadcast %cst_55 : f32 to vector<8x128xf32>
    %128 = arith.subf %127, %117 : vector<8x128xf32>
    %129 = arith.mulf %128, %126 : vector<8x128xf32>
    %130 = arith.mulf %117, %91 : vector<8x128xf32>
    %131 = arith.addf %129, %130 : vector<8x128xf32>
    %132 = arith.index_cast %c2_i32 : i32 to index
    %c0_56 = arith.constant 0 : index
    %c0_57 = arith.constant 0 : index
    %133 = vector.load %arg10[%132, %c0_56, %c0_57] : memref<8x8x128xf32, #tpu.memory_space<vmem>>, vector<1x8x128xf32>
    %134 = vector.shape_cast %133 : vector<1x8x128xf32> to vector<8x128xf32>
    %135 = vector.shape_cast %131 : vector<8x128xf32> to vector<1x8x128xf32>
    tpu.vector_store %arg10[%132, %c0_56, %c0_57], %135 {strides = array<i32>} : memref<8x8x128xf32, #tpu.memory_space<vmem>>, vector<1x8x128xf32>,
    %c3_i32 = arith.constant 3 : i32
    %136 = arith.index_cast %c3_i32 : i32 to index
    %c0_58 = arith.constant 0 : index
    %c0_59 = arith.constant 0 : index
    %137 = vector.load %arg9[%136, %c0_58, %c0_59] : memref<8x8x384xf32, #tpu.memory_space<vmem>>, vector<1x8x384xf32>
    %138 = vector.shape_cast %137 : vector<1x8x384xf32> to vector<8x384xf32>
    %c0_60 = arith.constant 0 : index
    %c0_61 = arith.constant 0 : index
    %c0_62 = arith.constant 0 : index
    %139 = vector.load %arg4[%c0_60, %c0_61, %c0_62] : memref<2x128x384xf32, #tpu.memory_space<vmem>>, vector<1x128x384xf32>
    %140 = vector.shape_cast %139 : vector<1x128x384xf32> to vector<128x384xf32>
    %cst_63 = arith.constant dense<0.000000e+00> : vector<8x384xf32>
    %141 = tpu.matmul %131, %140, %cst_63 {dimension_numbers = #tpu.dot_dimension_numbers<[1], [0], [0], [1], [0, 0, 1, 1], [], []>} : vector<8x128xf32>, vector<128x384xf32>, vector<8x384xf32> -> vector<8x384xf32>
    %142 = vector.extract_strided_slice %138 {offsets = [0, 0], sizes = [8, 128], strides = [1, 1]} : vector<8x384xf32> to vector<8x128xf32>
    %143 = vector.extract_strided_slice %141 {offsets = [0, 0], sizes = [8, 128], strides = [1, 1]} : vector<8x384xf32> to vector<8x128xf32>
    %144 = arith.addf %142, %143 : vector<8x128xf32>
    %145 = arith.negf %144 : vector<8x128xf32>
    %146 = math.exp %145 : vector<8x128xf32>
    %cst_64 = arith.constant 1.000000e+00 : f32
    %147 = vector.broadcast %cst_64 : f32 to vector<8x128xf32>
    %148 = arith.addf %147, %146 : vector<8x128xf32>
    %149 = arith.divf %147, %148 : vector<8x128xf32>
    %150 = vector.extract_strided_slice %138 {offsets = [0, 128], sizes = [8, 128], strides = [1, 1]} : vector<8x384xf32> to vector<8x128xf32>
    %151 = vector.extract_strided_slice %141 {offsets = [0, 128], sizes = [8, 128], strides = [1, 1]} : vector<8x384xf32> to vector<8x128xf32>
    %152 = arith.addf %150, %151 : vector<8x128xf32>
    %153 = arith.negf %152 : vector<8x128xf32>
    %154 = math.exp %153 : vector<8x128xf32>
    %cst_65 = arith.constant 1.000000e+00 : f32
    %155 = vector.broadcast %cst_65 : f32 to vector<8x128xf32>
    %156 = arith.addf %155, %154 : vector<8x128xf32>
    %157 = arith.divf %155, %156 : vector<8x128xf32>
    %158 = vector.extract_strided_slice %138 {offsets = [0, 256], sizes = [8, 128], strides = [1, 1]} : vector<8x384xf32> to vector<8x128xf32>
    %159 = vector.extract_strided_slice %141 {offsets = [0, 256], sizes = [8, 128], strides = [1, 1]} : vector<8x384xf32> to vector<8x128xf32>
    %c0_66 = arith.constant 0 : index
    %c0_67 = arith.constant 0 : index
    %c0_68 = arith.constant 0 : index
    %160 = vector.load %arg6[%c0_66, %c0_67, %c0_68] : memref<2x1x128xf32, #tpu.memory_space<vmem>>, vector<1x1x128xf32>
    %161 = vector.shape_cast %160 : vector<1x1x128xf32> to vector<1x128xf32>
    %162 = vector.broadcast %161 : vector<1x128xf32> to vector<8x128xf32>
    %163 = arith.addf %159, %162 : vector<8x128xf32>
    %164 = arith.mulf %149, %163 : vector<8x128xf32>
    %165 = arith.addf %158, %164 : vector<8x128xf32>
    %166 = math.tanh %165 : vector<8x128xf32>
    %cst_69 = arith.constant 1.000000e+00 : f32
    %167 = vector.broadcast %cst_69 : f32 to vector<8x128xf32>
    %168 = arith.subf %167, %157 : vector<8x128xf32>
    %169 = arith.mulf %168, %166 : vector<8x128xf32>
    %170 = arith.mulf %157, %131 : vector<8x128xf32>
    %171 = arith.addf %169, %170 : vector<8x128xf32>
    %172 = arith.index_cast %c3_i32 : i32 to index
    %c0_70 = arith.constant 0 : index
    %c0_71 = arith.constant 0 : index
    %173 = vector.load %arg10[%172, %c0_70, %c0_71] : memref<8x8x128xf32, #tpu.memory_space<vmem>>, vector<1x8x128xf32>
    %174 = vector.shape_cast %173 : vector<1x8x128xf32> to vector<8x128xf32>
    %175 = vector.shape_cast %171 : vector<8x128xf32> to vector<1x8x128xf32>
    tpu.vector_store %arg10[%172, %c0_70, %c0_71], %175 {strides = array<i32>} : memref<8x8x128xf32, #tpu.memory_space<vmem>>, vector<1x8x128xf32>,
    %c4_i32 = arith.constant 4 : i32
    %176 = arith.index_cast %c4_i32 : i32 to index
    %c0_72 = arith.constant 0 : index
    %c0_73 = arith.constant 0 : index
    %177 = vector.load %arg9[%176, %c0_72, %c0_73] : memref<8x8x384xf32, #tpu.memory_space<vmem>>, vector<1x8x384xf32>
    %178 = vector.shape_cast %177 : vector<1x8x384xf32> to vector<8x384xf32>
    %c0_74 = arith.constant 0 : index
    %c0_75 = arith.constant 0 : index
    %c0_76 = arith.constant 0 : index
    %179 = vector.load %arg4[%c0_74, %c0_75, %c0_76] : memref<2x128x384xf32, #tpu.memory_space<vmem>>, vector<1x128x384xf32>
    %180 = vector.shape_cast %179 : vector<1x128x384xf32> to vector<128x384xf32>
    %cst_77 = arith.constant dense<0.000000e+00> : vector<8x384xf32>
    %181 = tpu.matmul %171, %180, %cst_77 {dimension_numbers = #tpu.dot_dimension_numbers<[1], [0], [0], [1], [0, 0, 1, 1], [], []>} : vector<8x128xf32>, vector<128x384xf32>, vector<8x384xf32> -> vector<8x384xf32>
    %182 = vector.extract_strided_slice %178 {offsets = [0, 0], sizes = [8, 128], strides = [1, 1]} : vector<8x384xf32> to vector<8x128xf32>
    %183 = vector.extract_strided_slice %181 {offsets = [0, 0], sizes = [8, 128], strides = [1, 1]} : vector<8x384xf32> to vector<8x128xf32>
    %184 = arith.addf %182, %183 : vector<8x128xf32>
    %185 = arith.negf %184 : vector<8x128xf32>
    %186 = math.exp %185 : vector<8x128xf32>
    %cst_78 = arith.constant 1.000000e+00 : f32
    %187 = vector.broadcast %cst_78 : f32 to vector<8x128xf32>
    %188 = arith.addf %187, %186 : vector<8x128xf32>
    %189 = arith.divf %187, %188 : vector<8x128xf32>
    %190 = vector.extract_strided_slice %178 {offsets = [0, 128], sizes = [8, 128], strides = [1, 1]} : vector<8x384xf32> to vector<8x128xf32>
    %191 = vector.extract_strided_slice %181 {offsets = [0, 128], sizes = [8, 128], strides = [1, 1]} : vector<8x384xf32> to vector<8x128xf32>
    %192 = arith.addf %190, %191 : vector<8x128xf32>
    %193 = arith.negf %192 : vector<8x128xf32>
    %194 = math.exp %193 : vector<8x128xf32>
    %cst_79 = arith.constant 1.000000e+00 : f32
    %195 = vector.broadcast %cst_79 : f32 to vector<8x128xf32>
    %196 = arith.addf %195, %194 : vector<8x128xf32>
    %197 = arith.divf %195, %196 : vector<8x128xf32>
    %198 = vector.extract_strided_slice %178 {offsets = [0, 256], sizes = [8, 128], strides = [1, 1]} : vector<8x384xf32> to vector<8x128xf32>
    %199 = vector.extract_strided_slice %181 {offsets = [0, 256], sizes = [8, 128], strides = [1, 1]} : vector<8x384xf32> to vector<8x128xf32>
    %c0_80 = arith.constant 0 : index
    %c0_81 = arith.constant 0 : index
    %c0_82 = arith.constant 0 : index
    %200 = vector.load %arg6[%c0_80, %c0_81, %c0_82] : memref<2x1x128xf32, #tpu.memory_space<vmem>>, vector<1x1x128xf32>
    %201 = vector.shape_cast %200 : vector<1x1x128xf32> to vector<1x128xf32>
    %202 = vector.broadcast %201 : vector<1x128xf32> to vector<8x128xf32>
    %203 = arith.addf %199, %202 : vector<8x128xf32>
    %204 = arith.mulf %189, %203 : vector<8x128xf32>
    %205 = arith.addf %198, %204 : vector<8x128xf32>
    %206 = math.tanh %205 : vector<8x128xf32>
    %cst_83 = arith.constant 1.000000e+00 : f32
    %207 = vector.broadcast %cst_83 : f32 to vector<8x128xf32>
    %208 = arith.subf %207, %197 : vector<8x128xf32>
    %209 = arith.mulf %208, %206 : vector<8x128xf32>
    %210 = arith.mulf %197, %171 : vector<8x128xf32>
    %211 = arith.addf %209, %210 : vector<8x128xf32>
    %212 = arith.index_cast %c4_i32 : i32 to index
    %c0_84 = arith.constant 0 : index
    %c0_85 = arith.constant 0 : index
    %213 = vector.load %arg10[%212, %c0_84, %c0_85] : memref<8x8x128xf32, #tpu.memory_space<vmem>>, vector<1x8x128xf32>
    %214 = vector.shape_cast %213 : vector<1x8x128xf32> to vector<8x128xf32>
    %215 = vector.shape_cast %211 : vector<8x128xf32> to vector<1x8x128xf32>
    tpu.vector_store %arg10[%212, %c0_84, %c0_85], %215 {strides = array<i32>} : memref<8x8x128xf32, #tpu.memory_space<vmem>>, vector<1x8x128xf32>,
    %c5_i32 = arith.constant 5 : i32
    %216 = arith.index_cast %c5_i32 : i32 to index
    %c0_86 = arith.constant 0 : index
    %c0_87 = arith.constant 0 : index
    %217 = vector.load %arg9[%216, %c0_86, %c0_87] : memref<8x8x384xf32, #tpu.memory_space<vmem>>, vector<1x8x384xf32>
    %218 = vector.shape_cast %217 : vector<1x8x384xf32> to vector<8x384xf32>
    %c0_88 = arith.constant 0 : index
    %c0_89 = arith.constant 0 : index
    %c0_90 = arith.constant 0 : index
    %219 = vector.load %arg4[%c0_88, %c0_89, %c0_90] : memref<2x128x384xf32, #tpu.memory_space<vmem>>, vector<1x128x384xf32>
    %220 = vector.shape_cast %219 : vector<1x128x384xf32> to vector<128x384xf32>
    %cst_91 = arith.constant dense<0.000000e+00> : vector<8x384xf32>
    %221 = tpu.matmul %211, %220, %cst_91 {dimension_numbers = #tpu.dot_dimension_numbers<[1], [0], [0], [1], [0, 0, 1, 1], [], []>} : vector<8x128xf32>, vector<128x384xf32>, vector<8x384xf32> -> vector<8x384xf32>
    %222 = vector.extract_strided_slice %218 {offsets = [0, 0], sizes = [8, 128], strides = [1, 1]} : vector<8x384xf32> to vector<8x128xf32>
    %223 = vector.extract_strided_slice %221 {offsets = [0, 0], sizes = [8, 128], strides = [1, 1]} : vector<8x384xf32> to vector<8x128xf32>
    %224 = arith.addf %222, %223 : vector<8x128xf32>
    %225 = arith.negf %224 : vector<8x128xf32>
    %226 = math.exp %225 : vector<8x128xf32>
    %cst_92 = arith.constant 1.000000e+00 : f32
    %227 = vector.broadcast %cst_92 : f32 to vector<8x128xf32>
    %228 = arith.addf %227, %226 : vector<8x128xf32>
    %229 = arith.divf %227, %228 : vector<8x128xf32>
    %230 = vector.extract_strided_slice %218 {offsets = [0, 128], sizes = [8, 128], strides = [1, 1]} : vector<8x384xf32> to vector<8x128xf32>
    %231 = vector.extract_strided_slice %221 {offsets = [0, 128], sizes = [8, 128], strides = [1, 1]} : vector<8x384xf32> to vector<8x128xf32>
    %232 = arith.addf %230, %231 : vector<8x128xf32>
    %233 = arith.negf %232 : vector<8x128xf32>
    %234 = math.exp %233 : vector<8x128xf32>
    %cst_93 = arith.constant 1.000000e+00 : f32
    %235 = vector.broadcast %cst_93 : f32 to vector<8x128xf32>
    %236 = arith.addf %235, %234 : vector<8x128xf32>
    %237 = arith.divf %235, %236 : vector<8x128xf32>
    %238 = vector.extract_strided_slice %218 {offsets = [0, 256], sizes = [8, 128], strides = [1, 1]} : vector<8x384xf32> to vector<8x128xf32>
    %239 = vector.extract_strided_slice %221 {offsets = [0, 256], sizes = [8, 128], strides = [1, 1]} : vector<8x384xf32> to vector<8x128xf32>
    %c0_94 = arith.constant 0 : index
    %c0_95 = arith.constant 0 : index
    %c0_96 = arith.constant 0 : index
    %240 = vector.load %arg6[%c0_94, %c0_95, %c0_96] : memref<2x1x128xf32, #tpu.memory_space<vmem>>, vector<1x1x128xf32>
    %241 = vector.shape_cast %240 : vector<1x1x128xf32> to vector<1x128xf32>
    %242 = vector.broadcast %241 : vector<1x128xf32> to vector<8x128xf32>
    %243 = arith.addf %239, %242 : vector<8x128xf32>
    %244 = arith.mulf %229, %243 : vector<8x128xf32>
    %245 = arith.addf %238, %244 : vector<8x128xf32>
    %246 = math.tanh %245 : vector<8x128xf32>
    %cst_97 = arith.constant 1.000000e+00 : f32
    %247 = vector.broadcast %cst_97 : f32 to vector<8x128xf32>
    %248 = arith.subf %247, %237 : vector<8x128xf32>
    %249 = arith.mulf %248, %246 : vector<8x128xf32>
    %250 = arith.mulf %237, %211 : vector<8x128xf32>
    %251 = arith.addf %249, %250 : vector<8x128xf32>
    %252 = arith.index_cast %c5_i32 : i32 to index
    %c0_98 = arith.constant 0 : index
    %c0_99 = arith.constant 0 : index
    %253 = vector.load %arg10[%252, %c0_98, %c0_99] : memref<8x8x128xf32, #tpu.memory_space<vmem>>, vector<1x8x128xf32>
    %254 = vector.shape_cast %253 : vector<1x8x128xf32> to vector<8x128xf32>
    %255 = vector.shape_cast %251 : vector<8x128xf32> to vector<1x8x128xf32>
    tpu.vector_store %arg10[%252, %c0_98, %c0_99], %255 {strides = array<i32>} : memref<8x8x128xf32, #tpu.memory_space<vmem>>, vector<1x8x128xf32>,
    %c6_i32 = arith.constant 6 : i32
    %256 = arith.index_cast %c6_i32 : i32 to index
    %c0_100 = arith.constant 0 : index
    %c0_101 = arith.constant 0 : index
    %257 = vector.load %arg9[%256, %c0_100, %c0_101] : memref<8x8x384xf32, #tpu.memory_space<vmem>>, vector<1x8x384xf32>
    %258 = vector.shape_cast %257 : vector<1x8x384xf32> to vector<8x384xf32>
    %c0_102 = arith.constant 0 : index
    %c0_103 = arith.constant 0 : index
    %c0_104 = arith.constant 0 : index
    %259 = vector.load %arg4[%c0_102, %c0_103, %c0_104] : memref<2x128x384xf32, #tpu.memory_space<vmem>>, vector<1x128x384xf32>
    %260 = vector.shape_cast %259 : vector<1x128x384xf32> to vector<128x384xf32>
    %cst_105 = arith.constant dense<0.000000e+00> : vector<8x384xf32>
    %261 = tpu.matmul %251, %260, %cst_105 {dimension_numbers = #tpu.dot_dimension_numbers<[1], [0], [0], [1], [0, 0, 1, 1], [], []>} : vector<8x128xf32>, vector<128x384xf32>, vector<8x384xf32> -> vector<8x384xf32>
    %262 = vector.extract_strided_slice %258 {offsets = [0, 0], sizes = [8, 128], strides = [1, 1]} : vector<8x384xf32> to vector<8x128xf32>
    %263 = vector.extract_strided_slice %261 {offsets = [0, 0], sizes = [8, 128], strides = [1, 1]} : vector<8x384xf32> to vector<8x128xf32>
    %264 = arith.addf %262, %263 : vector<8x128xf32>
    %265 = arith.negf %264 : vector<8x128xf32>
    %266 = math.exp %265 : vector<8x128xf32>
    %cst_106 = arith.constant 1.000000e+00 : f32
    %267 = vector.broadcast %cst_106 : f32 to vector<8x128xf32>
    %268 = arith.addf %267, %266 : vector<8x128xf32>
    %269 = arith.divf %267, %268 : vector<8x128xf32>
    %270 = vector.extract_strided_slice %258 {offsets = [0, 128], sizes = [8, 128], strides = [1, 1]} : vector<8x384xf32> to vector<8x128xf32>
    %271 = vector.extract_strided_slice %261 {offsets = [0, 128], sizes = [8, 128], strides = [1, 1]} : vector<8x384xf32> to vector<8x128xf32>
    %272 = arith.addf %270, %271 : vector<8x128xf32>
    %273 = arith.negf %272 : vector<8x128xf32>
    %274 = math.exp %273 : vector<8x128xf32>
    %cst_107 = arith.constant 1.000000e+00 : f32
    %275 = vector.broadcast %cst_107 : f32 to vector<8x128xf32>
    %276 = arith.addf %275, %274 : vector<8x128xf32>
    %277 = arith.divf %275, %276 : vector<8x128xf32>
    %278 = vector.extract_strided_slice %258 {offsets = [0, 256], sizes = [8, 128], strides = [1, 1]} : vector<8x384xf32> to vector<8x128xf32>
    %279 = vector.extract_strided_slice %261 {offsets = [0, 256], sizes = [8, 128], strides = [1, 1]} : vector<8x384xf32> to vector<8x128xf32>
    %c0_108 = arith.constant 0 : index
    %c0_109 = arith.constant 0 : index
    %c0_110 = arith.constant 0 : index
    %280 = vector.load %arg6[%c0_108, %c0_109, %c0_110] : memref<2x1x128xf32, #tpu.memory_space<vmem>>, vector<1x1x128xf32>
    %281 = vector.shape_cast %280 : vector<1x1x128xf32> to vector<1x128xf32>
    %282 = vector.broadcast %281 : vector<1x128xf32> to vector<8x128xf32>
    %283 = arith.addf %279, %282 : vector<8x128xf32>
    %284 = arith.mulf %269, %283 : vector<8x128xf32>
    %285 = arith.addf %278, %284 : vector<8x128xf32>
    %286 = math.tanh %285 : vector<8x128xf32>
    %cst_111 = arith.constant 1.000000e+00 : f32
    %287 = vector.broadcast %cst_111 : f32 to vector<8x128xf32>
    %288 = arith.subf %287, %277 : vector<8x128xf32>
    %289 = arith.mulf %288, %286 : vector<8x128xf32>
    %290 = arith.mulf %277, %251 : vector<8x128xf32>
    %291 = arith.addf %289, %290 : vector<8x128xf32>
    %292 = arith.index_cast %c6_i32 : i32 to index
    %c0_112 = arith.constant 0 : index
    %c0_113 = arith.constant 0 : index
    %293 = vector.load %arg10[%292, %c0_112, %c0_113] : memref<8x8x128xf32, #tpu.memory_space<vmem>>, vector<1x8x128xf32>
    %294 = vector.shape_cast %293 : vector<1x8x128xf32> to vector<8x128xf32>
    %295 = vector.shape_cast %291 : vector<8x128xf32> to vector<1x8x128xf32>
    tpu.vector_store %arg10[%292, %c0_112, %c0_113], %295 {strides = array<i32>} : memref<8x8x128xf32, #tpu.memory_space<vmem>>, vector<1x8x128xf32>,
    %c7_i32 = arith.constant 7 : i32
    %296 = arith.index_cast %c7_i32 : i32 to index
    %c0_114 = arith.constant 0 : index
    %c0_115 = arith.constant 0 : index
    %297 = vector.load %arg9[%296, %c0_114, %c0_115] : memref<8x8x384xf32, #tpu.memory_space<vmem>>, vector<1x8x384xf32>
    %298 = vector.shape_cast %297 : vector<1x8x384xf32> to vector<8x384xf32>
    %c0_116 = arith.constant 0 : index
    %c0_117 = arith.constant 0 : index
    %c0_118 = arith.constant 0 : index
    %299 = vector.load %arg4[%c0_116, %c0_117, %c0_118] : memref<2x128x384xf32, #tpu.memory_space<vmem>>, vector<1x128x384xf32>
    %300 = vector.shape_cast %299 : vector<1x128x384xf32> to vector<128x384xf32>
    %cst_119 = arith.constant dense<0.000000e+00> : vector<8x384xf32>
    %301 = tpu.matmul %291, %300, %cst_119 {dimension_numbers = #tpu.dot_dimension_numbers<[1], [0], [0], [1], [0, 0, 1, 1], [], []>} : vector<8x128xf32>, vector<128x384xf32>, vector<8x384xf32> -> vector<8x384xf32>
    %302 = vector.extract_strided_slice %298 {offsets = [0, 0], sizes = [8, 128], strides = [1, 1]} : vector<8x384xf32> to vector<8x128xf32>
    %303 = vector.extract_strided_slice %301 {offsets = [0, 0], sizes = [8, 128], strides = [1, 1]} : vector<8x384xf32> to vector<8x128xf32>
    %304 = arith.addf %302, %303 : vector<8x128xf32>
    %305 = arith.negf %304 : vector<8x128xf32>
    %306 = math.exp %305 : vector<8x128xf32>
    %cst_120 = arith.constant 1.000000e+00 : f32
    %307 = vector.broadcast %cst_120 : f32 to vector<8x128xf32>
    %308 = arith.addf %307, %306 : vector<8x128xf32>
    %309 = arith.divf %307, %308 : vector<8x128xf32>
    %310 = vector.extract_strided_slice %298 {offsets = [0, 128], sizes = [8, 128], strides = [1, 1]} : vector<8x384xf32> to vector<8x128xf32>
    %311 = vector.extract_strided_slice %301 {offsets = [0, 128], sizes = [8, 128], strides = [1, 1]} : vector<8x384xf32> to vector<8x128xf32>
    %312 = arith.addf %310, %311 : vector<8x128xf32>
    %313 = arith.negf %312 : vector<8x128xf32>
    %314 = math.exp %313 : vector<8x128xf32>
    %cst_121 = arith.constant 1.000000e+00 : f32
    %315 = vector.broadcast %cst_121 : f32 to vector<8x128xf32>
    %316 = arith.addf %315, %314 : vector<8x128xf32>
    %317 = arith.divf %315, %316 : vector<8x128xf32>
    %318 = vector.extract_strided_slice %298 {offsets = [0, 256], sizes = [8, 128], strides = [1, 1]} : vector<8x384xf32> to vector<8x128xf32>
    %319 = vector.extract_strided_slice %301 {offsets = [0, 256], sizes = [8, 128], strides = [1, 1]} : vector<8x384xf32> to vector<8x128xf32>
    %c0_122 = arith.constant 0 : index
    %c0_123 = arith.constant 0 : index
    %c0_124 = arith.constant 0 : index
    %320 = vector.load %arg6[%c0_122, %c0_123, %c0_124] : memref<2x1x128xf32, #tpu.memory_space<vmem>>, vector<1x1x128xf32>
    %321 = vector.shape_cast %320 : vector<1x1x128xf32> to vector<1x128xf32>
    %322 = vector.broadcast %321 : vector<1x128xf32> to vector<8x128xf32>
    %323 = arith.addf %319, %322 : vector<8x128xf32>
    %324 = arith.mulf %309, %323 : vector<8x128xf32>
    %325 = arith.addf %318, %324 : vector<8x128xf32>
    %326 = math.tanh %325 : vector<8x128xf32>
    %cst_125 = arith.constant 1.000000e+00 : f32
    %327 = vector.broadcast %cst_125 : f32 to vector<8x128xf32>
    %328 = arith.subf %327, %317 : vector<8x128xf32>
    %329 = arith.mulf %328, %326 : vector<8x128xf32>
    %330 = arith.mulf %317, %291 : vector<8x128xf32>
    %331 = arith.addf %329, %330 : vector<8x128xf32>
    %332 = arith.index_cast %c7_i32 : i32 to index
    %c0_126 = arith.constant 0 : index
    %c0_127 = arith.constant 0 : index
    %333 = vector.load %arg10[%332, %c0_126, %c0_127] : memref<8x8x128xf32, #tpu.memory_space<vmem>>, vector<1x8x128xf32>
    %334 = vector.shape_cast %333 : vector<1x8x128xf32> to vector<8x128xf32>
    %335 = vector.shape_cast %331 : vector<8x128xf32> to vector<1x8x128xf32>
    tpu.vector_store %arg10[%332, %c0_126, %c0_127], %335 {strides = array<i32>} : memref<8x8x128xf32, #tpu.memory_space<vmem>>, vector<1x8x128xf32>,
    %c8_i32 = arith.constant 8 : i32
    %c0_128 = arith.constant 0 : index
    %c0_129 = arith.constant 0 : index
    %c0_130 = arith.constant 0 : index
    %336 = vector.load %arg8[%c0_128, %c0_129, %c0_130] : memref<2x8x128xf32, #tpu.memory_space<vmem>>, vector<1x8x128xf32>
    %337 = vector.shape_cast %336 : vector<1x8x128xf32> to vector<8x128xf32>
    %338 = vector.shape_cast %331 : vector<8x128xf32> to vector<1x8x128xf32>
    tpu.vector_store %arg8[%c0_128, %c0_129, %c0_130], %338 {strides = array<i32>} : memref<2x8x128xf32, #tpu.memory_space<vmem>>, vector<1x8x128xf32>,
    %c0_131 = arith.constant 0 : index
    %c0_132 = arith.constant 0 : index
    %c0_133 = arith.constant 0 : index
    %339 = vector.load %arg10[%c0_131, %c0_132, %c0_133] : memref<8x8x128xf32, #tpu.memory_space<vmem>>, vector<8x8x128xf32>
    %340 = vector.shape_cast %339 : vector<8x8x128xf32> to vector<64x128xf32>
    %c1 = arith.constant 1 : index
    %c0_134 = arith.constant 0 : index
    %c0_135 = arith.constant 0 : index
    %341 = vector.load %arg3[%c1, %c0_134, %c0_135] : memref<2x128x384xf32, #tpu.memory_space<vmem>>, vector<1x128x384xf32>
    %342 = vector.shape_cast %341 : vector<1x128x384xf32> to vector<128x384xf32>
    %cst_136 = arith.constant dense<0.000000e+00> : vector<64x384xf32>
    %343 = tpu.matmul %340, %342, %cst_136 {dimension_numbers = #tpu.dot_dimension_numbers<[1], [0], [0], [1], [0, 0, 1, 1], [], []>} : vector<64x128xf32>, vector<128x384xf32>, vector<64x384xf32> -> vector<64x384xf32>
    %c1_137 = arith.constant 1 : index
    %c0_138 = arith.constant 0 : index
    %c0_139 = arith.constant 0 : index
    %344 = vector.load %arg5[%c1_137, %c0_138, %c0_139] : memref<2x1x384xf32, #tpu.memory_space<vmem>>, vector<1x1x384xf32>
    %345 = vector.shape_cast %344 : vector<1x1x384xf32> to vector<1x384xf32>
    %346 = vector.broadcast %345 : vector<1x384xf32> to vector<64x384xf32>
    %347 = arith.addf %343, %346 : vector<64x384xf32>
    %348 = vector.shape_cast %347 : vector<64x384xf32> to vector<8x8x384xf32>
    %c0_140 = arith.constant 0 : index
    %c0_141 = arith.constant 0 : index
    %c0_142 = arith.constant 0 : index
    %349 = vector.load %arg9[%c0_140, %c0_141, %c0_142] : memref<8x8x384xf32, #tpu.memory_space<vmem>>, vector<8x8x384xf32>
    tpu.vector_store %arg9[%c0_140, %c0_141, %c0_142], %348 {strides = array<i32>} : memref<8x8x384xf32, #tpu.memory_space<vmem>>, vector<8x8x384xf32>,
    %c1_143 = arith.constant 1 : index
    %c0_144 = arith.constant 0 : index
    %c0_145 = arith.constant 0 : index
    %350 = vector.load %arg8[%c1_143, %c0_144, %c0_145] : memref<2x8x128xf32, #tpu.memory_space<vmem>>, vector<1x8x128xf32>
    %351 = vector.shape_cast %350 : vector<1x8x128xf32> to vector<8x128xf32>
    %c0_i32_146 = arith.constant 0 : i32
    %352 = arith.index_cast %c0_i32_146 : i32 to index
    %c0_147 = arith.constant 0 : index
    %c0_148 = arith.constant 0 : index
    %353 = vector.load %arg9[%352, %c0_147, %c0_148] : memref<8x8x384xf32, #tpu.memory_space<vmem>>, vector<1x8x384xf32>
    %354 = vector.shape_cast %353 : vector<1x8x384xf32> to vector<8x384xf32>
    %c1_149 = arith.constant 1 : index
    %c0_150 = arith.constant 0 : index
    %c0_151 = arith.constant 0 : index
    %355 = vector.load %arg4[%c1_149, %c0_150, %c0_151] : memref<2x128x384xf32, #tpu.memory_space<vmem>>, vector<1x128x384xf32>
    %356 = vector.shape_cast %355 : vector<1x128x384xf32> to vector<128x384xf32>
    %cst_152 = arith.constant dense<0.000000e+00> : vector<8x384xf32>
    %357 = tpu.matmul %351, %356, %cst_152 {dimension_numbers = #tpu.dot_dimension_numbers<[1], [0], [0], [1], [0, 0, 1, 1], [], []>} : vector<8x128xf32>, vector<128x384xf32>, vector<8x384xf32> -> vector<8x384xf32>
    %358 = vector.extract_strided_slice %354 {offsets = [0, 0], sizes = [8, 128], strides = [1, 1]} : vector<8x384xf32> to vector<8x128xf32>
    %359 = vector.extract_strided_slice %357 {offsets = [0, 0], sizes = [8, 128], strides = [1, 1]} : vector<8x384xf32> to vector<8x128xf32>
    %360 = arith.addf %358, %359 : vector<8x128xf32>
    %361 = arith.negf %360 : vector<8x128xf32>
    %362 = math.exp %361 : vector<8x128xf32>
    %cst_153 = arith.constant 1.000000e+00 : f32
    %363 = vector.broadcast %cst_153 : f32 to vector<8x128xf32>
    %364 = arith.addf %363, %362 : vector<8x128xf32>
    %365 = arith.divf %363, %364 : vector<8x128xf32>
    %366 = vector.extract_strided_slice %354 {offsets = [0, 128], sizes = [8, 128], strides = [1, 1]} : vector<8x384xf32> to vector<8x128xf32>
    %367 = vector.extract_strided_slice %357 {offsets = [0, 128], sizes = [8, 128], strides = [1, 1]} : vector<8x384xf32> to vector<8x128xf32>
    %368 = arith.addf %366, %367 : vector<8x128xf32>
    %369 = arith.negf %368 : vector<8x128xf32>
    %370 = math.exp %369 : vector<8x128xf32>
    %cst_154 = arith.constant 1.000000e+00 : f32
    %371 = vector.broadcast %cst_154 : f32 to vector<8x128xf32>
    %372 = arith.addf %371, %370 : vector<8x128xf32>
    %373 = arith.divf %371, %372 : vector<8x128xf32>
    %374 = vector.extract_strided_slice %354 {offsets = [0, 256], sizes = [8, 128], strides = [1, 1]} : vector<8x384xf32> to vector<8x128xf32>
    %375 = vector.extract_strided_slice %357 {offsets = [0, 256], sizes = [8, 128], strides = [1, 1]} : vector<8x384xf32> to vector<8x128xf32>
    %c1_155 = arith.constant 1 : index
    %c0_156 = arith.constant 0 : index
    %c0_157 = arith.constant 0 : index
    %376 = vector.load %arg6[%c1_155, %c0_156, %c0_157] : memref<2x1x128xf32, #tpu.memory_space<vmem>>, vector<1x1x128xf32>
    %377 = vector.shape_cast %376 : vector<1x1x128xf32> to vector<1x128xf32>
    %378 = vector.broadcast %377 : vector<1x128xf32> to vector<8x128xf32>
    %379 = arith.addf %375, %378 : vector<8x128xf32>
    %380 = arith.mulf %365, %379 : vector<8x128xf32>
    %381 = arith.addf %374, %380 : vector<8x128xf32>
    %382 = math.tanh %381 : vector<8x128xf32>
    %cst_158 = arith.constant 1.000000e+00 : f32
    %383 = vector.broadcast %cst_158 : f32 to vector<8x128xf32>
    %384 = arith.subf %383, %373 : vector<8x128xf32>
    %385 = arith.mulf %384, %382 : vector<8x128xf32>
    %386 = arith.mulf %373, %351 : vector<8x128xf32>
    %387 = arith.addf %385, %386 : vector<8x128xf32>
    %388 = arith.index_cast %c0_i32_146 : i32 to index
    %c0_159 = arith.constant 0 : index
    %c0_160 = arith.constant 0 : index
    %389 = vector.load %arg10[%388, %c0_159, %c0_160] : memref<8x8x128xf32, #tpu.memory_space<vmem>>, vector<1x8x128xf32>
    %390 = vector.shape_cast %389 : vector<1x8x128xf32> to vector<8x128xf32>
    %391 = vector.shape_cast %387 : vector<8x128xf32> to vector<1x8x128xf32>
    tpu.vector_store %arg10[%388, %c0_159, %c0_160], %391 {strides = array<i32>} : memref<8x8x128xf32, #tpu.memory_space<vmem>>, vector<1x8x128xf32>,
    %c1_i32_161 = arith.constant 1 : i32
    %392 = arith.index_cast %c1_i32_161 : i32 to index
    %c0_162 = arith.constant 0 : index
    %c0_163 = arith.constant 0 : index
    %393 = vector.load %arg9[%392, %c0_162, %c0_163] : memref<8x8x384xf32, #tpu.memory_space<vmem>>, vector<1x8x384xf32>
    %394 = vector.shape_cast %393 : vector<1x8x384xf32> to vector<8x384xf32>
    %c1_164 = arith.constant 1 : index
    %c0_165 = arith.constant 0 : index
    %c0_166 = arith.constant 0 : index
    %395 = vector.load %arg4[%c1_164, %c0_165, %c0_166] : memref<2x128x384xf32, #tpu.memory_space<vmem>>, vector<1x128x384xf32>
    %396 = vector.shape_cast %395 : vector<1x128x384xf32> to vector<128x384xf32>
    %cst_167 = arith.constant dense<0.000000e+00> : vector<8x384xf32>
    %397 = tpu.matmul %387, %396, %cst_167 {dimension_numbers = #tpu.dot_dimension_numbers<[1], [0], [0], [1], [0, 0, 1, 1], [], []>} : vector<8x128xf32>, vector<128x384xf32>, vector<8x384xf32> -> vector<8x384xf32>
    %398 = vector.extract_strided_slice %394 {offsets = [0, 0], sizes = [8, 128], strides = [1, 1]} : vector<8x384xf32> to vector<8x128xf32>
    %399 = vector.extract_strided_slice %397 {offsets = [0, 0], sizes = [8, 128], strides = [1, 1]} : vector<8x384xf32> to vector<8x128xf32>
    %400 = arith.addf %398, %399 : vector<8x128xf32>
    %401 = arith.negf %400 : vector<8x128xf32>
    %402 = math.exp %401 : vector<8x128xf32>
    %cst_168 = arith.constant 1.000000e+00 : f32
    %403 = vector.broadcast %cst_168 : f32 to vector<8x128xf32>
    %404 = arith.addf %403, %402 : vector<8x128xf32>
    %405 = arith.divf %403, %404 : vector<8x128xf32>
    %406 = vector.extract_strided_slice %394 {offsets = [0, 128], sizes = [8, 128], strides = [1, 1]} : vector<8x384xf32> to vector<8x128xf32>
    %407 = vector.extract_strided_slice %397 {offsets = [0, 128], sizes = [8, 128], strides = [1, 1]} : vector<8x384xf32> to vector<8x128xf32>
    %408 = arith.addf %406, %407 : vector<8x128xf32>
    %409 = arith.negf %408 : vector<8x128xf32>
    %410 = math.exp %409 : vector<8x128xf32>
    %cst_169 = arith.constant 1.000000e+00 : f32
    %411 = vector.broadcast %cst_169 : f32 to vector<8x128xf32>
    %412 = arith.addf %411, %410 : vector<8x128xf32>
    %413 = arith.divf %411, %412 : vector<8x128xf32>
    %414 = vector.extract_strided_slice %394 {offsets = [0, 256], sizes = [8, 128], strides = [1, 1]} : vector<8x384xf32> to vector<8x128xf32>
    %415 = vector.extract_strided_slice %397 {offsets = [0, 256], sizes = [8, 128], strides = [1, 1]} : vector<8x384xf32> to vector<8x128xf32>
    %c1_170 = arith.constant 1 : index
    %c0_171 = arith.constant 0 : index
    %c0_172 = arith.constant 0 : index
    %416 = vector.load %arg6[%c1_170, %c0_171, %c0_172] : memref<2x1x128xf32, #tpu.memory_space<vmem>>, vector<1x1x128xf32>
    %417 = vector.shape_cast %416 : vector<1x1x128xf32> to vector<1x128xf32>
    %418 = vector.broadcast %417 : vector<1x128xf32> to vector<8x128xf32>
    %419 = arith.addf %415, %418 : vector<8x128xf32>
    %420 = arith.mulf %405, %419 : vector<8x128xf32>
    %421 = arith.addf %414, %420 : vector<8x128xf32>
    %422 = math.tanh %421 : vector<8x128xf32>
    %cst_173 = arith.constant 1.000000e+00 : f32
    %423 = vector.broadcast %cst_173 : f32 to vector<8x128xf32>
    %424 = arith.subf %423, %413 : vector<8x128xf32>
    %425 = arith.mulf %424, %422 : vector<8x128xf32>
    %426 = arith.mulf %413, %387 : vector<8x128xf32>
    %427 = arith.addf %425, %426 : vector<8x128xf32>
    %428 = arith.index_cast %c1_i32_161 : i32 to index
    %c0_174 = arith.constant 0 : index
    %c0_175 = arith.constant 0 : index
    %429 = vector.load %arg10[%428, %c0_174, %c0_175] : memref<8x8x128xf32, #tpu.memory_space<vmem>>, vector<1x8x128xf32>
    %430 = vector.shape_cast %429 : vector<1x8x128xf32> to vector<8x128xf32>
    %431 = vector.shape_cast %427 : vector<8x128xf32> to vector<1x8x128xf32>
    tpu.vector_store %arg10[%428, %c0_174, %c0_175], %431 {strides = array<i32>} : memref<8x8x128xf32, #tpu.memory_space<vmem>>, vector<1x8x128xf32>,
    %c2_i32_176 = arith.constant 2 : i32
    %432 = arith.index_cast %c2_i32_176 : i32 to index
    %c0_177 = arith.constant 0 : index
    %c0_178 = arith.constant 0 : index
    %433 = vector.load %arg9[%432, %c0_177, %c0_178] : memref<8x8x384xf32, #tpu.memory_space<vmem>>, vector<1x8x384xf32>
    %434 = vector.shape_cast %433 : vector<1x8x384xf32> to vector<8x384xf32>
    %c1_179 = arith.constant 1 : index
    %c0_180 = arith.constant 0 : index
    %c0_181 = arith.constant 0 : index
    %435 = vector.load %arg4[%c1_179, %c0_180, %c0_181] : memref<2x128x384xf32, #tpu.memory_space<vmem>>, vector<1x128x384xf32>
    %436 = vector.shape_cast %435 : vector<1x128x384xf32> to vector<128x384xf32>
    %cst_182 = arith.constant dense<0.000000e+00> : vector<8x384xf32>
    %437 = tpu.matmul %427, %436, %cst_182 {dimension_numbers = #tpu.dot_dimension_numbers<[1], [0], [0], [1], [0, 0, 1, 1], [], []>} : vector<8x128xf32>, vector<128x384xf32>, vector<8x384xf32> -> vector<8x384xf32>
    %438 = vector.extract_strided_slice %434 {offsets = [0, 0], sizes = [8, 128], strides = [1, 1]} : vector<8x384xf32> to vector<8x128xf32>
    %439 = vector.extract_strided_slice %437 {offsets = [0, 0], sizes = [8, 128], strides = [1, 1]} : vector<8x384xf32> to vector<8x128xf32>
    %440 = arith.addf %438, %439 : vector<8x128xf32>
    %441 = arith.negf %440 : vector<8x128xf32>
    %442 = math.exp %441 : vector<8x128xf32>
    %cst_183 = arith.constant 1.000000e+00 : f32
    %443 = vector.broadcast %cst_183 : f32 to vector<8x128xf32>
    %444 = arith.addf %443, %442 : vector<8x128xf32>
    %445 = arith.divf %443, %444 : vector<8x128xf32>
    %446 = vector.extract_strided_slice %434 {offsets = [0, 128], sizes = [8, 128], strides = [1, 1]} : vector<8x384xf32> to vector<8x128xf32>
    %447 = vector.extract_strided_slice %437 {offsets = [0, 128], sizes = [8, 128], strides = [1, 1]} : vector<8x384xf32> to vector<8x128xf32>
    %448 = arith.addf %446, %447 : vector<8x128xf32>
    %449 = arith.negf %448 : vector<8x128xf32>
    %450 = math.exp %449 : vector<8x128xf32>
    %cst_184 = arith.constant 1.000000e+00 : f32
    %451 = vector.broadcast %cst_184 : f32 to vector<8x128xf32>
    %452 = arith.addf %451, %450 : vector<8x128xf32>
    %453 = arith.divf %451, %452 : vector<8x128xf32>
    %454 = vector.extract_strided_slice %434 {offsets = [0, 256], sizes = [8, 128], strides = [1, 1]} : vector<8x384xf32> to vector<8x128xf32>
    %455 = vector.extract_strided_slice %437 {offsets = [0, 256], sizes = [8, 128], strides = [1, 1]} : vector<8x384xf32> to vector<8x128xf32>
    %c1_185 = arith.constant 1 : index
    %c0_186 = arith.constant 0 : index
    %c0_187 = arith.constant 0 : index
    %456 = vector.load %arg6[%c1_185, %c0_186, %c0_187] : memref<2x1x128xf32, #tpu.memory_space<vmem>>, vector<1x1x128xf32>
    %457 = vector.shape_cast %456 : vector<1x1x128xf32> to vector<1x128xf32>
    %458 = vector.broadcast %457 : vector<1x128xf32> to vector<8x128xf32>
    %459 = arith.addf %455, %458 : vector<8x128xf32>
    %460 = arith.mulf %445, %459 : vector<8x128xf32>
    %461 = arith.addf %454, %460 : vector<8x128xf32>
    %462 = math.tanh %461 : vector<8x128xf32>
    %cst_188 = arith.constant 1.000000e+00 : f32
    %463 = vector.broadcast %cst_188 : f32 to vector<8x128xf32>
    %464 = arith.subf %463, %453 : vector<8x128xf32>
    %465 = arith.mulf %464, %462 : vector<8x128xf32>
    %466 = arith.mulf %453, %427 : vector<8x128xf32>
    %467 = arith.addf %465, %466 : vector<8x128xf32>
    %468 = arith.index_cast %c2_i32_176 : i32 to index
    %c0_189 = arith.constant 0 : index
    %c0_190 = arith.constant 0 : index
    %469 = vector.load %arg10[%468, %c0_189, %c0_190] : memref<8x8x128xf32, #tpu.memory_space<vmem>>, vector<1x8x128xf32>
    %470 = vector.shape_cast %469 : vector<1x8x128xf32> to vector<8x128xf32>
    %471 = vector.shape_cast %467 : vector<8x128xf32> to vector<1x8x128xf32>
    tpu.vector_store %arg10[%468, %c0_189, %c0_190], %471 {strides = array<i32>} : memref<8x8x128xf32, #tpu.memory_space<vmem>>, vector<1x8x128xf32>,
    %c3_i32_191 = arith.constant 3 : i32
    %472 = arith.index_cast %c3_i32_191 : i32 to index
    %c0_192 = arith.constant 0 : index
    %c0_193 = arith.constant 0 : index
    %473 = vector.load %arg9[%472, %c0_192, %c0_193] : memref<8x8x384xf32, #tpu.memory_space<vmem>>, vector<1x8x384xf32>
    %474 = vector.shape_cast %473 : vector<1x8x384xf32> to vector<8x384xf32>
    %c1_194 = arith.constant 1 : index
    %c0_195 = arith.constant 0 : index
    %c0_196 = arith.constant 0 : index
    %475 = vector.load %arg4[%c1_194, %c0_195, %c0_196] : memref<2x128x384xf32, #tpu.memory_space<vmem>>, vector<1x128x384xf32>
    %476 = vector.shape_cast %475 : vector<1x128x384xf32> to vector<128x384xf32>
    %cst_197 = arith.constant dense<0.000000e+00> : vector<8x384xf32>
    %477 = tpu.matmul %467, %476, %cst_197 {dimension_numbers = #tpu.dot_dimension_numbers<[1], [0], [0], [1], [0, 0, 1, 1], [], []>} : vector<8x128xf32>, vector<128x384xf32>, vector<8x384xf32> -> vector<8x384xf32>
    %478 = vector.extract_strided_slice %474 {offsets = [0, 0], sizes = [8, 128], strides = [1, 1]} : vector<8x384xf32> to vector<8x128xf32>
    %479 = vector.extract_strided_slice %477 {offsets = [0, 0], sizes = [8, 128], strides = [1, 1]} : vector<8x384xf32> to vector<8x128xf32>
    %480 = arith.addf %478, %479 : vector<8x128xf32>
    %481 = arith.negf %480 : vector<8x128xf32>
    %482 = math.exp %481 : vector<8x128xf32>
    %cst_198 = arith.constant 1.000000e+00 : f32
    %483 = vector.broadcast %cst_198 : f32 to vector<8x128xf32>
    %484 = arith.addf %483, %482 : vector<8x128xf32>
    %485 = arith.divf %483, %484 : vector<8x128xf32>
    %486 = vector.extract_strided_slice %474 {offsets = [0, 128], sizes = [8, 128], strides = [1, 1]} : vector<8x384xf32> to vector<8x128xf32>
    %487 = vector.extract_strided_slice %477 {offsets = [0, 128], sizes = [8, 128], strides = [1, 1]} : vector<8x384xf32> to vector<8x128xf32>
    %488 = arith.addf %486, %487 : vector<8x128xf32>
    %489 = arith.negf %488 : vector<8x128xf32>
    %490 = math.exp %489 : vector<8x128xf32>
    %cst_199 = arith.constant 1.000000e+00 : f32
    %491 = vector.broadcast %cst_199 : f32 to vector<8x128xf32>
    %492 = arith.addf %491, %490 : vector<8x128xf32>
    %493 = arith.divf %491, %492 : vector<8x128xf32>
    %494 = vector.extract_strided_slice %474 {offsets = [0, 256], sizes = [8, 128], strides = [1, 1]} : vector<8x384xf32> to vector<8x128xf32>
    %495 = vector.extract_strided_slice %477 {offsets = [0, 256], sizes = [8, 128], strides = [1, 1]} : vector<8x384xf32> to vector<8x128xf32>
    %c1_200 = arith.constant 1 : index
    %c0_201 = arith.constant 0 : index
    %c0_202 = arith.constant 0 : index
    %496 = vector.load %arg6[%c1_200, %c0_201, %c0_202] : memref<2x1x128xf32, #tpu.memory_space<vmem>>, vector<1x1x128xf32>
    %497 = vector.shape_cast %496 : vector<1x1x128xf32> to vector<1x128xf32>
    %498 = vector.broadcast %497 : vector<1x128xf32> to vector<8x128xf32>
    %499 = arith.addf %495, %498 : vector<8x128xf32>
    %500 = arith.mulf %485, %499 : vector<8x128xf32>
    %501 = arith.addf %494, %500 : vector<8x128xf32>
    %502 = math.tanh %501 : vector<8x128xf32>
    %cst_203 = arith.constant 1.000000e+00 : f32
    %503 = vector.broadcast %cst_203 : f32 to vector<8x128xf32>
    %504 = arith.subf %503, %493 : vector<8x128xf32>
    %505 = arith.mulf %504, %502 : vector<8x128xf32>
    %506 = arith.mulf %493, %467 : vector<8x128xf32>
    %507 = arith.addf %505, %506 : vector<8x128xf32>
    %508 = arith.index_cast %c3_i32_191 : i32 to index
    %c0_204 = arith.constant 0 : index
    %c0_205 = arith.constant 0 : index
    %509 = vector.load %arg10[%508, %c0_204, %c0_205] : memref<8x8x128xf32, #tpu.memory_space<vmem>>, vector<1x8x128xf32>
    %510 = vector.shape_cast %509 : vector<1x8x128xf32> to vector<8x128xf32>
    %511 = vector.shape_cast %507 : vector<8x128xf32> to vector<1x8x128xf32>
    tpu.vector_store %arg10[%508, %c0_204, %c0_205], %511 {strides = array<i32>} : memref<8x8x128xf32, #tpu.memory_space<vmem>>, vector<1x8x128xf32>,
    %c4_i32_206 = arith.constant 4 : i32
    %512 = arith.index_cast %c4_i32_206 : i32 to index
    %c0_207 = arith.constant 0 : index
    %c0_208 = arith.constant 0 : index
    %513 = vector.load %arg9[%512, %c0_207, %c0_208] : memref<8x8x384xf32, #tpu.memory_space<vmem>>, vector<1x8x384xf32>
    %514 = vector.shape_cast %513 : vector<1x8x384xf32> to vector<8x384xf32>
    %c1_209 = arith.constant 1 : index
    %c0_210 = arith.constant 0 : index
    %c0_211 = arith.constant 0 : index
    %515 = vector.load %arg4[%c1_209, %c0_210, %c0_211] : memref<2x128x384xf32, #tpu.memory_space<vmem>>, vector<1x128x384xf32>
    %516 = vector.shape_cast %515 : vector<1x128x384xf32> to vector<128x384xf32>
    %cst_212 = arith.constant dense<0.000000e+00> : vector<8x384xf32>
    %517 = tpu.matmul %507, %516, %cst_212 {dimension_numbers = #tpu.dot_dimension_numbers<[1], [0], [0], [1], [0, 0, 1, 1], [], []>} : vector<8x128xf32>, vector<128x384xf32>, vector<8x384xf32> -> vector<8x384xf32>
    %518 = vector.extract_strided_slice %514 {offsets = [0, 0], sizes = [8, 128], strides = [1, 1]} : vector<8x384xf32> to vector<8x128xf32>
    %519 = vector.extract_strided_slice %517 {offsets = [0, 0], sizes = [8, 128], strides = [1, 1]} : vector<8x384xf32> to vector<8x128xf32>
    %520 = arith.addf %518, %519 : vector<8x128xf32>
    %521 = arith.negf %520 : vector<8x128xf32>
    %522 = math.exp %521 : vector<8x128xf32>
    %cst_213 = arith.constant 1.000000e+00 : f32
    %523 = vector.broadcast %cst_213 : f32 to vector<8x128xf32>
    %524 = arith.addf %523, %522 : vector<8x128xf32>
    %525 = arith.divf %523, %524 : vector<8x128xf32>
    %526 = vector.extract_strided_slice %514 {offsets = [0, 128], sizes = [8, 128], strides = [1, 1]} : vector<8x384xf32> to vector<8x128xf32>
    %527 = vector.extract_strided_slice %517 {offsets = [0, 128], sizes = [8, 128], strides = [1, 1]} : vector<8x384xf32> to vector<8x128xf32>
    %528 = arith.addf %526, %527 : vector<8x128xf32>
    %529 = arith.negf %528 : vector<8x128xf32>
    %530 = math.exp %529 : vector<8x128xf32>
    %cst_214 = arith.constant 1.000000e+00 : f32
    %531 = vector.broadcast %cst_214 : f32 to vector<8x128xf32>
    %532 = arith.addf %531, %530 : vector<8x128xf32>
    %533 = arith.divf %531, %532 : vector<8x128xf32>
    %534 = vector.extract_strided_slice %514 {offsets = [0, 256], sizes = [8, 128], strides = [1, 1]} : vector<8x384xf32> to vector<8x128xf32>
    %535 = vector.extract_strided_slice %517 {offsets = [0, 256], sizes = [8, 128], strides = [1, 1]} : vector<8x384xf32> to vector<8x128xf32>
    %c1_215 = arith.constant 1 : index
    %c0_216 = arith.constant 0 : index
    %c0_217 = arith.constant 0 : index
    %536 = vector.load %arg6[%c1_215, %c0_216, %c0_217] : memref<2x1x128xf32, #tpu.memory_space<vmem>>, vector<1x1x128xf32>
    %537 = vector.shape_cast %536 : vector<1x1x128xf32> to vector<1x128xf32>
    %538 = vector.broadcast %537 : vector<1x128xf32> to vector<8x128xf32>
    %539 = arith.addf %535, %538 : vector<8x128xf32>
    %540 = arith.mulf %525, %539 : vector<8x128xf32>
    %541 = arith.addf %534, %540 : vector<8x128xf32>
    %542 = math.tanh %541 : vector<8x128xf32>
    %cst_218 = arith.constant 1.000000e+00 : f32
    %543 = vector.broadcast %cst_218 : f32 to vector<8x128xf32>
    %544 = arith.subf %543, %533 : vector<8x128xf32>
    %545 = arith.mulf %544, %542 : vector<8x128xf32>
    %546 = arith.mulf %533, %507 : vector<8x128xf32>
    %547 = arith.addf %545, %546 : vector<8x128xf32>
    %548 = arith.index_cast %c4_i32_206 : i32 to index
    %c0_219 = arith.constant 0 : index
    %c0_220 = arith.constant 0 : index
    %549 = vector.load %arg10[%548, %c0_219, %c0_220] : memref<8x8x128xf32, #tpu.memory_space<vmem>>, vector<1x8x128xf32>
    %550 = vector.shape_cast %549 : vector<1x8x128xf32> to vector<8x128xf32>
    %551 = vector.shape_cast %547 : vector<8x128xf32> to vector<1x8x128xf32>
    tpu.vector_store %arg10[%548, %c0_219, %c0_220], %551 {strides = array<i32>} : memref<8x8x128xf32, #tpu.memory_space<vmem>>, vector<1x8x128xf32>,
    %c5_i32_221 = arith.constant 5 : i32
    %552 = arith.index_cast %c5_i32_221 : i32 to index
    %c0_222 = arith.constant 0 : index
    %c0_223 = arith.constant 0 : index
    %553 = vector.load %arg9[%552, %c0_222, %c0_223] : memref<8x8x384xf32, #tpu.memory_space<vmem>>, vector<1x8x384xf32>
    %554 = vector.shape_cast %553 : vector<1x8x384xf32> to vector<8x384xf32>
    %c1_224 = arith.constant 1 : index
    %c0_225 = arith.constant 0 : index
    %c0_226 = arith.constant 0 : index
    %555 = vector.load %arg4[%c1_224, %c0_225, %c0_226] : memref<2x128x384xf32, #tpu.memory_space<vmem>>, vector<1x128x384xf32>
    %556 = vector.shape_cast %555 : vector<1x128x384xf32> to vector<128x384xf32>
    %cst_227 = arith.constant dense<0.000000e+00> : vector<8x384xf32>
    %557 = tpu.matmul %547, %556, %cst_227 {dimension_numbers = #tpu.dot_dimension_numbers<[1], [0], [0], [1], [0, 0, 1, 1], [], []>} : vector<8x128xf32>, vector<128x384xf32>, vector<8x384xf32> -> vector<8x384xf32>
    %558 = vector.extract_strided_slice %554 {offsets = [0, 0], sizes = [8, 128], strides = [1, 1]} : vector<8x384xf32> to vector<8x128xf32>
    %559 = vector.extract_strided_slice %557 {offsets = [0, 0], sizes = [8, 128], strides = [1, 1]} : vector<8x384xf32> to vector<8x128xf32>
    %560 = arith.addf %558, %559 : vector<8x128xf32>
    %561 = arith.negf %560 : vector<8x128xf32>
    %562 = math.exp %561 : vector<8x128xf32>
    %cst_228 = arith.constant 1.000000e+00 : f32
    %563 = vector.broadcast %cst_228 : f32 to vector<8x128xf32>
    %564 = arith.addf %563, %562 : vector<8x128xf32>
    %565 = arith.divf %563, %564 : vector<8x128xf32>
    %566 = vector.extract_strided_slice %554 {offsets = [0, 128], sizes = [8, 128], strides = [1, 1]} : vector<8x384xf32> to vector<8x128xf32>
    %567 = vector.extract_strided_slice %557 {offsets = [0, 128], sizes = [8, 128], strides = [1, 1]} : vector<8x384xf32> to vector<8x128xf32>
    %568 = arith.addf %566, %567 : vector<8x128xf32>
    %569 = arith.negf %568 : vector<8x128xf32>
    %570 = math.exp %569 : vector<8x128xf32>
    %cst_229 = arith.constant 1.000000e+00 : f32
    %571 = vector.broadcast %cst_229 : f32 to vector<8x128xf32>
    %572 = arith.addf %571, %570 : vector<8x128xf32>
    %573 = arith.divf %571, %572 : vector<8x128xf32>
    %574 = vector.extract_strided_slice %554 {offsets = [0, 256], sizes = [8, 128], strides = [1, 1]} : vector<8x384xf32> to vector<8x128xf32>
    %575 = vector.extract_strided_slice %557 {offsets = [0, 256], sizes = [8, 128], strides = [1, 1]} : vector<8x384xf32> to vector<8x128xf32>
    %c1_230 = arith.constant 1 : index
    %c0_231 = arith.constant 0 : index
    %c0_232 = arith.constant 0 : index
    %576 = vector.load %arg6[%c1_230, %c0_231, %c0_232] : memref<2x1x128xf32, #tpu.memory_space<vmem>>, vector<1x1x128xf32>
    %577 = vector.shape_cast %576 : vector<1x1x128xf32> to vector<1x128xf32>
    %578 = vector.broadcast %577 : vector<1x128xf32> to vector<8x128xf32>
    %579 = arith.addf %575, %578 : vector<8x128xf32>
    %580 = arith.mulf %565, %579 : vector<8x128xf32>
    %581 = arith.addf %574, %580 : vector<8x128xf32>
    %582 = math.tanh %581 : vector<8x128xf32>
    %cst_233 = arith.constant 1.000000e+00 : f32
    %583 = vector.broadcast %cst_233 : f32 to vector<8x128xf32>
    %584 = arith.subf %583, %573 : vector<8x128xf32>
    %585 = arith.mulf %584, %582 : vector<8x128xf32>
    %586 = arith.mulf %573, %547 : vector<8x128xf32>
    %587 = arith.addf %585, %586 : vector<8x128xf32>
    %588 = arith.index_cast %c5_i32_221 : i32 to index
    %c0_234 = arith.constant 0 : index
    %c0_235 = arith.constant 0 : index
    %589 = vector.load %arg10[%588, %c0_234, %c0_235] : memref<8x8x128xf32, #tpu.memory_space<vmem>>, vector<1x8x128xf32>
    %590 = vector.shape_cast %589 : vector<1x8x128xf32> to vector<8x128xf32>
    %591 = vector.shape_cast %587 : vector<8x128xf32> to vector<1x8x128xf32>
    tpu.vector_store %arg10[%588, %c0_234, %c0_235], %591 {strides = array<i32>} : memref<8x8x128xf32, #tpu.memory_space<vmem>>, vector<1x8x128xf32>,
    %c6_i32_236 = arith.constant 6 : i32
    %592 = arith.index_cast %c6_i32_236 : i32 to index
    %c0_237 = arith.constant 0 : index
    %c0_238 = arith.constant 0 : index
    %593 = vector.load %arg9[%592, %c0_237, %c0_238] : memref<8x8x384xf32, #tpu.memory_space<vmem>>, vector<1x8x384xf32>
    %594 = vector.shape_cast %593 : vector<1x8x384xf32> to vector<8x384xf32>
    %c1_239 = arith.constant 1 : index
    %c0_240 = arith.constant 0 : index
    %c0_241 = arith.constant 0 : index
    %595 = vector.load %arg4[%c1_239, %c0_240, %c0_241] : memref<2x128x384xf32, #tpu.memory_space<vmem>>, vector<1x128x384xf32>
    %596 = vector.shape_cast %595 : vector<1x128x384xf32> to vector<128x384xf32>
    %cst_242 = arith.constant dense<0.000000e+00> : vector<8x384xf32>
    %597 = tpu.matmul %587, %596, %cst_242 {dimension_numbers = #tpu.dot_dimension_numbers<[1], [0], [0], [1], [0, 0, 1, 1], [], []>} : vector<8x128xf32>, vector<128x384xf32>, vector<8x384xf32> -> vector<8x384xf32>
    %598 = vector.extract_strided_slice %594 {offsets = [0, 0], sizes = [8, 128], strides = [1, 1]} : vector<8x384xf32> to vector<8x128xf32>
    %599 = vector.extract_strided_slice %597 {offsets = [0, 0], sizes = [8, 128], strides = [1, 1]} : vector<8x384xf32> to vector<8x128xf32>
    %600 = arith.addf %598, %599 : vector<8x128xf32>
    %601 = arith.negf %600 : vector<8x128xf32>
    %602 = math.exp %601 : vector<8x128xf32>
    %cst_243 = arith.constant 1.000000e+00 : f32
    %603 = vector.broadcast %cst_243 : f32 to vector<8x128xf32>
    %604 = arith.addf %603, %602 : vector<8x128xf32>
    %605 = arith.divf %603, %604 : vector<8x128xf32>
    %606 = vector.extract_strided_slice %594 {offsets = [0, 128], sizes = [8, 128], strides = [1, 1]} : vector<8x384xf32> to vector<8x128xf32>
    %607 = vector.extract_strided_slice %597 {offsets = [0, 128], sizes = [8, 128], strides = [1, 1]} : vector<8x384xf32> to vector<8x128xf32>
    %608 = arith.addf %606, %607 : vector<8x128xf32>
    %609 = arith.negf %608 : vector<8x128xf32>
    %610 = math.exp %609 : vector<8x128xf32>
    %cst_244 = arith.constant 1.000000e+00 : f32
    %611 = vector.broadcast %cst_244 : f32 to vector<8x128xf32>
    %612 = arith.addf %611, %610 : vector<8x128xf32>
    %613 = arith.divf %611, %612 : vector<8x128xf32>
    %614 = vector.extract_strided_slice %594 {offsets = [0, 256], sizes = [8, 128], strides = [1, 1]} : vector<8x384xf32> to vector<8x128xf32>
    %615 = vector.extract_strided_slice %597 {offsets = [0, 256], sizes = [8, 128], strides = [1, 1]} : vector<8x384xf32> to vector<8x128xf32>
    %c1_245 = arith.constant 1 : index
    %c0_246 = arith.constant 0 : index
    %c0_247 = arith.constant 0 : index
    %616 = vector.load %arg6[%c1_245, %c0_246, %c0_247] : memref<2x1x128xf32, #tpu.memory_space<vmem>>, vector<1x1x128xf32>
    %617 = vector.shape_cast %616 : vector<1x1x128xf32> to vector<1x128xf32>
    %618 = vector.broadcast %617 : vector<1x128xf32> to vector<8x128xf32>
    %619 = arith.addf %615, %618 : vector<8x128xf32>
    %620 = arith.mulf %605, %619 : vector<8x128xf32>
    %621 = arith.addf %614, %620 : vector<8x128xf32>
    %622 = math.tanh %621 : vector<8x128xf32>
    %cst_248 = arith.constant 1.000000e+00 : f32
    %623 = vector.broadcast %cst_248 : f32 to vector<8x128xf32>
    %624 = arith.subf %623, %613 : vector<8x128xf32>
    %625 = arith.mulf %624, %622 : vector<8x128xf32>
    %626 = arith.mulf %613, %587 : vector<8x128xf32>
    %627 = arith.addf %625, %626 : vector<8x128xf32>
    %628 = arith.index_cast %c6_i32_236 : i32 to index
    %c0_249 = arith.constant 0 : index
    %c0_250 = arith.constant 0 : index
    %629 = vector.load %arg10[%628, %c0_249, %c0_250] : memref<8x8x128xf32, #tpu.memory_space<vmem>>, vector<1x8x128xf32>
    %630 = vector.shape_cast %629 : vector<1x8x128xf32> to vector<8x128xf32>
    %631 = vector.shape_cast %627 : vector<8x128xf32> to vector<1x8x128xf32>
    tpu.vector_store %arg10[%628, %c0_249, %c0_250], %631 {strides = array<i32>} : memref<8x8x128xf32, #tpu.memory_space<vmem>>, vector<1x8x128xf32>,
    %c7_i32_251 = arith.constant 7 : i32
    %632 = arith.index_cast %c7_i32_251 : i32 to index
    %c0_252 = arith.constant 0 : index
    %c0_253 = arith.constant 0 : index
    %633 = vector.load %arg9[%632, %c0_252, %c0_253] : memref<8x8x384xf32, #tpu.memory_space<vmem>>, vector<1x8x384xf32>
    %634 = vector.shape_cast %633 : vector<1x8x384xf32> to vector<8x384xf32>
    %c1_254 = arith.constant 1 : index
    %c0_255 = arith.constant 0 : index
    %c0_256 = arith.constant 0 : index
    %635 = vector.load %arg4[%c1_254, %c0_255, %c0_256] : memref<2x128x384xf32, #tpu.memory_space<vmem>>, vector<1x128x384xf32>
    %636 = vector.shape_cast %635 : vector<1x128x384xf32> to vector<128x384xf32>
    %cst_257 = arith.constant dense<0.000000e+00> : vector<8x384xf32>
    %637 = tpu.matmul %627, %636, %cst_257 {dimension_numbers = #tpu.dot_dimension_numbers<[1], [0], [0], [1], [0, 0, 1, 1], [], []>} : vector<8x128xf32>, vector<128x384xf32>, vector<8x384xf32> -> vector<8x384xf32>
    %638 = vector.extract_strided_slice %634 {offsets = [0, 0], sizes = [8, 128], strides = [1, 1]} : vector<8x384xf32> to vector<8x128xf32>
    %639 = vector.extract_strided_slice %637 {offsets = [0, 0], sizes = [8, 128], strides = [1, 1]} : vector<8x384xf32> to vector<8x128xf32>
    %640 = arith.addf %638, %639 : vector<8x128xf32>
    %641 = arith.negf %640 : vector<8x128xf32>
    %642 = math.exp %641 : vector<8x128xf32>
    %cst_258 = arith.constant 1.000000e+00 : f32
    %643 = vector.broadcast %cst_258 : f32 to vector<8x128xf32>
    %644 = arith.addf %643, %642 : vector<8x128xf32>
    %645 = arith.divf %643, %644 : vector<8x128xf32>
    %646 = vector.extract_strided_slice %634 {offsets = [0, 128], sizes = [8, 128], strides = [1, 1]} : vector<8x384xf32> to vector<8x128xf32>
    %647 = vector.extract_strided_slice %637 {offsets = [0, 128], sizes = [8, 128], strides = [1, 1]} : vector<8x384xf32> to vector<8x128xf32>
    %648 = arith.addf %646, %647 : vector<8x128xf32>
    %649 = arith.negf %648 : vector<8x128xf32>
    %650 = math.exp %649 : vector<8x128xf32>
    %cst_259 = arith.constant 1.000000e+00 : f32
    %651 = vector.broadcast %cst_259 : f32 to vector<8x128xf32>
    %652 = arith.addf %651, %650 : vector<8x128xf32>
    %653 = arith.divf %651, %652 : vector<8x128xf32>
    %654 = vector.extract_strided_slice %634 {offsets = [0, 256], sizes = [8, 128], strides = [1, 1]} : vector<8x384xf32> to vector<8x128xf32>
    %655 = vector.extract_strided_slice %637 {offsets = [0, 256], sizes = [8, 128], strides = [1, 1]} : vector<8x384xf32> to vector<8x128xf32>
    %c1_260 = arith.constant 1 : index
    %c0_261 = arith.constant 0 : index
    %c0_262 = arith.constant 0 : index
    %656 = vector.load %arg6[%c1_260, %c0_261, %c0_262] : memref<2x1x128xf32, #tpu.memory_space<vmem>>, vector<1x1x128xf32>
    %657 = vector.shape_cast %656 : vector<1x1x128xf32> to vector<1x128xf32>
    %658 = vector.broadcast %657 : vector<1x128xf32> to vector<8x128xf32>
    %659 = arith.addf %655, %658 : vector<8x128xf32>
    %660 = arith.mulf %645, %659 : vector<8x128xf32>
    %661 = arith.addf %654, %660 : vector<8x128xf32>
    %662 = math.tanh %661 : vector<8x128xf32>
    %cst_263 = arith.constant 1.000000e+00 : f32
    %663 = vector.broadcast %cst_263 : f32 to vector<8x128xf32>
    %664 = arith.subf %663, %653 : vector<8x128xf32>
    %665 = arith.mulf %664, %662 : vector<8x128xf32>
    %666 = arith.mulf %653, %627 : vector<8x128xf32>
    %667 = arith.addf %665, %666 : vector<8x128xf32>
    %668 = arith.index_cast %c7_i32_251 : i32 to index
    %c0_264 = arith.constant 0 : index
    %c0_265 = arith.constant 0 : index
    %669 = vector.load %arg10[%668, %c0_264, %c0_265] : memref<8x8x128xf32, #tpu.memory_space<vmem>>, vector<1x8x128xf32>
    %670 = vector.shape_cast %669 : vector<1x8x128xf32> to vector<8x128xf32>
    %671 = vector.shape_cast %667 : vector<8x128xf32> to vector<1x8x128xf32>
    tpu.vector_store %arg10[%668, %c0_264, %c0_265], %671 {strides = array<i32>} : memref<8x8x128xf32, #tpu.memory_space<vmem>>, vector<1x8x128xf32>,
    %c8_i32_266 = arith.constant 8 : i32
    %c1_267 = arith.constant 1 : index
    %c0_268 = arith.constant 0 : index
    %c0_269 = arith.constant 0 : index
    %672 = vector.load %arg8[%c1_267, %c0_268, %c0_269] : memref<2x8x128xf32, #tpu.memory_space<vmem>>, vector<1x8x128xf32>
    %673 = vector.shape_cast %672 : vector<1x8x128xf32> to vector<8x128xf32>
    %674 = vector.shape_cast %667 : vector<8x128xf32> to vector<1x8x128xf32>
    tpu.vector_store %arg8[%c1_267, %c0_268, %c0_269], %674 {strides = array<i32>} : memref<2x8x128xf32, #tpu.memory_space<vmem>>, vector<1x8x128xf32>,
    %c0_270 = arith.constant 0 : index
    %c0_271 = arith.constant 0 : index
    %c0_272 = arith.constant 0 : index
    %675 = vector.load %arg10[%c0_270, %c0_271, %c0_272] : memref<8x8x128xf32, #tpu.memory_space<vmem>>, vector<8x8x128xf32>
    %c0_273 = arith.constant 0 : index
    %c0_274 = arith.constant 0 : index
    %c0_275 = arith.constant 0 : index
    %676 = vector.load %arg7[%c0_273, %c0_274, %c0_275] : memref<8x8x128xf32, #tpu.memory_space<vmem>>, vector<8x8x128xf32>
    tpu.vector_store %arg7[%c0_273, %c0_274, %c0_275], %675 {strides = array<i32>} : memref<8x8x128xf32, #tpu.memory_space<vmem>>, vector<8x8x128xf32>,
    return
  }
  func.func @transform_0(%arg0: i32, %arg1: i32) -> (i32, i32, i32) {
    %c0_i32 = arith.constant 0 : i32
    %c0_i32_0 = arith.constant 0 : i32
    return %arg1, %arg0, %c0_i32 : i32, i32, i32
  }
  func.func @transform_1(%arg0: i32, %arg1: i32) -> (i32, i32, i32) {
    %c0_i32 = arith.constant 0 : i32
    %c0_i32_0 = arith.constant 0 : i32
    %c0_i32_1 = arith.constant 0 : i32
    %c0_i32_2 = arith.constant 0 : i32
    return %c0_i32, %c0_i32_0, %c0_i32_1 : i32, i32, i32
  }
  func.func @transform_2(%arg0: i32, %arg1: i32) -> (i32, i32, i32) {
    %c0_i32 = arith.constant 0 : i32
    %c0_i32_0 = arith.constant 0 : i32
    %c0_i32_1 = arith.constant 0 : i32
    %c0_i32_2 = arith.constant 0 : i32
    return %c0_i32, %c0_i32_0, %c0_i32_1 : i32, i32, i32
  }
  func.func @transform_3(%arg0: i32, %arg1: i32) -> (i32, i32, i32) {
    %c0_i32 = arith.constant 0 : i32
    %c0_i32_0 = arith.constant 0 : i32
    %c0_i32_1 = arith.constant 0 : i32
    %c0_i32_2 = arith.constant 0 : i32
    return %c0_i32, %c0_i32_0, %c0_i32_1 : i32, i32, i32
  }
  func.func @transform_4(%arg0: i32, %arg1: i32) -> (i32, i32, i32) {
    %c0_i32 = arith.constant 0 : i32
    %c0_i32_0 = arith.constant 0 : i32
    %c0_i32_1 = arith.constant 0 : i32
    %c0_i32_2 = arith.constant 0 : i32
    return %c0_i32, %c0_i32_0, %c0_i32_1 : i32, i32, i32
  }
  func.func @transform_5(%arg0: i32, %arg1: i32) -> (i32, i32, i32) {
    %c0_i32 = arith.constant 0 : i32
    %c0_i32_0 = arith.constant 0 : i32
    return %arg1, %arg0, %c0_i32 : i32, i32, i32
  }
}

</mosaic_0001>

<llo_original>
// kernel: tpu_custom_call.1
$region0: #{tpu_custom_call.1}
  #allocation0 [shape = 'u32[]', space=smem, size = 0x4, offset = 0x4, fixed_abs, tag = 'smem constant byte address 0x4 - core index']
  #allocation1 [shape = 'u32[144,128]{1,0:T(1,128)}', space=vmem, size = 0x12000, scoped, tag = 'internal scratch']
  #allocation2 [shape = 'f32[2,8,128]{2,1,0:T(8,128)}', space=vmem, size = 0x2000, scoped, tag = 'scratch operand']
  #allocation3 [shape = 'f32[8,8,384]{2,1,0:T(8,128)}', space=vmem, size = 0x18000, scoped, tag = 'scratch operand']
  #allocation4 [shape = 'f32[8,8,128]{2,1,0:T(8,128)}', space=vmem, size = 0x8000, scoped, tag = 'scratch operand']
  %s0 = inlined_call_operand.hbm [shape: f32[8,8,128], index: 0, kind: input, shape index: {}]
  %s1 = inlined_call_operand.hbm [shape: f32[2,128,384], index: 1, kind: input, shape index: {}]
  %s2 = inlined_call_operand.hbm [shape: f32[2,128,384], index: 2, kind: input, shape index: {}]
  %s3 = inlined_call_operand.hbm [shape: f32[2,1,384], index: 3, kind: input, shape index: {}]
  %s4 = inlined_call_operand.vmem [shape: f32[2,1,128], index: 4, kind: input, shape index: {}]
  %s5 = inlined_call_operand.hbm [shape: f32[8,8,128], index: 5, kind: output, shape index: {}]
  %s6 = sld [smem:[#allocation0]]
  $region50: #{tpu_custom_call.1} parent=0
    _
  %s8 = ssub.s32 1, %s6
  %s9 = scalar_select 0, %s8, %s6
  $region1: #{tpu_custom_call.1} parent=0
    #allocation5 [shape = 'u8[32768]{0}', space=vmem, size = 0x8000, scoped, tag = 'input window, operand 0, single buffered']
    #allocation6 [shape = 's32[1]{0}', space=sflag, size = 0x4, scoped, tag = 'scoped memory for tpu_custom_call.1']
    #allocation7 [shape = 's32[1]{0}', space=sflag, size = 0x4, scoped, tag = 'scoped memory for tpu_custom_call.1']
    #allocation8 [shape = 'u8[393216]{0}', space=vmem, size = 0x60000, scoped, tag = 'input window, operand 1, single buffered']
    #allocation9 [shape = 's32[1]{0}', space=sflag, size = 0x4, scoped, tag = 'scoped memory for tpu_custom_call.1']
    #allocation10 [shape = 'u8[393216]{0}', space=vmem, size = 0x60000, scoped, tag = 'input window, operand 2, single buffered']
    #allocation11 [shape = 'u8[3072]{0}', space=vmem, size = 0xc00, scoped, tag = 'input window, operand 3, single buffered']
    #allocation12 [shape = 's32[1]{0}', space=sflag, size = 0x4, scoped, tag = 'scoped memory for tpu_custom_call.1']
    #allocation13 [shape = 'u8[32768]{0}', space=vmem, size = 0x8000, scoped, tag = 'output window, operand 0, single buffered']
    %10 = vsyncpa [#allocation6], 0
    %11 = vsyncpa [#allocation9], 0
    %12 = vsyncpa [#allocation12], 0
    %13 = vsyncpa [#allocation7], 0
    // Predicated region
    $region2: #{tpu_custom_call.1} parent=1 // pred_check
      _
    $region3: #{tpu_custom_call.1} parent=1 // pred_check_branch
      %15 = sbr.rel (0) target = $region5
    $region4: #{tpu_custom_call.1} parent=1 // pred_region
      %s17 = ssub.s32 1024, 1024
      %18 = vsyncadd [#allocation6], %s17
      %s19 = sshll.u32 [#allocation5], 4
      %s20 = int_to_ptr.vmem [resolvable:$true] %s19
      %25 = dma.hbm_to_vmem [thread:$0]  %s0, 1024, %s20, [#allocation6], 128, 128, 8
    $region5: #{tpu_custom_call.1} parent=1 // pred_fallthru
      _
    // Predicated region
    $region6: #{tpu_custom_call.1} parent=1 // pred_check
      _
    $region7: #{tpu_custom_call.1} parent=1 // pred_check_branch
      %27 = sbr.rel (0) target = $region9
    $region8: #{tpu_custom_call.1} parent=1 // pred_region
      %s29 = ssub.s32 12288, 12288
      %30 = vsyncadd [#allocation9], %s29
      %s31 = sshll.u32 [#allocation8], 4
      %s32 = int_to_ptr.vmem [resolvable:$true] %s31
      %37 = dma.hbm_to_vmem [thread:$0]  %s1, 12288, %s32, [#allocation9], 384, 384, 24
    $region9: #{tpu_custom_call.1} parent=1 // pred_fallthru
      _
    // Predicated region
    $region10: #{tpu_custom_call.1} parent=1 // pred_check
      _
    $region11: #{tpu_custom_call.1} parent=1 // pred_check_branch
      %39 = sbr.rel (0) target = $region13
    $region12: #{tpu_custom_call.1} parent=1 // pred_region
      %s41 = ssub.s32 12288, 12288
      %42 = vsyncadd [#allocation9], %s41
      %s43 = sshll.u32 [#allocation10], 4
      %s44 = int_to_ptr.vmem [resolvable:$true] %s43
      %49 = dma.hbm_to_vmem [thread:$0]  %s2, 12288, %s44, [#allocation9], 384, 384, 24
    $region13: #{tpu_custom_call.1} parent=1 // pred_fallthru
      _
    // Predicated region
    $region14: #{tpu_custom_call.1} parent=1 // pred_check
      _
    $region15: #{tpu_custom_call.1} parent=1 // pred_check_branch
      %51 = sbr.rel (0) target = $region17
    $region16: #{tpu_custom_call.1} parent=1 // pred_region
      %s53 = ssub.s32 96, 96
      %54 = vsyncadd [#allocation12], %s53
      %s55 = sshll.u32 [#allocation11], 4
      %s56 = int_to_ptr.vmem [resolvable:$true] %s55
      %61 = dma.hbm_to_vmem [thread:$0]  %s3, 96, %s56, [#allocation12], 48, 48, 3
    $region17: #{tpu_custom_call.1} parent=1 // pred_fallthru
      _
    // Predicated region
    $region18: #{tpu_custom_call.1} parent=1 // pred_check
      _
    $region19: #{tpu_custom_call.1} parent=1 // pred_check_branch
      %63 = sbr.rel (0) target = $region21
    $region20: #{tpu_custom_call.1} parent=1 // pred_region
      _
    $region21: #{tpu_custom_call.1} parent=1 // pred_fallthru
      _
    // Predicated region
    $region22: #{tpu_custom_call.1} parent=1 // pred_check
      _
    $region23: #{tpu_custom_call.1} parent=1 // pred_check_branch
      %65 = sbr.rel (0) target = $region25
    $region24: #{tpu_custom_call.1} parent=1 // pred_region
      %66 = dma.done [#allocation6], 1024
    $region25: #{tpu_custom_call.1} parent=1 // pred_fallthru
      _
    // Predicated region
    $region26: #{tpu_custom_call.1} parent=1 // pred_check
      _
    $region27: #{tpu_custom_call.1} parent=1 // pred_check_branch
      %68 = sbr.rel (0) target = $region29
    $region28: #{tpu_custom_call.1} parent=1 // pred_region
      %69 = dma.done [#allocation9], 12288
    $region29: #{tpu_custom_call.1} parent=1 // pred_fallthru
      _
    // Predicated region
    $region30: #{tpu_custom_call.1} parent=1 // pred_check
      _
    $region31: #{tpu_custom_call.1} parent=1 // pred_check_branch
      %71 = sbr.rel (0) target = $region33
    $region32: #{tpu_custom_call.1} parent=1 // pred_region
      %72 = dma.done [#allocation9], 12288
    $region33: #{tpu_custom_call.1} parent=1 // pred_fallthru
      _
    // Predicated region
    $region34: #{tpu_custom_call.1} parent=1 // pred_check
      _
    $region35: #{tpu_custom_call.1} parent=1 // pred_check_branch
      %74 = sbr.rel (0) target = $region37
    $region36: #{tpu_custom_call.1} parent=1 // pred_region
      %75 = dma.done [#allocation12], 96
    $region37: #{tpu_custom_call.1} parent=1 // pred_fallthru
      _
    %p76 = scmp.eq.s32.totalorder 0, 0
    // Predicated region
    $region38: #{tpu_custom_call.1} parent=1 // pred_check
      %p77 = pneg %p76
    $region39: #{tpu_custom_call.1} parent=1 // pred_check_branch
      %79 = sbr.rel (%p77) target = $region41
    $region40: #{tpu_custom_call.1} parent=1 // pred_region
      %80 = vst [vmem:[#allocation2] sm:$0xff] 0.0
      %81 = vst [vmem:[#allocation2 + $0x8] sm:$0xff] 0.0
    $region41: #{tpu_custom_call.1} parent=1 // pred_fallthru
      _
    %v82 = vld [vmem:[#allocation5] sm:$0xff]
    %v83 = vld [vmem:[#allocation5 + $0x8] sm:$0xff]
    %v84 = vld [vmem:[#allocation5 + $0x10] sm:$0xff]
    %v85 = vld [vmem:[#allocation5 + $0x18] sm:$0xff]
    %v86 = vld [vmem:[#allocation5 + $0x20] sm:$0xff]
    %v87 = vld [vmem:[#allocation5 + $0x28] sm:$0xff]
    %v88 = vld [vmem:[#allocation5 + $0x30] sm:$0xff]
    %v89 = vld [vmem:[#allocation5 + $0x38] sm:$0xff]
    %v90 = vld [vmem:[#allocation8] sm:$0xff]
    %v91 = vld [vmem:[#allocation8 + $0x8] sm:$0xff]
    %v92 = vld [vmem:[#allocation8 + $0x10] sm:$0xff]
    %v93 = vld [vmem:[#allocation8 + $0x18] sm:$0xff]
    %v94 = vld [vmem:[#allocation8 + $0x20] sm:$0xff]
    %v95 = vld [vmem:[#allocation8 + $0x28] sm:$0xff]
    %v96 = vld [vmem:[#allocation8 + $0x30] sm:$0xff]
    %v97 = vld [vmem:[#allocation8 + $0x38] sm:$0xff]
    %v98 = vld [vmem:[#allocation8 + $0x40] sm:$0xff]
    %v99 = vld [vmem:[#allocation8 + $0x48] sm:$0xff]
    %v100 = vld [vmem:[#allocation8 + $0x50] sm:$0xff]
    %v101 = vld [vmem:[#allocation8 + $0x58] sm:$0xff]
    %v102 = vld [vmem:[#allocation8 + $0x60] sm:$0xff]
    %v103 = vld [vmem:[#allocation8 + $0x68] sm:$0xff]
    %v104 = vld [vmem:[#allocation8 + $0x70] sm:$0xff]
    %v105 = vld [vmem:[#allocation8 + $0x78] sm:$0xff]
    %v106 = vld [vmem:[#allocation8 + $0x80] sm:$0xff]
    %v107 = vld [vmem:[#allocation8 + $0x88] sm:$0xff]
    %v108 = vld [vmem:[#allocation8 + $0x90] sm:$0xff]
    %v109 = vld [vmem:[#allocation8 + $0x98] sm:$0xff]
    %v110 = vld [vmem:[#allocation8 + $0xa0] sm:$0xff]
    %v111 = vld [vmem:[#allocation8 + $0xa8] sm:$0xff]
    %v112 = vld [vmem:[#allocation8 + $0xb0] sm:$0xff]
    %v113 = vld [vmem:[#allocation8 + $0xb8] sm:$0xff]
    %v114 = vld [vmem:[#allocation8 + $0xc0] sm:$0xff]
    %v115 = vld [vmem:[#allocation8 + $0xc8] sm:$0xff]
    %v116 = vld [vmem:[#allocation8 + $0xd0] sm:$0xff]
    %v117 = vld [vmem:[#allocation8 + $0xd8] sm:$0xff]
    %v118 = vld [vmem:[#allocation8 + $0xe0] sm:$0xff]
    %v119 = vld [vmem:[#allocation8 + $0xe8] sm:$0xff]
    %v120 = vld [vmem:[#allocation8 + $0xf0] sm:$0xff]
    %v121 = vld [vmem:[#allocation8 + $0xf8] sm:$0xff]
    %v122 = vld [vmem:[#allocation8 + $0x100] sm:$0xff]
    %v123 = vld [vmem:[#allocation8 + $0x108] sm:$0xff]
    %v124 = vld [vmem:[#allocation8 + $0x110] sm:$0xff]
    %v125 = vld [vmem:[#allocation8 + $0x118] sm:$0xff]
    %v126 = vld [vmem:[#allocation8 + $0x120] sm:$0xff]
    %v127 = vld [vmem:[#allocation8 + $0x128] sm:$0xff]
    %v128 = vld [vmem:[#allocation8 + $0x130] sm:$0xff]
    %v129 = vld [vmem:[#allocation8 + $0x138] sm:$0xff]
    %v130 = vld [vmem:[#allocation8 + $0x140] sm:$0xff]
    %v131 = vld [vmem:[#allocation8 + $0x148] sm:$0xff]
    %v132 = vld [vmem:[#allocation8 + $0x150] sm:$0xff]
    %v133 = vld [vmem:[#allocation8 + $0x158] sm:$0xff]
    %v134 = vld [vmem:[#allocation8 + $0x160] sm:$0xff]
    %v135 = vld [vmem:[#allocation8 + $0x168] sm:$0xff]
    %v136 = vld [vmem:[#allocation8 + $0x170] sm:$0xff]
    %v137 = vld [vmem:[#allocation8 + $0x178] sm:$0xff]
    %v138 = vld [vmem:[#allocation11] sm:$0x7]
    %v140 = vlaneseq
    %v141 = vshrl.u32 %v140, 7
    %v142 = vsub.s32 0, %v141
    %v143 = vrot.slane %v138, %v142
    %v144 = vlaneseq
    %v145 = vshrl.u32 %v144, 7
    %v146 = vsub.s32 1, %v145
    %v147 = vrot.slane %v138, %v146
    %v148 = vlaneseq
    %v149 = vshrl.u32 %v148, 7
    %v150 = vsub.s32 2, %v149
    %v151 = vrot.slane %v138, %v150
    %155 = vmatprep.subr.mxu0 %v136
    %156 = vmatpush1.msra.mxu0 %v135
    %157 = vmatprep.subr.mxu0 %v133
    %158 = vmatpush1.msra.mxu0 %v132
    %159 = vmatprep.subr.mxu0 %v130
    %160 = vmatpush1.msra.mxu0 %v129
    %161 = vmatprep.subr.mxu0 %v127
    %162 = vmatpush1.msra.mxu0 %v126
    %163 = vmatprep.subr.mxu0 %v124
    %164 = vmatpush1.msra.mxu0 %v123
    %165 = vmatprep.subr.mxu0 %v121
    %166 = vmatpush1.msra.mxu0 %v120
    %167 = vmatprep.subr.mxu0 %v118
    %168 = vmatpush1.msra.mxu0 %v117
    %169 = vmatprep.subr.mxu0 %v115
    %170 = vmatpush1.msra.mxu0 %v114
    %171 = vmatprep.subr.mxu0 %v112
    %172 = vmatpush1.msra.mxu0 %v111
    %173 = vmatprep.subr.mxu0 %v109
    %174 = vmatpush1.msra.mxu0 %v108
    %175 = vmatprep.subr.mxu0 %v106
    %176 = vmatpush1.msra.mxu0 %v105
    %177 = vmatprep.subr.mxu0 %v103
    %178 = vmatpush1.msra.mxu0 %v102
    %179 = vmatprep.subr.mxu0 %v100
    %180 = vmatpush1.msra.mxu0 %v99
    %181 = vmatprep.subr.mxu0 %v97
    %182 = vmatpush1.msra.mxu0 %v96
    %183 = vmatprep.subr.mxu0 %v94
    %184 = vmatpush1.msra.mxu0 %v93
    %185 = vmatprep.subr.mxu0 %v91
    %186 = vmatpush1.msra.mxu0 %v90
    %187 = vmatprep.subr.mxu0 0.0
    %188 = vmatpush2.msra.mxu0 0.0
    %189 = vmatprep.subr.mxu0 0.0
    %190 = vmatpush2.msra.mxu0 0.0
    %191 = vmatprep.subr.mxu0 0.0
    %192 = vmatpush2.msra.mxu0 0.0
    %193 = vmatprep.subr.mxu0 0.0
    %194 = vmatpush2.msra.mxu0 0.0
    %195 = vmatprep.subr.mxu0 0.0
    %196 = vmatpush2.msra.mxu0 0.0
    %197 = vmatprep.subr.mxu0 0.0
    %198 = vmatpush2.msra.mxu0 0.0
    %199 = vmatprep.subr.mxu0 0.0
    %200 = vmatpush2.msra.mxu0 0.0
    %201 = vmatprep.subr.mxu0 0.0
    %202 = vmatpush2.msra.mxu0 0.0
    %203 = vmatprep.subr.mxu0 0.0
    %204 = vmatpush2.msra.mxu0 0.0
    %205 = vmatprep.subr.mxu0 0.0
    %206 = vmatpush2.msra.mxu0 0.0
    %207 = vmatprep.subr.mxu0 0.0
    %208 = vmatpush2.msra.mxu0 0.0
    %209 = vmatprep.subr.mxu0 0.0
    %210 = vmatpush2.msra.mxu0 0.0
    %211 = vmatprep.subr.mxu0 0.0
    %212 = vmatpush2.msra.mxu0 0.0
    %213 = vmatprep.subr.mxu0 0.0
    %214 = vmatpush2.msra.mxu0 0.0
    %215 = vmatprep.subr.mxu0 0.0
    %216 = vmatpush2.msra.mxu0 0.0
    %217 = vmatprep.subr.mxu0 0.0
    %218 = vmatpush2.msra.mxu0 0.0
    %219 = vmatprep.mubr.f32.mxu0 0.0
    %220 = vmatmul.mubr.f32.gmra.mxu0 %v82
    %v221 = vpop.f32.mrf.mxu0
    %v222 = vadd.f32 %v143, %v221
    %v223 = vpop.f32.mrf.mxu0
    %v224 = vadd.f32 %v147, %v223
    %225 = vmatprep.mubr.f32.mxu0 0.0
    %226 = vmatmul.mubr.f32.gmra.mxu0 %v83
    %v227 = vpop.f32.mrf.mxu0
    %v228 = vadd.f32 %v143, %v227
    %v229 = vpop.f32.mrf.mxu0
    %v230 = vadd.f32 %v147, %v229
    %231 = vmatprep.mubr.f32.mxu0 0.0
    %232 = vmatmul.mubr.f32.gmra.mxu0 %v84
    %v233 = vpop.f32.mrf.mxu0
    %v234 = vadd.f32 %v143, %v233
    %v235 = vpop.f32.mrf.mxu0
    %v236 = vadd.f32 %v147, %v235
    %237 = vmatprep.mubr.f32.mxu0 0.0
    %238 = vmatmul.mubr.f32.gmra.mxu0 %v85
    %v239 = vpop.f32.mrf.mxu0
    %v240 = vadd.f32 %v143, %v239
    %v241 = vpop.f32.mrf.mxu0
    %v242 = vadd.f32 %v147, %v241
    %243 = vmatprep.mubr.f32.mxu0 0.0
    %244 = vmatmul.mubr.f32.gmra.mxu0 %v86
    %v245 = vpop.f32.mrf.mxu0
    %v246 = vadd.f32 %v143, %v245
    %v247 = vpop.f32.mrf.mxu0
    %v248 = vadd.f32 %v147, %v247
    %249 = vmatprep.mubr.f32.mxu0 0.0
    %250 = vmatmul.mubr.f32.gmra.mxu0 %v87
    %v251 = vpop.f32.mrf.mxu0
    %v252 = vadd.f32 %v143, %v251
    %v253 = vpop.f32.mrf.mxu0
    %v254 = vadd.f32 %v147, %v253
    %255 = vmatprep.mubr.f32.mxu0 0.0
    %256 = vmatmul.mubr.f32.gmra.mxu0 %v88
    %v257 = vpop.f32.mrf.mxu0
    %v258 = vadd.f32 %v143, %v257
    %v259 = vpop.f32.mrf.mxu0
    %v260 = vadd.f32 %v147, %v259
    %261 = vmatprep.mubr.f32.mxu0 0.0
    %262 = vmatmul.mubr.f32.gmra.mxu0 %v89
    %v263 = vpop.f32.mrf.mxu0
    %v264 = vadd.f32 %v143, %v263
    %v265 = vpop.f32.mrf.mxu0
    %v266 = vadd.f32 %v147, %v265
    %267 = vdwg.mxu0
    %268 = vmatprep.subr.mxu0 0.0
    %269 = vmatpush1.msra.mxu0 %v137
    %270 = vmatprep.subr.mxu0 0.0
    %271 = vmatpush1.msra.mxu0 %v134
    %272 = vmatprep.subr.mxu0 0.0
    %273 = vmatpush1.msra.mxu0 %v131
    %274 = vmatprep.subr.mxu0 0.0
    %275 = vmatpush1.msra.mxu0 %v128
    %276 = vmatprep.subr.mxu0 0.0
    %277 = vmatpush1.msra.mxu0 %v125
    %278 = vmatprep.subr.mxu0 0.0
    %279 = vmatpush1.msra.mxu0 %v122
    %280 = vmatprep.subr.mxu0 0.0
    %281 = vmatpush1.msra.mxu0 %v119
    %282 = vmatprep.subr.mxu0 0.0
    %283 = vmatpush1.msra.mxu0 %v116
    %284 = vmatprep.subr.mxu0 0.0
    %285 = vmatpush1.msra.mxu0 %v113
    %286 = vmatprep.subr.mxu0 0.0
    %287 = vmatpush1.msra.mxu0 %v110
    %288 = vmatprep.subr.mxu0 0.0
    %289 = vmatpush1.msra.mxu0 %v107
    %290 = vmatprep.subr.mxu0 0.0
    %291 = vmatpush1.msra.mxu0 %v104
    %292 = vmatprep.subr.mxu0 0.0
    %293 = vmatpush1.msra.mxu0 %v101
    %294 = vmatprep.subr.mxu0 0.0
    %295 = vmatpush1.msra.mxu0 %v98
    %296 = vmatprep.subr.mxu0 0.0
    %297 = vmatpush1.msra.mxu0 %v95
    %298 = vmatprep.subr.mxu0 0.0
    %299 = vmatpush1.msra.mxu0 %v92
    %300 = vmatprep.subr.mxu0 0.0
    %301 = vmatpush2.msra.mxu0 0.0
    %302 = vmatprep.subr.mxu0 0.0
    %303 = vmatpush2.msra.mxu0 0.0
    %304 = vmatprep.subr.mxu0 0.0
    %305 = vmatpush2.msra.mxu0 0.0
    %306 = vmatprep.subr.mxu0 0.0
    %307 = vmatpush2.msra.mxu0 0.0
    %308 = vmatprep.subr.mxu0 0.0
    %309 = vmatpush2.msra.mxu0 0.0
    %310 = vmatprep.subr.mxu0 0.0
    %311 = vmatpush2.msra.mxu0 0.0
    %312 = vmatprep.subr.mxu0 0.0
    %313 = vmatpush2.msra.mxu0 0.0
    %314 = vmatprep.subr.mxu0 0.0
    %315 = vmatpush2.msra.mxu0 0.0
    %316 = vmatprep.subr.mxu0 0.0
    %317 = vmatpush2.msra.mxu0 0.0
    %318 = vmatprep.subr.mxu0 0.0
    %319 = vmatpush2.msra.mxu0 0.0
    %320 = vmatprep.subr.mxu0 0.0
    %321 = vmatpush2.msra.mxu0 0.0
    %322 = vmatprep.subr.mxu0 0.0
    %323 = vmatpush2.msra.mxu0 0.0
    %324 = vmatprep.subr.mxu0 0.0
    %325 = vmatpush2.msra.mxu0 0.0
    %326 = vmatprep.subr.mxu0 0.0
    %327 = vmatpush2.msra.mxu0 0.0
    %328 = vmatprep.subr.mxu0 0.0
    %329 = vmatpush2.msra.mxu0 0.0
    %330 = vmatprep.subr.mxu0 0.0
    %331 = vmatpush2.msra.mxu0 0.0
    %332 = vmatprep.mubr.f32.mxu0 0.0
    %333 = vmatmul.mubr.f32.gmra.mxu0 %v82
    %v334 = vpop.f32.mrf.mxu0
    %v335 = vadd.f32 %v151, %v334
    %v336 = vpop.f32.mrf.mxu0
    %337 = vmatprep.mubr.f32.mxu0 0.0
    %338 = vmatmul.mubr.f32.gmra.mxu0 %v83
    %v339 = vpop.f32.mrf.mxu0
    %v340 = vadd.f32 %v151, %v339
    %v341 = vpop.f32.mrf.mxu0
    %342 = vmatprep.mubr.f32.mxu0 0.0
    %343 = vmatmul.mubr.f32.gmra.mxu0 %v84
    %v344 = vpop.f32.mrf.mxu0
    %v345 = vadd.f32 %v151, %v344
    %v346 = vpop.f32.mrf.mxu0
    %347 = vmatprep.mubr.f32.mxu0 0.0
    %348 = vmatmul.mubr.f32.gmra.mxu0 %v85
    %v349 = vpop.f32.mrf.mxu0
    %v350 = vadd.f32 %v151, %v349
    %v351 = vpop.f32.mrf.mxu0
    %352 = vmatprep.mubr.f32.mxu0 0.0
    %353 = vmatmul.mubr.f32.gmra.mxu0 %v86
    %v354 = vpop.f32.mrf.mxu0
    %v355 = vadd.f32 %v151, %v354
    %v356 = vpop.f32.mrf.mxu0
    %357 = vmatprep.mubr.f32.mxu0 0.0
    %358 = vmatmul.mubr.f32.gmra.mxu0 %v87
    %v359 = vpop.f32.mrf.mxu0
    %v360 = vadd.f32 %v151, %v359
    %v361 = vpop.f32.mrf.mxu0
    %362 = vmatprep.mubr.f32.mxu0 0.0
    %363 = vmatmul.mubr.f32.gmra.mxu0 %v88
    %v364 = vpop.f32.mrf.mxu0
    %v365 = vadd.f32 %v151, %v364
    %v366 = vpop.f32.mrf.mxu0
    %367 = vmatprep.mubr.f32.mxu0 0.0
    %368 = vmatmul.mubr.f32.gmra.mxu0 %v89
    %v369 = vpop.f32.mrf.mxu0
    %v370 = vadd.f32 %v151, %v369
    %v371 = vpop.f32.mrf.mxu0
    %372 = vdwg.mxu0
    %373 = vst [vmem:[#allocation3] sm:$0xff] %v222
    %374 = vst [vmem:[#allocation3 + $0x8] sm:$0xff] %v224
    %375 = vst [vmem:[#allocation3 + $0x10] sm:$0xff] %v335
    %376 = vst [vmem:[#allocation3 + $0x18] sm:$0xff] %v228
    %377 = vst [vmem:[#allocation3 + $0x20] sm:$0xff] %v230
    %378 = vst [vmem:[#allocation3 + $0x28] sm:$0xff] %v340
    %379 = vst [vmem:[#allocation3 + $0x30] sm:$0xff] %v234
    %380 = vst [vmem:[#allocation3 + $0x38] sm:$0xff] %v236
    %381 = vst [vmem:[#allocation3 + $0x40] sm:$0xff] %v345
    %382 = vst [vmem:[#allocation3 + $0x48] sm:$0xff] %v240
    %383 = vst [vmem:[#allocation3 + $0x50] sm:$0xff] %v242
    %384 = vst [vmem:[#allocation3 + $0x58] sm:$0xff] %v350
    %385 = vst [vmem:[#allocation3 + $0x60] sm:$0xff] %v246
    %386 = vst [vmem:[#allocation3 + $0x68] sm:$0xff] %v248
    %387 = vst [vmem:[#allocation3 + $0x70] sm:$0xff] %v355
    %388 = vst [vmem:[#allocation3 + $0x78] sm:$0xff] %v252
    %389 = vst [vmem:[#allocation3 + $0x80] sm:$0xff] %v254
    %390 = vst [vmem:[#allocation3 + $0x88] sm:$0xff] %v360
    %391 = vst [vmem:[#allocation3 + $0x90] sm:$0xff] %v258
    %392 = vst [vmem:[#allocation3 + $0x98] sm:$0xff] %v260
    %393 = vst [vmem:[#allocation3 + $0xa0] sm:$0xff] %v365
    %394 = vst [vmem:[#allocation3 + $0xa8] sm:$0xff] %v264
    %395 = vst [vmem:[#allocation3 + $0xb0] sm:$0xff] %v266
    %396 = vst [vmem:[#allocation3 + $0xb8] sm:$0xff] %v370
    %v397 = vld [vmem:[#allocation2] sm:$0xff]
    %v398 = vld [vmem:[#allocation3] sm:$0xff]
    %v399 = vld [vmem:[#allocation3 + $0x8] sm:$0xff]
    %v400 = vld [vmem:[#allocation3 + $0x10] sm:$0xff]
    %v401 = vld [vmem:[#allocation10] sm:$0xff]
    %v402 = vld [vmem:[#allocation10 + $0x8] sm:$0xff]
    %v403 = vld [vmem:[#allocation10 + $0x10] sm:$0xff]
    %v404 = vld [vmem:[#allocation10 + $0x18] sm:$0xff]
    %v405 = vld [vmem:[#allocation10 + $0x20] sm:$0xff]
    %v406 = vld [vmem:[#allocation10 + $0x28] sm:$0xff]
    %v407 = vld [vmem:[#allocation10 + $0x30] sm:$0xff]
    %v408 = vld [vmem:[#allocation10 + $0x38] sm:$0xff]
    %v409 = vld [vmem:[#allocation10 + $0x40] sm:$0xff]
    %v410 = vld [vmem:[#allocation10 + $0x48] sm:$0xff]
    %v411 = vld [vmem:[#allocation10 + $0x50] sm:$0xff]
    %v412 = vld [vmem:[#allocation10 + $0x58] sm:$0xff]
    %v413 = vld [vmem:[#allocation10 + $0x60] sm:$0xff]
    %v414 = vld [vmem:[#allocation10 + $0x68] sm:$0xff]
    %v415 = vld [vmem:[#allocation10 + $0x70] sm:$0xff]
    %v416 = vld [vmem:[#allocation10 + $0x78] sm:$0xff]
    %v417 = vld [vmem:[#allocation10 + $0x80] sm:$0xff]
    %v418 = vld [vmem:[#allocation10 + $0x88] sm:$0xff]
    %v419 = vld [vmem:[#allocation10 + $0x90] sm:$0xff]
    %v420 = vld [vmem:[#allocation10 + $0x98] sm:$0xff]
    %v421 = vld [vmem:[#allocation10 + $0xa0] sm:$0xff]
    %v422 = vld [vmem:[#allocation10 + $0xa8] sm:$0xff]
    %v423 = vld [vmem:[#allocation10 + $0xb0] sm:$0xff]
    %v424 = vld [vmem:[#allocation10 + $0xb8] sm:$0xff]
    %v425 = vld [vmem:[#allocation10 + $0xc0] sm:$0xff]
    %v426 = vld [vmem:[#allocation10 + $0xc8] sm:$0xff]
    %v427 = vld [vmem:[#allocation10 + $0xd0] sm:$0xff]
    %v428 = vld [vmem:[#allocation10 + $0xd8] sm:$0xff]
    %v429 = vld [vmem:[#allocation10 + $0xe0] sm:$0xff]
    %v430 = vld [vmem:[#allocation10 + $0xe8] sm:$0xff]
    %v431 = vld [vmem:[#allocation10 + $0xf0] sm:$0xff]
    %v432 = vld [vmem:[#allocation10 + $0xf8] sm:$0xff]
    %v433 = vld [vmem:[#allocation10 + $0x100] sm:$0xff]
    %v434 = vld [vmem:[#allocation10 + $0x108] sm:$0xff]
    %v435 = vld [vmem:[#allocation10 + $0x110] sm:$0xff]
    %v436 = vld [vmem:[#allocation10 + $0x118] sm:$0xff]
    %v437 = vld [vmem:[#allocation10 + $0x120] sm:$0xff]
    %v438 = vld [vmem:[#allocation10 + $0x128] sm:$0xff]
    %v439 = vld [vmem:[#allocation10 + $0x130] sm:$0xff]
    %v440 = vld [vmem:[#allocation10 + $0x138] sm:$0xff]
    %v441 = vld [vmem:[#allocation10 + $0x140] sm:$0xff]
    %v442 = vld [vmem:[#allocation10 + $0x148] sm:$0xff]
    %v443 = vld [vmem:[#allocation10 + $0x150] sm:$0xff]
    %v444 = vld [vmem:[#allocation10 + $0x158] sm:$0xff]
    %v445 = vld [vmem:[#allocation10 + $0x160] sm:$0xff]
    %v446 = vld [vmem:[#allocation10 + $0x168] sm:$0xff]
    %v447 = vld [vmem:[#allocation10 + $0x170] sm:$0xff]
    %v448 = vld [vmem:[#allocation10 + $0x178] sm:$0xff]
    %449 = vmatprep.subr.mxu0 %v447
    %450 = vmatpush1.msra.mxu0 %v446
    %451 = vmatprep.subr.mxu0 %v444
    %452 = vmatpush1.msra.mxu0 %v443
    %453 = vmatprep.subr.mxu0 %v441
    %454 = vmatpush1.msra.mxu0 %v440
    %455 = vmatprep.subr.mxu0 %v438
    %456 = vmatpush1.msra.mxu0 %v437
    %457 = vmatprep.subr.mxu0 %v435
    %458 = vmatpush1.msra.mxu0 %v434
    %459 = vmatprep.subr.mxu0 %v432
    %460 = vmatpush1.msra.mxu0 %v431
    %461 = vmatprep.subr.mxu0 %v429
    %462 = vmatpush1.msra.mxu0 %v428
    %463 = vmatprep.subr.mxu0 %v426
    %464 = vmatpush1.msra.mxu0 %v425
    %465 = vmatprep.subr.mxu0 %v423
    %466 = vmatpush1.msra.mxu0 %v422
    %467 = vmatprep.subr.mxu0 %v420
    %468 = vmatpush1.msra.mxu0 %v419
    %469 = vmatprep.subr.mxu0 %v417
    %470 = vmatpush1.msra.mxu0 %v416
    %471 = vmatprep.subr.mxu0 %v414
    %472 = vmatpush1.msra.mxu0 %v413
    %473 = vmatprep.subr.mxu0 %v411
    %474 = vmatpush1.msra.mxu0 %v410
    %475 = vmatprep.subr.mxu0 %v408
    %476 = vmatpush1.msra.mxu0 %v407
    %477 = vmatprep.subr.mxu0 %v405
    %478 = vmatpush1.msra.mxu0 %v404
    %479 = vmatprep.subr.mxu0 %v402
    %480 = vmatpush1.msra.mxu0 %v401
    %481 = vmatprep.subr.mxu0 0.0
    %482 = vmatpush2.msra.mxu0 0.0
    %483 = vmatprep.subr.mxu0 0.0
    %484 = vmatpush2.msra.mxu0 0.0
    %485 = vmatprep.subr.mxu0 0.0
    %486 = vmatpush2.msra.mxu0 0.0
    %487 = vmatprep.subr.mxu0 0.0
    %488 = vmatpush2.msra.mxu0 0.0
    %489 = vmatprep.subr.mxu0 0.0
    %490 = vmatpush2.msra.mxu0 0.0
    %491 = vmatprep.subr.mxu0 0.0
    %492 = vmatpush2.msra.mxu0 0.0
    %493 = vmatprep.subr.mxu0 0.0
    %494 = vmatpush2.msra.mxu0 0.0
    %495 = vmatprep.subr.mxu0 0.0
    %496 = vmatpush2.msra.mxu0 0.0
    %497 = vmatprep.subr.mxu0 0.0
    %498 = vmatpush2.msra.mxu0 0.0
    %499 = vmatprep.subr.mxu0 0.0
    %500 = vmatpush2.msra.mxu0 0.0
    %501 = vmatprep.subr.mxu0 0.0
    %502 = vmatpush2.msra.mxu0 0.0
    %503 = vmatprep.subr.mxu0 0.0
    %504 = vmatpush2.msra.mxu0 0.0
    %505 = vmatprep.subr.mxu0 0.0
    %506 = vmatpush2.msra.mxu0 0.0
    %507 = vmatprep.subr.mxu0 0.0
    %508 = vmatpush2.msra.mxu0 0.0
    %509 = vmatprep.subr.mxu0 0.0
    %510 = vmatpush2.msra.mxu0 0.0
    %511 = vmatprep.subr.mxu0 0.0
    %512 = vmatpush2.msra.mxu0 0.0
    %513 = vmatprep.mubr.f32.mxu0 0.0
    %514 = vmatmul.mubr.f32.gmra.mxu0 %v397
    %v515 = vpop.f32.mrf.mxu0
    %v516 = vadd.f32 0.0, %v515
    %v517 = vpop.f32.mrf.mxu0
    %v518 = vadd.f32 0.0, %v517
    %519 = vdwg.mxu0
    %520 = vmatprep.subr.mxu0 0.0
    %521 = vmatpush1.msra.mxu0 %v448
    %522 = vmatprep.subr.mxu0 0.0
    %523 = vmatpush1.msra.mxu0 %v445
    %524 = vmatprep.subr.mxu0 0.0
    %525 = vmatpush1.msra.mxu0 %v442
    %526 = vmatprep.subr.mxu0 0.0
    %527 = vmatpush1.msra.mxu0 %v439
    %528 = vmatprep.subr.mxu0 0.0
    %529 = vmatpush1.msra.mxu0 %v436
    %530 = vmatprep.subr.mxu0 0.0
    %531 = vmatpush1.msra.mxu0 %v433
    %532 = vmatprep.subr.mxu0 0.0
    %533 = vmatpush1.msra.mxu0 %v430
    %534 = vmatprep.subr.mxu0 0.0
    %535 = vmatpush1.msra.mxu0 %v427
    %536 = vmatprep.subr.mxu0 0.0
    %537 = vmatpush1.msra.mxu0 %v424
    %538 = vmatprep.subr.mxu0 0.0
    %539 = vmatpush1.msra.mxu0 %v421
    %540 = vmatprep.subr.mxu0 0.0
    %541 = vmatpush1.msra.mxu0 %v418
    %542 = vmatprep.subr.mxu0 0.0
    %543 = vmatpush1.msra.mxu0 %v415
    %544 = vmatprep.subr.mxu0 0.0
    %545 = vmatpush1.msra.mxu0 %v412
    %546 = vmatprep.subr.mxu0 0.0
    %547 = vmatpush1.msra.mxu0 %v409
    %548 = vmatprep.subr.mxu0 0.0
    %549 = vmatpush1.msra.mxu0 %v406
    %550 = vmatprep.subr.mxu0 0.0
    %551 = vmatpush1.msra.mxu0 %v403
    %552 = vmatprep.subr.mxu0 0.0
    %553 = vmatpush2.msra.mxu0 0.0
    %554 = vmatprep.subr.mxu0 0.0
    %555 = vmatpush2.msra.mxu0 0.0
    %556 = vmatprep.subr.mxu0 0.0
    %557 = vmatpush2.msra.mxu0 0.0
    %558 = vmatprep.subr.mxu0 0.0
    %559 = vmatpush2.msra.mxu0 0.0
    %560 = vmatprep.subr.mxu0 0.0
    %561 = vmatpush2.msra.mxu0 0.0
    %562 = vmatprep.subr.mxu0 0.0
    %563 = vmatpush2.msra.mxu0 0.0
    %564 = vmatprep.subr.mxu0 0.0
    %565 = vmatpush2.msra.mxu0 0.0
    %566 = vmatprep.subr.mxu0 0.0
    %567 = vmatpush2.msra.mxu0 0.0
    %568 = vmatprep.subr.mxu0 0.0
    %569 = vmatpush2.msra.mxu0 0.0
    %570 = vmatprep.subr.mxu0 0.0
    %571 = vmatpush2.msra.mxu0 0.0
    %572 = vmatprep.subr.mxu0 0.0
    %573 = vmatpush2.msra.mxu0 0.0
    %574 = vmatprep.subr.mxu0 0.0
    %575 = vmatpush2.msra.mxu0 0.0
    %576 = vmatprep.subr.mxu0 0.0
    %577 = vmatpush2.msra.mxu0 0.0
    %578 = vmatprep.subr.mxu0 0.0
    %579 = vmatpush2.msra.mxu0 0.0
    %580 = vmatprep.subr.mxu0 0.0
    %581 = vmatpush2.msra.mxu0 0.0
    %582 = vmatprep.subr.mxu0 0.0
    %583 = vmatpush2.msra.mxu0 0.0
    %584 = vmatprep.mubr.f32.mxu0 0.0
    %585 = vmatmul.mubr.f32.gmra.mxu0 %v397
    %v586 = vpop.f32.mrf.mxu0
    %v587 = vadd.f32 0.0, %v586
    %v588 = vpop.f32.mrf.mxu0
    %589 = vdwg.mxu0
    %v590 = vadd.f32 %v398, %v516
    %v591 = vxor.u32 %v590, 2147483648
    %v592 = vmul.f32 %v591, 1.442695
    %v593 = vpow.pop %v592
    %v594 = vadd.f32 %v593, 1.0
    %v595 = vrcp.pop %v594
    %v596 = vmul.f32 1.0, %v595
    %v597 = vadd.f32 %v399, %v518
    %v598 = vxor.u32 %v597, 2147483648
    %v599 = vmul.f32 %v598, 1.442695
    %v600 = vpow.pop %v599
    %v601 = vadd.f32 %v600, 1.0
    %v602 = vrcp.pop %v601
    %v603 = vmul.f32 1.0, %v602
    %v604 = vld [vmem:[%s4] sm:$0x1]
    %v606 = vlaneseq
    %v607 = vshrl.u32 %v606, 7
    %v608 = vsub.s32 0, %v607
    %v609 = vrot.slane %v604, %v608
    %v611 = vadd.f32 %v587, %v609
    %v612 = vmul.f32 %v596, %v611
    %v613 = vadd.f32 %v400, %v612
    %v614 = vtanh.pop %v613
    %v615 = vsub.f32 1.0, %v603
    %v616 = vmul.f32 %v615, %v614
    %v617 = vmul.f32 %v603, %v397
    %v618 = vadd.f32 %v616, %v617
    %619 = vst [vmem:[#allocation4] sm:$0xff] %v618
    %s620 = scalar_lea.vmem [#allocation3], 24
    %v621 = vld [vmem:[%s620] sm:$0xff]
    %v622 = vld [vmem:[%s620 + $0x8] sm:$0xff]
    %v623 = vld [vmem:[%s620 + $0x10] sm:$0xff]
    %v624 = vld [vmem:[#allocation10] sm:$0xff]
    %v625 = vld [vmem:[#allocation10 + $0x8] sm:$0xff]
    %v626 = vld [vmem:[#allocation10 + $0x10] sm:$0xff]
    %v627 = vld [vmem:[#allocation10 + $0x18] sm:$0xff]
    %v628 = vld [vmem:[#allocation10 + $0x20] sm:$0xff]
    %v629 = vld [vmem:[#allocation10 + $0x28] sm:$0xff]
    %v630 = vld [vmem:[#allocation10 + $0x30] sm:$0xff]
    %v631 = vld [vmem:[#allocation10 + $0x38] sm:$0xff]
    %v632 = vld [vmem:[#allocation10 + $0x40] sm:$0xff]
    %v633 = vld [vmem:[#allocation10 + $0x48] sm:$0xff]
    %v634 = vld [vmem:[#allocation10 + $0x50] sm:$0xff]
    %v635 = vld [vmem:[#allocation10 + $0x58] sm:$0xff]
    %v636 = vld [vmem:[#allocation10 + $0x60] sm:$0xff]
    %v637 = vld [vmem:[#allocation10 + $0x68] sm:$0xff]
    %v638 = vld [vmem:[#allocation10 + $0x70] sm:$0xff]
    %v639 = vld [vmem:[#allocation10 + $0x78] sm:$0xff]
    %v640 = vld [vmem:[#allocation10 + $0x80] sm:$0xff]
    %v641 = vld [vmem:[#allocation10 + $0x88] sm:$0xff]
    %v642 = vld [vmem:[#allocation10 + $0x90] sm:$0xff]
    %v643 = vld [vmem:[#allocation10 + $0x98] sm:$0xff]
    %v644 = vld [vmem:[#allocation10 + $0xa0] sm:$0xff]
    %v645 = vld [vmem:[#allocation10 + $0xa8] sm:$0xff]
    %v646 = vld [vmem:[#allocation10 + $0xb0] sm:$0xff]
    %v647 = vld [vmem:[#allocation10 + $0xb8] sm:$0xff]
    %v648 = vld [vmem:[#allocation10 + $0xc0] sm:$0xff]
    %v649 = vld [vmem:[#allocation10 + $0xc8] sm:$0xff]
    %v650 = vld [vmem:[#allocation10 + $0xd0] sm:$0xff]
    %v651 = vld [vmem:[#allocation10 + $0xd8] sm:$0xff]
    %v652 = vld [vmem:[#allocation10 + $0xe0] sm:$0xff]
    %v653 = vld [vmem:[#allocation10 + $0xe8] sm:$0xff]
    %v654 = vld [vmem:[#allocation10 + $0xf0] sm:$0xff]
    %v655 = vld [vmem:[#allocation10 + $0xf8] sm:$0xff]
    %v656 = vld [vmem:[#allocation10 + $0x100] sm:$0xff]
    %v657 = vld [vmem:[#allocation10 + $0x108] sm:$0xff]
    %v658 = vld [vmem:[#allocation10 + $0x110] sm:$0xff]
    %v659 = vld [vmem:[#allocation10 + $0x118] sm:$0xff]
    %v660 = vld [vmem:[#allocation10 + $0x120] sm:$0xff]
    %v661 = vld [vmem:[#allocation10 + $0x128] sm:$0xff]
    %v662 = vld [vmem:[#allocation10 + $0x130] sm:$0xff]
    %v663 = vld [vmem:[#allocation10 + $0x138] sm:$0xff]
    %v664 = vld [vmem:[#allocation10 + $0x140] sm:$0xff]
    %v665 = vld [vmem:[#allocation10 + $0x148] sm:$0xff]
    %v666 = vld [vmem:[#allocation10 + $0x150] sm:$0xff]
    %v667 = vld [vmem:[#allocation10 + $0x158] sm:$0xff]
    %v668 = vld [vmem:[#allocation10 + $0x160] sm:$0xff]
    %v669 = vld [vmem:[#allocation10 + $0x168] sm:$0xff]
    %v670 = vld [vmem:[#allocation10 + $0x170] sm:$0xff]
    %v671 = vld [vmem:[#allocation10 + $0x178] sm:$0xff]
    %672 = vmatprep.subr.mxu0 %v670
    %673 = vmatpush1.msra.mxu0 %v669
    %674 = vmatprep.subr.mxu0 %v667
    %675 = vmatpush1.msra.mxu0 %v666
    %676 = vmatprep.subr.mxu0 %v664
    %677 = vmatpush1.msra.mxu0 %v663
    %678 = vmatprep.subr.mxu0 %v661
    %679 = vmatpush1.msra.mxu0 %v660
    %680 = vmatprep.subr.mxu0 %v658
    %681 = vmatpush1.msra.mxu0 %v657
    %682 = vmatprep.subr.mxu0 %v655
    %683 = vmatpush1.msra.mxu0 %v654
    %684 = vmatprep.subr.mxu0 %v652
    %685 = vmatpush1.msra.mxu0 %v651
    %686 = vmatprep.subr.mxu0 %v649
    %687 = vmatpush1.msra.mxu0 %v648
    %688 = vmatprep.subr.mxu0 %v646
    %689 = vmatpush1.msra.mxu0 %v645
    %690 = vmatprep.subr.mxu0 %v643
    %691 = vmatpush1.msra.mxu0 %v642
    %692 = vmatprep.subr.mxu0 %v640
    %693 = vmatpush1.msra.mxu0 %v639
    %694 = vmatprep.subr.mxu0 %v637
    %695 = vmatpush1.msra.mxu0 %v636
    %696 = vmatprep.subr.mxu0 %v634
    %697 = vmatpush1.msra.mxu0 %v633
    %698 = vmatprep.subr.mxu0 %v631
    %699 = vmatpush1.msra.mxu0 %v630
    %700 = vmatprep.subr.mxu0 %v628
    %701 = vmatpush1.msra.mxu0 %v627
    %702 = vmatprep.subr.mxu0 %v625
    %703 = vmatpush1.msra.mxu0 %v624
    %704 = vmatprep.subr.mxu0 0.0
    %705 = vmatpush2.msra.mxu0 0.0
    %706 = vmatprep.subr.mxu0 0.0
    %707 = vmatpush2.msra.mxu0 0.0
    %708 = vmatprep.subr.mxu0 0.0
    %709 = vmatpush2.msra.mxu0 0.0
    %710 = vmatprep.subr.mxu0 0.0
    %711 = vmatpush2.msra.mxu0 0.0
    %712 = vmatprep.subr.mxu0 0.0
    %713 = vmatpush2.msra.mxu0 0.0
    %714 = vmatprep.subr.mxu0 0.0
    %715 = vmatpush2.msra.mxu0 0.0
    %716 = vmatprep.subr.mxu0 0.0
    %717 = vmatpush2.msra.mxu0 0.0
    %718 = vmatprep.subr.mxu0 0.0
    %719 = vmatpush2.msra.mxu0 0.0
    %720 = vmatprep.subr.mxu0 0.0
    %721 = vmatpush2.msra.mxu0 0.0
    %722 = vmatprep.subr.mxu0 0.0
    %723 = vmatpush2.msra.mxu0 0.0
    %724 = vmatprep.subr.mxu0 0.0
    %725 = vmatpush2.msra.mxu0 0.0
    %726 = vmatprep.subr.mxu0 0.0
    %727 = vmatpush2.msra.mxu0 0.0
    %728 = vmatprep.subr.mxu0 0.0
    %729 = vmatpush2.msra.mxu0 0.0
    %730 = vmatprep.subr.mxu0 0.0
    %731 = vmatpush2.msra.mxu0 0.0
    %732 = vmatprep.subr.mxu0 0.0
    %733 = vmatpush2.msra.mxu0 0.0
    %734 = vmatprep.subr.mxu0 0.0
    %735 = vmatpush2.msra.mxu0 0.0
    %736 = vmatprep.mubr.f32.mxu0 0.0
    %737 = vmatmul.mubr.f32.gmra.mxu0 %v618
    %v738 = vpop.f32.mrf.mxu0
    %v739 = vadd.f32 0.0, %v738
    %v740 = vpop.f32.mrf.mxu0
    %v741 = vadd.f32 0.0, %v740
    %742 = vdwg.mxu0
    %743 = vmatprep.subr.mxu0 0.0
    %744 = vmatpush1.msra.mxu0 %v671
    %745 = vmatprep.subr.mxu0 0.0
    %746 = vmatpush1.msra.mxu0 %v668
    %747 = vmatprep.subr.mxu0 0.0
    %748 = vmatpush1.msra.mxu0 %v665
    %749 = vmatprep.subr.mxu0 0.0
    %750 = vmatpush1.msra.mxu0 %v662
    %751 = vmatprep.subr.mxu0 0.0
    %752 = vmatpush1.msra.mxu0 %v659
    %753 = vmatprep.subr.mxu0 0.0
    %754 = vmatpush1.msra.mxu0 %v656
    %755 = vmatprep.subr.mxu0 0.0
    %756 = vmatpush1.msra.mxu0 %v653
    %757 = vmatprep.subr.mxu0 0.0
    %758 = vmatpush1.msra.mxu0 %v650
    %759 = vmatprep.subr.mxu0 0.0
    %760 = vmatpush1.msra.mxu0 %v647
    %761 = vmatprep.subr.mxu0 0.0
    %762 = vmatpush1.msra.mxu0 %v644
    %763 = vmatprep.subr.mxu0 0.0
    %764 = vmatpush1.msra.mxu0 %v641
    %765 = vmatprep.subr.mxu0 0.0
    %766 = vmatpush1.msra.mxu0 %v638
    %767 = vmatprep.subr.mxu0 0.0
    %768 = vmatpush1.msra.mxu0 %v635
    %769 = vmatprep.subr.mxu0 0.0
    %770 = vmatpush1.msra.mxu0 %v632
    %771 = vmatprep.subr.mxu0 0.0
    %772 = vmatpush1.msra.mxu0 %v629
    %773 = vmatprep.subr.mxu0 0.0
    %774 = vmatpush1.msra.mxu0 %v626
    %775 = vmatprep.subr.mxu0 0.0
    %776 = vmatpush2.msra.mxu0 0.0
    %777 = vmatprep.subr.mxu0 0.0
    %778 = vmatpush2.msra.mxu0 0.0
    %779 = vmatprep.subr.mxu0 0.0
    %780 = vmatpush2.msra.mxu0 0.0
    %781 = vmatprep.subr.mxu0 0.0
    %782 = vmatpush2.msra.mxu0 0.0
    %783 = vmatprep.subr.mxu0 0.0
    %784 = vmatpush2.msra.mxu0 0.0
    %785 = vmatprep.subr.mxu0 0.0
    %786 = vmatpush2.msra.mxu0 0.0
    %787 = vmatprep.subr.mxu0 0.0
    %788 = vmatpush2.msra.mxu0 0.0
    %789 = vmatprep.subr.mxu0 0.0
    %790 = vmatpush2.msra.mxu0 0.0
    %791 = vmatprep.subr.mxu0 0.0
    %792 = vmatpush2.msra.mxu0 0.0
    %793 = vmatprep.subr.mxu0 0.0
    %794 = vmatpush2.msra.mxu0 0.0
    %795 = vmatprep.subr.mxu0 0.0
    %796 = vmatpush2.msra.mxu0 0.0
    %797 = vmatprep.subr.mxu0 0.0
    %798 = vmatpush2.msra.mxu0 0.0
    %799 = vmatprep.subr.mxu0 0.0
    %800 = vmatpush2.msra.mxu0 0.0
    %801 = vmatprep.subr.mxu0 0.0
    %802 = vmatpush2.msra.mxu0 0.0
    %803 = vmatprep.subr.mxu0 0.0
    %804 = vmatpush2.msra.mxu0 0.0
    %805 = vmatprep.subr.mxu0 0.0
    %806 = vmatpush2.msra.mxu0 0.0
    %807 = vmatprep.mubr.f32.mxu0 0.0
    %808 = vmatmul.mubr.f32.gmra.mxu0 %v618
    %v809 = vpop.f32.mrf.mxu0
    %v810 = vadd.f32 0.0, %v809
    %v811 = vpop.f32.mrf.mxu0
    %812 = vdwg.mxu0
    %v813 = vadd.f32 %v621, %v739
    %v814 = vxor.u32 %v813, 2147483648
    %v815 = vmul.f32 %v814, 1.442695
    %v816 = vpow.pop %v815
    %v817 = vadd.f32 %v816, 1.0
    %v818 = vrcp.pop %v817
    %v819 = vmul.f32 1.0, %v818
    %v820 = vadd.f32 %v622, %v741
    %v821 = vxor.u32 %v820, 2147483648
    %v822 = vmul.f32 %v821, 1.442695
    %v823 = vpow.pop %v822
    %v824 = vadd.f32 %v823, 1.0
    %v825 = vrcp.pop %v824
    %v826 = vmul.f32 1.0, %v825
    %v827 = vld [vmem:[%s4] sm:$0x1]
    %v829 = vlaneseq
    %v830 = vshrl.u32 %v829, 7
    %v831 = vsub.s32 0, %v830
    %v832 = vrot.slane %v827, %v831
    %v834 = vadd.f32 %v810, %v832
    %v835 = vmul.f32 %v819, %v834
    %v836 = vadd.f32 %v623, %v835
    %v837 = vtanh.pop %v836
    %v838 = vsub.f32 1.0, %v826
    %v839 = vmul.f32 %v838, %v837
    %v840 = vmul.f32 %v826, %v618
    %v841 = vadd.f32 %v839, %v840
    %s842 = scalar_lea.vmem [#allocation4], 8
    %843 = vst [vmem:[%s842] sm:$0xff] %v841
    %s844 = scalar_lea.vmem [#allocation3], 48
    %v845 = vld [vmem:[%s844] sm:$0xff]
    %v846 = vld [vmem:[%s844 + $0x8] sm:$0xff]
    %v847 = vld [vmem:[%s844 + $0x10] sm:$0xff]
    %v848 = vld [vmem:[#allocation10] sm:$0xff]
    %v849 = vld [vmem:[#allocation10 + $0x8] sm:$0xff]
    %v850 = vld [vmem:[#allocation10 + $0x10] sm:$0xff]
    %v851 = vld [vmem:[#allocation10 + $0x18] sm:$0xff]
    %v852 = vld [vmem:[#allocation10 + $0x20] sm:$0xff]
    %v853 = vld [vmem:[#allocation10 + $0x28] sm:$0xff]
    %v854 = vld [vmem:[#allocation10 + $0x30] sm:$0xff]
    %v855 = vld [vmem:[#allocation10 + $0x38] sm:$0xff]
    %v856 = vld [vmem:[#allocation10 + $0x40] sm:$0xff]
    %v857 = vld [vmem:[#allocation10 + $0x48] sm:$0xff]
    %v858 = vld [vmem:[#allocation10 + $0x50] sm:$0xff]
    %v859 = vld [vmem:[#allocation10 + $0x58] sm:$0xff]
    %v860 = vld [vmem:[#allocation10 + $0x60] sm:$0xff]
    %v861 = vld [vmem:[#allocation10 + $0x68] sm:$0xff]
    %v862 = vld [vmem:[#allocation10 + $0x70] sm:$0xff]
    %v863 = vld [vmem:[#allocation10 + $0x78] sm:$0xff]
    %v864 = vld [vmem:[#allocation10 + $0x80] sm:$0xff]
    %v865 = vld [vmem:[#allocation10 + $0x88] sm:$0xff]
    %v866 = vld [vmem:[#allocation10 + $0x90] sm:$0xff]
    %v867 = vld [vmem:[#allocation10 + $0x98] sm:$0xff]
    %v868 = vld [vmem:[#allocation10 + $0xa0] sm:$0xff]
    %v869 = vld [vmem:[#allocation10 + $0xa8] sm:$0xff]
    %v870 = vld [vmem:[#allocation10 + $0xb0] sm:$0xff]
    %v871 = vld [vmem:[#allocation10 + $0xb8] sm:$0xff]
    %v872 = vld [vmem:[#allocation10 + $0xc0] sm:$0xff]
    %v873 = vld [vmem:[#allocation10 + $0xc8] sm:$0xff]
    %v874 = vld [vmem:[#allocation10 + $0xd0] sm:$0xff]
    %v875 = vld [vmem:[#allocation10 + $0xd8] sm:$0xff]
    %v876 = vld [vmem:[#allocation10 + $0xe0] sm:$0xff]
    %v877 = vld [vmem:[#allocation10 + $0xe8] sm:$0xff]
    %v878 = vld [vmem:[#allocation10 + $0xf0] sm:$0xff]
    %v879 = vld [vmem:[#allocation10 + $0xf8] sm:$0xff]
    %v880 = vld [vmem:[#allocation10 + $0x100] sm:$0xff]
    %v881 = vld [vmem:[#allocation10 + $0x108] sm:$0xff]
    %v882 = vld [vmem:[#allocation10 + $0x110] sm:$0xff]
    %v883 = vld [vmem:[#allocation10 + $0x118] sm:$0xff]
    %v884 = vld [vmem:[#allocation10 + $0x120] sm:$0xff]
    %v885 = vld [vmem:[#allocation10 + $0x128] sm:$0xff]
    %v886 = vld [vmem:[#allocation10 + $0x130] sm:$0xff]
    %v887 = vld [vmem:[#allocation10 + $0x138] sm:$0xff]
    %v888 = vld [vmem:[#allocation10 + $0x140] sm:$0xff]
    %v889 = vld [vmem:[#allocation10 + $0x148] sm:$0xff]
    %v890 = vld [vmem:[#allocation10 + $0x150] sm:$0xff]
    %v891 = vld [vmem:[#allocation10 + $0x158] sm:$0xff]
    %v892 = vld [vmem:[#allocation10 + $0x160] sm:$0xff]
    %v893 = vld [vmem:[#allocation10 + $0x168] sm:$0xff]
    %v894 = vld [vmem:[#allocation10 + $0x170] sm:$0xff]
    %v895 = vld [vmem:[#allocation10 + $0x178] sm:$0xff]
    %896 = vmatprep.subr.mxu0 %v894
    %897 = vmatpush1.msra.mxu0 %v893
    %898 = vmatprep.subr.mxu0 %v891
    %899 = vmatpush1.msra.mxu0 %v890
    %900 = vmatprep.subr.mxu0 %v888
    %901 = vmatpush1.msra.mxu0 %v887
    %902 = vmatprep.subr.mxu0 %v885
    %903 = vmatpush1.msra.mxu0 %v884
    %904 = vmatprep.subr.mxu0 %v882
    %905 = vmatpush1.msra.mxu0 %v881
    %906 = vmatprep.subr.mxu0 %v879
    %907 = vmatpush1.msra.mxu0 %v878
    %908 = vmatprep.subr.mxu0 %v876
    %909 = vmatpush1.msra.mxu0 %v875
    %910 = vmatprep.subr.mxu0 %v873
    %911 = vmatpush1.msra.mxu0 %v872
    %912 = vmatprep.subr.mxu0 %v870
    %913 = vmatpush1.msra.mxu0 %v869
    %914 = vmatprep.subr.mxu0 %v867
    %915 = vmatpush1.msra.mxu0 %v866
    %916 = vmatprep.subr.mxu0 %v864
    %917 = vmatpush1.msra.mxu0 %v863
    %918 = vmatprep.subr.mxu0 %v861
    %919 = vmatpush1.msra.mxu0 %v860
    %920 = vmatprep.subr.mxu0 %v858
    %921 = vmatpush1.msra.mxu0 %v857
    %922 = vmatprep.subr.mxu0 %v855
    %923 = vmatpush1.msra.mxu0 %v854
    %924 = vmatprep.subr.mxu0 %v852
    %925 = vmatpush1.msra.mxu0 %v851
    %926 = vmatprep.subr.mxu0 %v849
    %927 = vmatpush1.msra.mxu0 %v848
    %928 = vmatprep.subr.mxu0 0.0
    %929 = vmatpush2.msra.mxu0 0.0
    %930 = vmatprep.subr.mxu0 0.0
    %931 = vmatpush2.msra.mxu0 0.0
    %932 = vmatprep.subr.mxu0 0.0
    %933 = vmatpush2.msra.mxu0 0.0
    %934 = vmatprep.subr.mxu0 0.0
    %935 = vmatpush2.msra.mxu0 0.0
    %936 = vmatprep.subr.mxu0 0.0
    %937 = vmatpush2.msra.mxu0 0.0
    %938 = vmatprep.subr.mxu0 0.0
    %939 = vmatpush2.msra.mxu0 0.0
    %940 = vmatprep.subr.mxu0 0.0
    %941 = vmatpush2.msra.mxu0 0.0
    %942 = vmatprep.subr.mxu0 0.0
    %943 = vmatpush2.msra.mxu0 0.0
    %944 = vmatprep.subr.mxu0 0.0
    %945 = vmatpush2.msra.mxu0 0.0
    %946 = vmatprep.subr.mxu0 0.0
    %947 = vmatpush2.msra.mxu0 0.0
    %948 = vmatprep.subr.mxu0 0.0
    %949 = vmatpush2.msra.mxu0 0.0
    %950 = vmatprep.subr.mxu0 0.0
    %951 = vmatpush2.msra.mxu0 0.0
    %952 = vmatprep.subr.mxu0 0.0
    %953 = vmatpush2.msra.mxu0 0.0
    %954 = vmatprep.subr.mxu0 0.0
    %955 = vmatpush2.msra.mxu0 0.0
    %956 = vmatprep.subr.mxu0 0.0
    %957 = vmatpush2.msra.mxu0 0.0
    %958 = vmatprep.subr.mxu0 0.0
    %959 = vmatpush2.msra.mxu0 0.0
    %960 = vmatprep.mubr.f32.mxu0 0.0
    %961 = vmatmul.mubr.f32.gmra.mxu0 %v841
    %v962 = vpop.f32.mrf.mxu0
    %v963 = vadd.f32 0.0, %v962
    %v964 = vpop.f32.mrf.mxu0
    %v965 = vadd.f32 0.0, %v964
    %966 = vdwg.mxu0
    %967 = vmatprep.subr.mxu0 0.0
    %968 = vmatpush1.msra.mxu0 %v895
    %969 = vmatprep.subr.mxu0 0.0
    %970 = vmatpush1.msra.mxu0 %v892
    %971 = vmatprep.subr.mxu0 0.0
    %972 = vmatpush1.msra.mxu0 %v889
    %973 = vmatprep.subr.mxu0 0.0
    %974 = vmatpush1.msra.mxu0 %v886
    %975 = vmatprep.subr.mxu0 0.0
    %976 = vmatpush1.msra.mxu0 %v883
    %977 = vmatprep.subr.mxu0 0.0
    %978 = vmatpush1.msra.mxu0 %v880
    %979 = vmatprep.subr.mxu0 0.0
    %980 = vmatpush1.msra.mxu0 %v877
    %981 = vmatprep.subr.mxu0 0.0
    %982 = vmatpush1.msra.mxu0 %v874
    %983 = vmatprep.subr.mxu0 0.0
    %984 = vmatpush1.msra.mxu0 %v871
    %985 = vmatprep.subr.mxu0 0.0
    %986 = vmatpush1.msra.mxu0 %v868
    %987 = vmatprep.subr.mxu0 0.0
    %988 = vmatpush1.msra.mxu0 %v865
    %989 = vmatprep.subr.mxu0 0.0
    %990 = vmatpush1.msra.mxu0 %v862
    %991 = vmatprep.subr.mxu0 0.0
    %992 = vmatpush1.msra.mxu0 %v859
    %993 = vmatprep.subr.mxu0 0.0
    %994 = vmatpush1.msra.mxu0 %v856
    %995 = vmatprep.subr.mxu0 0.0
    %996 = vmatpush1.msra.mxu0 %v853
    %997 = vmatprep.subr.mxu0 0.0
    %998 = vmatpush1.msra.mxu0 %v850
    %999 = vmatprep.subr.mxu0 0.0
    %1000 = vmatpush2.msra.mxu0 0.0
    %1001 = vmatprep.subr.mxu0 0.0
    %1002 = vmatpush2.msra.mxu0 0.0
    %1003 = vmatprep.subr.mxu0 0.0
    %1004 = vmatpush2.msra.mxu0 0.0
    %1005 = vmatprep.subr.mxu0 0.0
    %1006 = vmatpush2.msra.mxu0 0.0
    %1007 = vmatprep.subr.mxu0 0.0
    %1008 = vmatpush2.msra.mxu0 0.0
    %1009 = vmatprep.subr.mxu0 0.0
    %1010 = vmatpush2.msra.mxu0 0.0
    %1011 = vmatprep.subr.mxu0 0.0
    %1012 = vmatpush2.msra.mxu0 0.0
    %1013 = vmatprep.subr.mxu0 0.0
    %1014 = vmatpush2.msra.mxu0 0.0
    %1015 = vmatprep.subr.mxu0 0.0
    %1016 = vmatpush2.msra.mxu0 0.0
    %1017 = vmatprep.subr.mxu0 0.0
    %1018 = vmatpush2.msra.mxu0 0.0
    %1019 = vmatprep.subr.mxu0 0.0
    %1020 = vmatpush2.msra.mxu0 0.0
    %1021 = vmatprep.subr.mxu0 0.0
    %1022 = vmatpush2.msra.mxu0 0.0
    %1023 = vmatprep.subr.mxu0 0.0
    %1024 = vmatpush2.msra.mxu0 0.0
    %1025 = vmatprep.subr.mxu0 0.0
    %1026 = vmatpush2.msra.mxu0 0.0
    %1027 = vmatprep.subr.mxu0 0.0
    %1028 = vmatpush2.msra.mxu0 0.0
    %1029 = vmatprep.subr.mxu0 0.0
    %1030 = vmatpush2.msra.mxu0 0.0
    %1031 = vmatprep.mubr.f32.mxu0 0.0
    %1032 = vmatmul.mubr.f32.gmra.mxu0 %v841
    %v1033 = vpop.f32.mrf.mxu0
    %v1034 = vadd.f32 0.0, %v1033
    %v1035 = vpop.f32.mrf.mxu0
    %1036 = vdwg.mxu0
    %v1037 = vadd.f32 %v845, %v963
    %v1038 = vxor.u32 %v1037, 2147483648
    %v1039 = vmul.f32 %v1038, 1.442695
    %v1040 = vpow.pop %v1039
    %v1041 = vadd.f32 %v1040, 1.0
    %v1042 = vrcp.pop %v1041
    %v1043 = vmul.f32 1.0, %v1042
    %v1044 = vadd.f32 %v846, %v965
    %v1045 = vxor.u32 %v1044, 2147483648
    %v1046 = vmul.f32 %v1045, 1.442695
    %v1047 = vpow.pop %v1046
    %v1048 = vadd.f32 %v1047, 1.0
    %v1049 = vrcp.pop %v1048
    %v1050 = vmul.f32 1.0, %v1049
    %v1051 = vld [vmem:[%s4] sm:$0x1]
    %v1053 = vlaneseq
    %v1054 = vshrl.u32 %v1053, 7
    %v1055 = vsub.s32 0, %v1054
    %v1056 = vrot.slane %v1051, %v1055
    %v1058 = vadd.f32 %v1034, %v1056
    %v1059 = vmul.f32 %v1043, %v1058
    %v1060 = vadd.f32 %v847, %v1059
    %v1061 = vtanh.pop %v1060
    %v1062 = vsub.f32 1.0, %v1050
    %v1063 = vmul.f32 %v1062, %v1061
    %v1064 = vmul.f32 %v1050, %v841
    %v1065 = vadd.f32 %v1063, %v1064
    %s1066 = scalar_lea.vmem [#allocation4], 16
    %1067 = vst [vmem:[%s1066] sm:$0xff] %v1065
    %s1068 = scalar_lea.vmem [#allocation3], 72
    %v1069 = vld [vmem:[%s1068] sm:$0xff]
    %v1070 = vld [vmem:[%s1068 + $0x8] sm:$0xff]
    %v1071 = vld [vmem:[%s1068 + $0x10] sm:$0xff]
    %v1072 = vld [vmem:[#allocation10] sm:$0xff]
    %v1073 = vld [vmem:[#allocation10 + $0x8] sm:$0xff]
    %v1074 = vld [vmem:[#allocation10 + $0x10] sm:$0xff]
    %v1075 = vld [vmem:[#allocation10 + $0x18] sm:$0xff]
    %v1076 = vld [vmem:[#allocation10 + $0x20] sm:$0xff]
    %v1077 = vld [vmem:[#allocation10 + $0x28] sm:$0xff]
    %v1078 = vld [vmem:[#allocation10 + $0x30] sm:$0xff]
    %v1079 = vld [vmem:[#allocation10 + $0x38] sm:$0xff]
    %v1080 = vld [vmem:[#allocation10 + $0x40] sm:$0xff]
    %v1081 = vld [vmem:[#allocation10 + $0x48] sm:$0xff]
    %v1082 = vld [vmem:[#allocation10 + $0x50] sm:$0xff]
    %v1083 = vld [vmem:[#allocation10 + $0x58] sm:$0xff]
    %v1084 = vld [vmem:[#allocation10 + $0x60] sm:$0xff]
    %v1085 = vld [vmem:[#allocation10 + $0x68] sm:$0xff]
    %v1086 = vld [vmem:[#allocation10 + $0x70] sm:$0xff]
    %v1087 = vld [vmem:[#allocation10 + $0x78] sm:$0xff]
    %v1088 = vld [vmem:[#allocation10 + $0x80] sm:$0xff]
    %v1089 = vld [vmem:[#allocation10 + $0x88] sm:$0xff]
    %v1090 = vld [vmem:[#allocation10 + $0x90] sm:$0xff]
    %v1091 = vld [vmem:[#allocation10 + $0x98] sm:$0xff]
    %v1092 = vld [vmem:[#allocation10 + $0xa0] sm:$0xff]
    %v1093 = vld [vmem:[#allocation10 + $0xa8] sm:$0xff]
    %v1094 = vld [vmem:[#allocation10 + $0xb0] sm:$0xff]
    %v1095 = vld [vmem:[#allocation10 + $0xb8] sm:$0xff]
    %v1096 = vld [vmem:[#allocation10 + $0xc0] sm:$0xff]
    %v1097 = vld [vmem:[#allocation10 + $0xc8] sm:$0xff]
    %v1098 = vld [vmem:[#allocation10 + $0xd0] sm:$0xff]
    %v1099 = vld [vmem:[#allocation10 + $0xd8] sm:$0xff]
    %v1100 = vld [vmem:[#allocation10 + $0xe0] sm:$0xff]
    %v1101 = vld [vmem:[#allocation10 + $0xe8] sm:$0xff]
    %v1102 = vld [vmem:[#allocation10 + $0xf0] sm:$0xff]
    %v1103 = vld [vmem:[#allocation10 + $0xf8] sm:$0xff]
    %v1104 = vld [vmem:[#allocation10 + $0x100] sm:$0xff]
    %v1105 = vld [vmem:[#allocation10 + $0x108] sm:$0xff]
    %v1106 = vld [vmem:[#allocation10 + $0x110] sm:$0xff]
    %v1107 = vld [vmem:[#allocation10 + $0x118] sm:$0xff]
    %v1108 = vld [vmem:[#allocation10 + $0x120] sm:$0xff]
    %v1109 = vld [vmem:[#allocation10 + $0x128] sm:$0xff]
    %v1110 = vld [vmem:[#allocation10 + $0x130] sm:$0xff]
    %v1111 = vld [vmem:[#allocation10 + $0x138] sm:$0xff]
    %v1112 = vld [vmem:[#allocation10 + $0x140] sm:$0xff]
    %v1113 = vld [vmem:[#allocation10 + $0x148] sm:$0xff]
    %v1114 = vld [vmem:[#allocation10 + $0x150] sm:$0xff]
    %v1115 = vld [vmem:[#allocation10 + $0x158] sm:$0xff]
    %v1116 = vld [vmem:[#allocation10 + $0x160] sm:$0xff]
    %v1117 = vld [vmem:[#allocation10 + $0x168] sm:$0xff]
    %v1118 = vld [vmem:[#allocation10 + $0x170] sm:$0xff]
    %v1119 = vld [vmem:[#allocation10 + $0x178] sm:$0xff]
    %1120 = vmatprep.subr.mxu0 %v1118
    %1121 = vmatpush1.msra.mxu0 %v1117
    %1122 = vmatprep.subr.mxu0 %v1115
    %1123 = vmatpush1.msra.mxu0 %v1114
    %1124 = vmatprep.subr.mxu0 %v1112
    %1125 = vmatpush1.msra.mxu0 %v1111
    %1126 = vmatprep.subr.mxu0 %v1109
    %1127 = vmatpush1.msra.mxu0 %v1108
    %1128 = vmatprep.subr.mxu0 %v1106
    %1129 = vmatpush1.msra.mxu0 %v1105
    %1130 = vmatprep.subr.mxu0 %v1103
    %1131 = vmatpush1.msra.mxu0 %v1102
    %1132 = vmatprep.subr.mxu0 %v1100
    %1133 = vmatpush1.msra.mxu0 %v1099
    %1134 = vmatprep.subr.mxu0 %v1097
    %1135 = vmatpush1.msra.mxu0 %v1096
    %1136 = vmatprep.subr.mxu0 %v1094
    %1137 = vmatpush1.msra.mxu0 %v1093
    %1138 = vmatprep.subr.mxu0 %v1091
    %1139 = vmatpush1.msra.mxu0 %v1090
    %1140 = vmatprep.subr.mxu0 %v1088
    %1141 = vmatpush1.msra.mxu0 %v1087
    %1142 = vmatprep.subr.mxu0 %v1085
    %1143 = vmatpush1.msra.mxu0 %v1084
    %1144 = vmatprep.subr.mxu0 %v1082
    %1145 = vmatpush1.msra.mxu0 %v1081
    %1146 = vmatprep.subr.mxu0 %v1079
    %1147 = vmatpush1.msra.mxu0 %v1078
    %1148 = vmatprep.subr.mxu0 %v1076
    %1149 = vmatpush1.msra.mxu0 %v1075
    %1150 = vmatprep.subr.mxu0 %v1073
    %1151 = vmatpush1.msra.mxu0 %v1072
    %1152 = vmatprep.subr.mxu0 0.0
    %1153 = vmatpush2.msra.mxu0 0.0
    %1154 = vmatprep.subr.mxu0 0.0
    %1155 = vmatpush2.msra.mxu0 0.0
    %1156 = vmatprep.subr.mxu0 0.0
    %1157 = vmatpush2.msra.mxu0 0.0
    %1158 = vmatprep.subr.mxu0 0.0
    %1159 = vmatpush2.msra.mxu0 0.0
    %1160 = vmatprep.subr.mxu0 0.0
    %1161 = vmatpush2.msra.mxu0 0.0
    %1162 = vmatprep.subr.mxu0 0.0
    %1163 = vmatpush2.msra.mxu0 0.0
    %1164 = vmatprep.subr.mxu0 0.0
    %1165 = vmatpush2.msra.mxu0 0.0
    %1166 = vmatprep.subr.mxu0 0.0
    %1167 = vmatpush2.msra.mxu0 0.0
    %1168 = vmatprep.subr.mxu0 0.0
    %1169 = vmatpush2.msra.mxu0 0.0
    %1170 = vmatprep.subr.mxu0 0.0
    %1171 = vmatpush2.msra.mxu0 0.0
    %1172 = vmatprep.subr.mxu0 0.0
    %1173 = vmatpush2.msra.mxu0 0.0
    %1174 = vmatprep.subr.mxu0 0.0
    %1175 = vmatpush2.msra.mxu0 0.0
    %1176 = vmatprep.subr.mxu0 0.0
    %1177 = vmatpush2.msra.mxu0 0.0
    %1178 = vmatprep.subr.mxu0 0.0
    %1179 = vmatpush2.msra.mxu0 0.0
    %1180 = vmatprep.subr.mxu0 0.0
    %1181 = vmatpush2.msra.mxu0 0.0
    %1182 = vmatprep.subr.mxu0 0.0
    %1183 = vmatpush2.msra.mxu0 0.0
    %1184 = vmatprep.mubr.f32.mxu0 0.0
    %1185 = vmatmul.mubr.f32.gmra.mxu0 %v1065
    %v1186 = vpop.f32.mrf.mxu0
    %v1187 = vadd.f32 0.0, %v1186
    %v1188 = vpop.f32.mrf.mxu0
    %v1189 = vadd.f32 0.0, %v1188
    %1190 = vdwg.mxu0
    %1191 = vmatprep.subr.mxu0 0.0
    %1192 = vmatpush1.msra.mxu0 %v1119
    %1193 = vmatprep.subr.mxu0 0.0
    %1194 = vmatpush1.msra.mxu0 %v1116
    %1195 = vmatprep.subr.mxu0 0.0
    %1196 = vmatpush1.msra.mxu0 %v1113
    %1197 = vmatprep.subr.mxu0 0.0
    %1198 = vmatpush1.msra.mxu0 %v1110
    %1199 = vmatprep.subr.mxu0 0.0
    %1200 = vmatpush1.msra.mxu0 %v1107
    %1201 = vmatprep.subr.mxu0 0.0
    %1202 = vmatpush1.msra.mxu0 %v1104
    %1203 = vmatprep.subr.mxu0 0.0
    %1204 = vmatpush1.msra.mxu0 %v1101
    %1205 = vmatprep.subr.mxu0 0.0
    %1206 = vmatpush1.msra.mxu0 %v1098
    %1207 = vmatprep.subr.mxu0 0.0
    %1208 = vmatpush1.msra.mxu0 %v1095
    %1209 = vmatprep.subr.mxu0 0.0
    %1210 = vmatpush1.msra.mxu0 %v1092
    %1211 = vmatprep.subr.mxu0 0.0
    %1212 = vmatpush1.msra.mxu0 %v1089
    %1213 = vmatprep.subr.mxu0 0.0
    %1214 = vmatpush1.msra.mxu0 %v1086
    %1215 = vmatprep.subr.mxu0 0.0
    %1216 = vmatpush1.msra.mxu0 %v1083
    %1217 = vmatprep.subr.mxu0 0.0
    %1218 = vmatpush1.msra.mxu0 %v1080
    %1219 = vmatprep.subr.mxu0 0.0
    %1220 = vmatpush1.msra.mxu0 %v1077
    %1221 = vmatprep.subr.mxu0 0.0
    %1222 = vmatpush1.msra.mxu0 %v1074
    %1223 = vmatprep.subr.mxu0 0.0
    %1224 = vmatpush2.msra.mxu0 0.0
    %1225 = vmatprep.subr.mxu0 0.0
    %1226 = vmatpush2.msra.mxu0 0.0
    %1227 = vmatprep.subr.mxu0 0.0
    %1228 = vmatpush2.msra.mxu0 0.0
    %1229 = vmatprep.subr.mxu0 0.0
    %1230 = vmatpush2.msra.mxu0 0.0
    %1231 = vmatprep.subr.mxu0 0.0
    %1232 = vmatpush2.msra.mxu0 0.0
    %1233 = vmatprep.subr.mxu0 0.0
    %1234 = vmatpush2.msra.mxu0 0.0
    %1235 = vmatprep.subr.mxu0 0.0
    %1236 = vmatpush2.msra.mxu0 0.0
    %1237 = vmatprep.subr.mxu0 0.0
    %1238 = vmatpush2.msra.mxu0 0.0
    %1239 = vmatprep.subr.mxu0 0.0
    %1240 = vmatpush2.msra.mxu0 0.0
    %1241 = vmatprep.subr.mxu0 0.0
    %1242 = vmatpush2.msra.mxu0 0.0
    %1243 = vmatprep.subr.mxu0 0.0
    %1244 = vmatpush2.msra.mxu0 0.0
    %1245 = vmatprep.subr.mxu0 0.0
    %1246 = vmatpush2.msra.mxu0 0.0
    %1247 = vmatprep.subr.mxu0 0.0
    %1248 = vmatpush2.msra.mxu0 0.0
    %1249 = vmatprep.subr.mxu0 0.0
    %1250 = vmatpush2.msra.mxu0 0.0
    %1251 = vmatprep.subr.mxu0 0.0
    %1252 = vmatpush2.msra.mxu0 0.0
    %1253 = vmatprep.subr.mxu0 0.0
    %1254 = vmatpush2.msra.mxu0 0.0
    %1255 = vmatprep.mubr.f32.mxu0 0.0
    %1256 = vmatmul.mubr.f32.gmra.mxu0 %v1065
    %v1257 = vpop.f32.mrf.mxu0
    %v1258 = vadd.f32 0.0, %v1257
    %v1259 = vpop.f32.mrf.mxu0
    %1260 = vdwg.mxu0
    %v1261 = vadd.f32 %v1069, %v1187
    %v1262 = vxor.u32 %v1261, 2147483648
    %v1263 = vmul.f32 %v1262, 1.442695
    %v1264 = vpow.pop %v1263
    %v1265 = vadd.f32 %v1264, 1.0
    %v1266 = vrcp.pop %v1265
    %v1267 = vmul.f32 1.0, %v1266
    %v1268 = vadd.f32 %v1070, %v1189
    %v1269 = vxor.u32 %v1268, 2147483648
    %v1270 = vmul.f32 %v1269, 1.442695
    %v1271 = vpow.pop %v1270
    %v1272 = vadd.f32 %v1271, 1.0
    %v1273 = vrcp.pop %v1272
    %v1274 = vmul.f32 1.0, %v1273
    %v1275 = vld [vmem:[%s4] sm:$0x1]
    %v1277 = vlaneseq
    %v1278 = vshrl.u32 %v1277, 7
    %v1279 = vsub.s32 0, %v1278
    %v1280 = vrot.slane %v1275, %v1279
    %v1282 = vadd.f32 %v1258, %v1280
    %v1283 = vmul.f32 %v1267, %v1282
    %v1284 = vadd.f32 %v1071, %v1283
    %v1285 = vtanh.pop %v1284
    %v1286 = vsub.f32 1.0, %v1274
    %v1287 = vmul.f32 %v1286, %v1285
    %v1288 = vmul.f32 %v1274, %v1065
    %v1289 = vadd.f32 %v1287, %v1288
    %s1290 = scalar_lea.vmem [#allocation4], 24
    %1291 = vst [vmem:[%s1290] sm:$0xff] %v1289
    %s1292 = scalar_lea.vmem [#allocation3], 96
    %v1293 = vld [vmem:[%s1292] sm:$0xff]
    %v1294 = vld [vmem:[%s1292 + $0x8] sm:$0xff]
    %v1295 = vld [vmem:[%s1292 + $0x10] sm:$0xff]
    %v1296 = vld [vmem:[#allocation10] sm:$0xff]
    %v1297 = vld [vmem:[#allocation10 + $0x8] sm:$0xff]
    %v1298 = vld [vmem:[#allocation10 + $0x10] sm:$0xff]
    %v1299 = vld [vmem:[#allocation10 + $0x18] sm:$0xff]
    %v1300 = vld [vmem:[#allocation10 + $0x20] sm:$0xff]
    %v1301 = vld [vmem:[#allocation10 + $0x28] sm:$0xff]
    %v1302 = vld [vmem:[#allocation10 + $0x30] sm:$0xff]
    %v1303 = vld [vmem:[#allocation10 + $0x38] sm:$0xff]
    %v1304 = vld [vmem:[#allocation10 + $0x40] sm:$0xff]
    %v1305 = vld [vmem:[#allocation10 + $0x48] sm:$0xff]
    %v1306 = vld [vmem:[#allocation10 + $0x50] sm:$0xff]
    %v1307 = vld [vmem:[#allocation10 + $0x58] sm:$0xff]
    %v1308 = vld [vmem:[#allocation10 + $0x60] sm:$0xff]
    %v1309 = vld [vmem:[#allocation10 + $0x68] sm:$0xff]
    %v1310 = vld [vmem:[#allocation10 + $0x70] sm:$0xff]
    %v1311 = vld [vmem:[#allocation10 + $0x78] sm:$0xff]
    %v1312 = vld [vmem:[#allocation10 + $0x80] sm:$0xff]
    %v1313 = vld [vmem:[#allocation10 + $0x88] sm:$0xff]
    %v1314 = vld [vmem:[#allocation10 + $0x90] sm:$0xff]
    %v1315 = vld [vmem:[#allocation10 + $0x98] sm:$0xff]
    %v1316 = vld [vmem:[#allocation10 + $0xa0] sm:$0xff]
    %v1317 = vld [vmem:[#allocation10 + $0xa8] sm:$0xff]
    %v1318 = vld [vmem:[#allocation10 + $0xb0] sm:$0xff]
    %v1319 = vld [vmem:[#allocation10 + $0xb8] sm:$0xff]
    %v1320 = vld [vmem:[#allocation10 + $0xc0] sm:$0xff]
    %v1321 = vld [vmem:[#allocation10 + $0xc8] sm:$0xff]
    %v1322 = vld [vmem:[#allocation10 + $0xd0] sm:$0xff]
    %v1323 = vld [vmem:[#allocation10 + $0xd8] sm:$0xff]
    %v1324 = vld [vmem:[#allocation10 + $0xe0] sm:$0xff]
    %v1325 = vld [vmem:[#allocation10 + $0xe8] sm:$0xff]
    %v1326 = vld [vmem:[#allocation10 + $0xf0] sm:$0xff]
    %v1327 = vld [vmem:[#allocation10 + $0xf8] sm:$0xff]
    %v1328 = vld [vmem:[#allocation10 + $0x100] sm:$0xff]
    %v1329 = vld [vmem:[#allocation10 + $0x108] sm:$0xff]
    %v1330 = vld [vmem:[#allocation10 + $0x110] sm:$0xff]
    %v1331 = vld [vmem:[#allocation10 + $0x118] sm:$0xff]
    %v1332 = vld [vmem:[#allocation10 + $0x120] sm:$0xff]
    %v1333 = vld [vmem:[#allocation10 + $0x128] sm:$0xff]
    %v1334 = vld [vmem:[#allocation10 + $0x130] sm:$0xff]
    %v1335 = vld [vmem:[#allocation10 + $0x138] sm:$0xff]
    %v1336 = vld [vmem:[#allocation10 + $0x140] sm:$0xff]
    %v1337 = vld [vmem:[#allocation10 + $0x148] sm:$0xff]
    %v1338 = vld [vmem:[#allocation10 + $0x150] sm:$0xff]
    %v1339 = vld [vmem:[#allocation10 + $0x158] sm:$0xff]
    %v1340 = vld [vmem:[#allocation10 + $0x160] sm:$0xff]
    %v1341 = vld [vmem:[#allocation10 + $0x168] sm:$0xff]
    %v1342 = vld [vmem:[#allocation10 + $0x170] sm:$0xff]
    %v1343 = vld [vmem:[#allocation10 + $0x178] sm:$0xff]
    %1344 = vmatprep.subr.mxu0 %v1342
    %1345 = vmatpush1.msra.mxu0 %v1341
    %1346 = vmatprep.subr.mxu0 %v1339
    %1347 = vmatpush1.msra.mxu0 %v1338
    %1348 = vmatprep.subr.mxu0 %v1336
    %1349 = vmatpush1.msra.mxu0 %v1335
    %1350 = vmatprep.subr.mxu0 %v1333
    %1351 = vmatpush1.msra.mxu0 %v1332
    %1352 = vmatprep.subr.mxu0 %v1330
    %1353 = vmatpush1.msra.mxu0 %v1329
    %1354 = vmatprep.subr.mxu0 %v1327
    %1355 = vmatpush1.msra.mxu0 %v1326
    %1356 = vmatprep.subr.mxu0 %v1324
    %1357 = vmatpush1.msra.mxu0 %v1323
    %1358 = vmatprep.subr.mxu0 %v1321
    %1359 = vmatpush1.msra.mxu0 %v1320
    %1360 = vmatprep.subr.mxu0 %v1318
    %1361 = vmatpush1.msra.mxu0 %v1317
    %1362 = vmatprep.subr.mxu0 %v1315
    %1363 = vmatpush1.msra.mxu0 %v1314
    %1364 = vmatprep.subr.mxu0 %v1312
    %1365 = vmatpush1.msra.mxu0 %v1311
    %1366 = vmatprep.subr.mxu0 %v1309
    %1367 = vmatpush1.msra.mxu0 %v1308
    %1368 = vmatprep.subr.mxu0 %v1306
    %1369 = vmatpush1.msra.mxu0 %v1305
    %1370 = vmatprep.subr.mxu0 %v1303
    %1371 = vmatpush1.msra.mxu0 %v1302
    %1372 = vmatprep.subr.mxu0 %v1300
    %1373 = vmatpush1.msra.mxu0 %v1299
    %1374 = vmatprep.subr.mxu0 %v1297
    %1375 = vmatpush1.msra.mxu0 %v1296
    %1376 = vmatprep.subr.mxu0 0.0
    %1377 = vmatpush2.msra.mxu0 0.0
    %1378 = vmatprep.subr.mxu0 0.0
    %1379 = vmatpush2.msra.mxu0 0.0
    %1380 = vmatprep.subr.mxu0 0.0
    %1381 = vmatpush2.msra.mxu0 0.0
    %1382 = vmatprep.subr.mxu0 0.0
    %1383 = vmatpush2.msra.mxu0 0.0
    %1384 = vmatprep.subr.mxu0 0.0
    %1385 = vmatpush2.msra.mxu0 0.0
    %1386 = vmatprep.subr.mxu0 0.0
    %1387 = vmatpush2.msra.mxu0 0.0
    %1388 = vmatprep.subr.mxu0 0.0
    %1389 = vmatpush2.msra.mxu0 0.0
    %1390 = vmatprep.subr.mxu0 0.0
    %1391 = vmatpush2.msra.mxu0 0.0
    %1392 = vmatprep.subr.mxu0 0.0
    %1393 = vmatpush2.msra.mxu0 0.0
    %1394 = vmatprep.subr.mxu0 0.0
    %1395 = vmatpush2.msra.mxu0 0.0
    %1396 = vmatprep.subr.mxu0 0.0
    %1397 = vmatpush2.msra.mxu0 0.0
    %1398 = vmatprep.subr.mxu0 0.0
    %1399 = vmatpush2.msra.mxu0 0.0
    %1400 = vmatprep.subr.mxu0 0.0
    %1401 = vmatpush2.msra.mxu0 0.0
    %1402 = vmatprep.subr.mxu0 0.0
    %1403 = vmatpush2.msra.mxu0 0.0
    %1404 = vmatprep.subr.mxu0 0.0
    %1405 = vmatpush2.msra.mxu0 0.0
    %1406 = vmatprep.subr.mxu0 0.0
    %1407 = vmatpush2.msra.mxu0 0.0
    %1408 = vmatprep.mubr.f32.mxu0 0.0
    %1409 = vmatmul.mubr.f32.gmra.mxu0 %v1289
    %v1410 = vpop.f32.mrf.mxu0
    %v1411 = vadd.f32 0.0, %v1410
    %v1412 = vpop.f32.mrf.mxu0
    %v1413 = vadd.f32 0.0, %v1412
    %1414 = vdwg.mxu0
    %1415 = vmatprep.subr.mxu0 0.0
    %1416 = vmatpush1.msra.mxu0 %v1343
    %1417 = vmatprep.subr.mxu0 0.0
    %1418 = vmatpush1.msra.mxu0 %v1340
    %1419 = vmatprep.subr.mxu0 0.0
    %1420 = vmatpush1.msra.mxu0 %v1337
    %1421 = vmatprep.subr.mxu0 0.0
    %1422 = vmatpush1.msra.mxu0 %v1334
    %1423 = vmatprep.subr.mxu0 0.0
    %1424 = vmatpush1.msra.mxu0 %v1331
    %1425 = vmatprep.subr.mxu0 0.0
    %1426 = vmatpush1.msra.mxu0 %v1328
    %1427 = vmatprep.subr.mxu0 0.0
    %1428 = vmatpush1.msra.mxu0 %v1325
    %1429 = vmatprep.subr.mxu0 0.0
    %1430 = vmatpush1.msra.mxu0 %v1322
    %1431 = vmatprep.subr.mxu0 0.0
    %1432 = vmatpush1.msra.mxu0 %v1319
    %1433 = vmatprep.subr.mxu0 0.0
    %1434 = vmatpush1.msra.mxu0 %v1316
    %1435 = vmatprep.subr.mxu0 0.0
    %1436 = vmatpush1.msra.mxu0 %v1313
    %1437 = vmatprep.subr.mxu0 0.0
    %1438 = vmatpush1.msra.mxu0 %v1310
    %1439 = vmatprep.subr.mxu0 0.0
    %1440 = vmatpush1.msra.mxu0 %v1307
    %1441 = vmatprep.subr.mxu0 0.0
    %1442 = vmatpush1.msra.mxu0 %v1304
    %1443 = vmatprep.subr.mxu0 0.0
    %1444 = vmatpush1.msra.mxu0 %v1301
    %1445 = vmatprep.subr.mxu0 0.0
    %1446 = vmatpush1.msra.mxu0 %v1298
    %1447 = vmatprep.subr.mxu0 0.0
    %1448 = vmatpush2.msra.mxu0 0.0
    %1449 = vmatprep.subr.mxu0 0.0
    %1450 = vmatpush2.msra.mxu0 0.0
    %1451 = vmatprep.subr.mxu0 0.0
    %1452 = vmatpush2.msra.mxu0 0.0
    %1453 = vmatprep.subr.mxu0 0.0
    %1454 = vmatpush2.msra.mxu0 0.0
    %1455 = vmatprep.subr.mxu0 0.0
    %1456 = vmatpush2.msra.mxu0 0.0
    %1457 = vmatprep.subr.mxu0 0.0
    %1458 = vmatpush2.msra.mxu0 0.0
    %1459 = vmatprep.subr.mxu0 0.0
    %1460 = vmatpush2.msra.mxu0 0.0
    %1461 = vmatprep.subr.mxu0 0.0
    %1462 = vmatpush2.msra.mxu0 0.0
    %1463 = vmatprep.subr.mxu0 0.0
    %1464 = vmatpush2.msra.mxu0 0.0
    %1465 = vmatprep.subr.mxu0 0.0
    %1466 = vmatpush2.msra.mxu0 0.0
    %1467 = vmatprep.subr.mxu0 0.0
    %1468 = vmatpush2.msra.mxu0 0.0
    %1469 = vmatprep.subr.mxu0 0.0
    %1470 = vmatpush2.msra.mxu0 0.0
    %1471 = vmatprep.subr.mxu0 0.0
    %1472 = vmatpush2.msra.mxu0 0.0
    %1473 = vmatprep.subr.mxu0 0.0
    %1474 = vmatpush2.msra.mxu0 0.0
    %1475 = vmatprep.subr.mxu0 0.0
    %1476 = vmatpush2.msra.mxu0 0.0
    %1477 = vmatprep.subr.mxu0 0.0
    %1478 = vmatpush2.msra.mxu0 0.0
    %1479 = vmatprep.mubr.f32.mxu0 0.0
    %1480 = vmatmul.mubr.f32.gmra.mxu0 %v1289
    %v1481 = vpop.f32.mrf.mxu0
    %v1482 = vadd.f32 0.0, %v1481
    %v1483 = vpop.f32.mrf.mxu0
    %1484 = vdwg.mxu0
    %v1485 = vadd.f32 %v1293, %v1411
    %v1486 = vxor.u32 %v1485, 2147483648
    %v1487 = vmul.f32 %v1486, 1.442695
    %v1488 = vpow.pop %v1487
    %v1489 = vadd.f32 %v1488, 1.0
    %v1490 = vrcp.pop %v1489
    %v1491 = vmul.f32 1.0, %v1490
    %v1492 = vadd.f32 %v1294, %v1413
    %v1493 = vxor.u32 %v1492, 2147483648
    %v1494 = vmul.f32 %v1493, 1.442695
    %v1495 = vpow.pop %v1494
    %v1496 = vadd.f32 %v1495, 1.0
    %v1497 = vrcp.pop %v1496
    %v1498 = vmul.f32 1.0, %v1497
    %v1499 = vld [vmem:[%s4] sm:$0x1]
    %v1501 = vlaneseq
    %v1502 = vshrl.u32 %v1501, 7
    %v1503 = vsub.s32 0, %v1502
    %v1504 = vrot.slane %v1499, %v1503
    %v1506 = vadd.f32 %v1482, %v1504
    %v1507 = vmul.f32 %v1491, %v1506
    %v1508 = vadd.f32 %v1295, %v1507
    %v1509 = vtanh.pop %v1508
    %v1510 = vsub.f32 1.0, %v1498
    %v1511 = vmul.f32 %v1510, %v1509
    %v1512 = vmul.f32 %v1498, %v1289
    %v1513 = vadd.f32 %v1511, %v1512
    %s1514 = scalar_lea.vmem [#allocation4], 32
    %1515 = vst [vmem:[%s1514] sm:$0xff] %v1513
    %s1516 = scalar_lea.vmem [#allocation3], 120
    %v1517 = vld [vmem:[%s1516] sm:$0xff]
    %v1518 = vld [vmem:[%s1516 + $0x8] sm:$0xff]
    %v1519 = vld [vmem:[%s1516 + $0x10] sm:$0xff]
    %v1520 = vld [vmem:[#allocation10] sm:$0xff]
    %v1521 = vld [vmem:[#allocation10 + $0x8] sm:$0xff]
    %v1522 = vld [vmem:[#allocation10 + $0x10] sm:$0xff]
    %v1523 = vld [vmem:[#allocation10 + $0x18] sm:$0xff]
    %v1524 = vld [vmem:[#allocation10 + $0x20] sm:$0xff]
    %v1525 = vld [vmem:[#allocation10 + $0x28] sm:$0xff]
    %v1526 = vld [vmem:[#allocation10 + $0x30] sm:$0xff]
    %v1527 = vld [vmem:[#allocation10 + $0x38] sm:$0xff]
    %v1528 = vld [vmem:[#allocation10 + $0x40] sm:$0xff]
    %v1529 = vld [vmem:[#allocation10 + $0x48] sm:$0xff]
    %v1530 = vld [vmem:[#allocation10 + $0x50] sm:$0xff]
    %v1531 = vld [vmem:[#allocation10 + $0x58] sm:$0xff]
    %v1532 = vld [vmem:[#allocation10 + $0x60] sm:$0xff]
    %v1533 = vld [vmem:[#allocation10 + $0x68] sm:$0xff]
    %v1534 = vld [vmem:[#allocation10 + $0x70] sm:$0xff]
    %v1535 = vld [vmem:[#allocation10 + $0x78] sm:$0xff]
    %v1536 = vld [vmem:[#allocation10 + $0x80] sm:$0xff]
    %v1537 = vld [vmem:[#allocation10 + $0x88] sm:$0xff]
    %v1538 = vld [vmem:[#allocation10 + $0x90] sm:$0xff]
    %v1539 = vld [vmem:[#allocation10 + $0x98] sm:$0xff]
    %v1540 = vld [vmem:[#allocation10 + $0xa0] sm:$0xff]
    %v1541 = vld [vmem:[#allocation10 + $0xa8] sm:$0xff]
    %v1542 = vld [vmem:[#allocation10 + $0xb0] sm:$0xff]
    %v1543 = vld [vmem:[#allocation10 + $0xb8] sm:$0xff]
    %v1544 = vld [vmem:[#allocation10 + $0xc0] sm:$0xff]
    %v1545 = vld [vmem:[#allocation10 + $0xc8] sm:$0xff]
    %v1546 = vld [vmem:[#allocation10 + $0xd0] sm:$0xff]
    %v1547 = vld [vmem:[#allocation10 + $0xd8] sm:$0xff]
    %v1548 = vld [vmem:[#allocation10 + $0xe0] sm:$0xff]
    %v1549 = vld [vmem:[#allocation10 + $0xe8] sm:$0xff]
    %v1550 = vld [vmem:[#allocation10 + $0xf0] sm:$0xff]
    %v1551 = vld [vmem:[#allocation10 + $0xf8] sm:$0xff]
    %v1552 = vld [vmem:[#allocation10 + $0x100] sm:$0xff]
    %v1553 = vld [vmem:[#allocation10 + $0x108] sm:$0xff]
    %v1554 = vld [vmem:[#allocation10 + $0x110] sm:$0xff]
    %v1555 = vld [vmem:[#allocation10 + $0x118] sm:$0xff]
    %v1556 = vld [vmem:[#allocation10 + $0x120] sm:$0xff]
    %v1557 = vld [vmem:[#allocation10 + $0x128] sm:$0xff]
    %v1558 = vld [vmem:[#allocation10 + $0x130] sm:$0xff]
    %v1559 = vld [vmem:[#allocation10 + $0x138] sm:$0xff]
    %v1560 = vld [vmem:[#allocation10 + $0x140] sm:$0xff]
    %v1561 = vld [vmem:[#allocation10 + $0x148] sm:$0xff]
    %v1562 = vld [vmem:[#allocation10 + $0x150] sm:$0xff]
    %v1563 = vld [vmem:[#allocation10 + $0x158] sm:$0xff]
    %v1564 = vld [vmem:[#allocation10 + $0x160] sm:$0xff]
    %v1565 = vld [vmem:[#allocation10 + $0x168] sm:$0xff]
    %v1566 = vld [vmem:[#allocation10 + $0x170] sm:$0xff]
    %v1567 = vld [vmem:[#allocation10 + $0x178] sm:$0xff]
    %1568 = vmatprep.subr.mxu0 %v1566
    %1569 = vmatpush1.msra.mxu0 %v1565
    %1570 = vmatprep.subr.mxu0 %v1563
    %1571 = vmatpush1.msra.mxu0 %v1562
    %1572 = vmatprep.subr.mxu0 %v1560
    %1573 = vmatpush1.msra.mxu0 %v1559
    %1574 = vmatprep.subr.mxu0 %v1557
    %1575 = vmatpush1.msra.mxu0 %v1556
    %1576 = vmatprep.subr.mxu0 %v1554
    %1577 = vmatpush1.msra.mxu0 %v1553
    %1578 = vmatprep.subr.mxu0 %v1551
    %1579 = vmatpush1.msra.mxu0 %v1550
    %1580 = vmatprep.subr.mxu0 %v1548
    %1581 = vmatpush1.msra.mxu0 %v1547
    %1582 = vmatprep.subr.mxu0 %v1545
    %1583 = vmatpush1.msra.mxu0 %v1544
    %1584 = vmatprep.subr.mxu0 %v1542
    %1585 = vmatpush1.msra.mxu0 %v1541
    %1586 = vmatprep.subr.mxu0 %v1539
    %1587 = vmatpush1.msra.mxu0 %v1538
    %1588 = vmatprep.subr.mxu0 %v1536
    %1589 = vmatpush1.msra.mxu0 %v1535
    %1590 = vmatprep.subr.mxu0 %v1533
    %1591 = vmatpush1.msra.mxu0 %v1532
    %1592 = vmatprep.subr.mxu0 %v1530
    %1593 = vmatpush1.msra.mxu0 %v1529
    %1594 = vmatprep.subr.mxu0 %v1527
    %1595 = vmatpush1.msra.mxu0 %v1526
    %1596 = vmatprep.subr.mxu0 %v1524
    %1597 = vmatpush1.msra.mxu0 %v1523
    %1598 = vmatprep.subr.mxu0 %v1521
    %1599 = vmatpush1.msra.mxu0 %v1520
    %1600 = vmatprep.subr.mxu0 0.0
    %1601 = vmatpush2.msra.mxu0 0.0
    %1602 = vmatprep.subr.mxu0 0.0
    %1603 = vmatpush2.msra.mxu0 0.0
    %1604 = vmatprep.subr.mxu0 0.0
    %1605 = vmatpush2.msra.mxu0 0.0
    %1606 = vmatprep.subr.mxu0 0.0
    %1607 = vmatpush2.msra.mxu0 0.0
    %1608 = vmatprep.subr.mxu0 0.0
    %1609 = vmatpush2.msra.mxu0 0.0
    %1610 = vmatprep.subr.mxu0 0.0
    %1611 = vmatpush2.msra.mxu0 0.0
    %1612 = vmatprep.subr.mxu0 0.0
    %1613 = vmatpush2.msra.mxu0 0.0
    %1614 = vmatprep.subr.mxu0 0.0
    %1615 = vmatpush2.msra.mxu0 0.0
    %1616 = vmatprep.subr.mxu0 0.0
    %1617 = vmatpush2.msra.mxu0 0.0
    %1618 = vmatprep.subr.mxu0 0.0
    %1619 = vmatpush2.msra.mxu0 0.0
    %1620 = vmatprep.subr.mxu0 0.0
    %1621 = vmatpush2.msra.mxu0 0.0
    %1622 = vmatprep.subr.mxu0 0.0
    %1623 = vmatpush2.msra.mxu0 0.0
    %1624 = vmatprep.subr.mxu0 0.0
    %1625 = vmatpush2.msra.mxu0 0.0
    %1626 = vmatprep.subr.mxu0 0.0
    %1627 = vmatpush2.msra.mxu0 0.0
    %1628 = vmatprep.subr.mxu0 0.0
    %1629 = vmatpush2.msra.mxu0 0.0
    %1630 = vmatprep.subr.mxu0 0.0
    %1631 = vmatpush2.msra.mxu0 0.0
    %1632 = vmatprep.mubr.f32.mxu0 0.0
    %1633 = vmatmul.mubr.f32.gmra.mxu0 %v1513
    %v1634 = vpop.f32.mrf.mxu0
    %v1635 = vadd.f32 0.0, %v1634
    %v1636 = vpop.f32.mrf.mxu0
    %v1637 = vadd.f32 0.0, %v1636
    %1638 = vdwg.mxu0
    %1639 = vmatprep.subr.mxu0 0.0
    %1640 = vmatpush1.msra.mxu0 %v1567
    %1641 = vmatprep.subr.mxu0 0.0
    %1642 = vmatpush1.msra.mxu0 %v1564
    %1643 = vmatprep.subr.mxu0 0.0
    %1644 = vmatpush1.msra.mxu0 %v1561
    %1645 = vmatprep.subr.mxu0 0.0
    %1646 = vmatpush1.msra.mxu0 %v1558
    %1647 = vmatprep.subr.mxu0 0.0
    %1648 = vmatpush1.msra.mxu0 %v1555
    %1649 = vmatprep.subr.mxu0 0.0
    %1650 = vmatpush1.msra.mxu0 %v1552
    %1651 = vmatprep.subr.mxu0 0.0
    %1652 = vmatpush1.msra.mxu0 %v1549
    %1653 = vmatprep.subr.mxu0 0.0
    %1654 = vmatpush1.msra.mxu0 %v1546
    %1655 = vmatprep.subr.mxu0 0.0
    %1656 = vmatpush1.msra.mxu0 %v1543
    %1657 = vmatprep.subr.mxu0 0.0
    %1658 = vmatpush1.msra.mxu0 %v1540
    %1659 = vmatprep.subr.mxu0 0.0
    %1660 = vmatpush1.msra.mxu0 %v1537
    %1661 = vmatprep.subr.mxu0 0.0
    %1662 = vmatpush1.msra.mxu0 %v1534
    %1663 = vmatprep.subr.mxu0 0.0
    %1664 = vmatpush1.msra.mxu0 %v1531
    %1665 = vmatprep.subr.mxu0 0.0
    %1666 = vmatpush1.msra.mxu0 %v1528
    %1667 = vmatprep.subr.mxu0 0.0
    %1668 = vmatpush1.msra.mxu0 %v1525
    %1669 = vmatprep.subr.mxu0 0.0
    %1670 = vmatpush1.msra.mxu0 %v1522
    %1671 = vmatprep.subr.mxu0 0.0
    %1672 = vmatpush2.msra.mxu0 0.0
    %1673 = vmatprep.subr.mxu0 0.0
    %1674 = vmatpush2.msra.mxu0 0.0
    %1675 = vmatprep.subr.mxu0 0.0
    %1676 = vmatpush2.msra.mxu0 0.0
    %1677 = vmatprep.subr.mxu0 0.0
    %1678 = vmatpush2.msra.mxu0 0.0
    %1679 = vmatprep.subr.mxu0 0.0
    %1680 = vmatpush2.msra.mxu0 0.0
    %1681 = vmatprep.subr.mxu0 0.0
    %1682 = vmatpush2.msra.mxu0 0.0
    %1683 = vmatprep.subr.mxu0 0.0
    %1684 = vmatpush2.msra.mxu0 0.0
    %1685 = vmatprep.subr.mxu0 0.0
    %1686 = vmatpush2.msra.mxu0 0.0
    %1687 = vmatprep.subr.mxu0 0.0
    %1688 = vmatpush2.msra.mxu0 0.0
    %1689 = vmatprep.subr.mxu0 0.0
    %1690 = vmatpush2.msra.mxu0 0.0
    %1691 = vmatprep.subr.mxu0 0.0
    %1692 = vmatpush2.msra.mxu0 0.0
    %1693 = vmatprep.subr.mxu0 0.0
    %1694 = vmatpush2.msra.mxu0 0.0
    %1695 = vmatprep.subr.mxu0 0.0
    %1696 = vmatpush2.msra.mxu0 0.0
    %1697 = vmatprep.subr.mxu0 0.0
    %1698 = vmatpush2.msra.mxu0 0.0
    %1699 = vmatprep.subr.mxu0 0.0
    %1700 = vmatpush2.msra.mxu0 0.0
    %1701 = vmatprep.subr.mxu0 0.0
    %1702 = vmatpush2.msra.mxu0 0.0
    %1703 = vmatprep.mubr.f32.mxu0 0.0
    %1704 = vmatmul.mubr.f32.gmra.mxu0 %v1513
    %v1705 = vpop.f32.mrf.mxu0
    %v1706 = vadd.f32 0.0, %v1705
    %v1707 = vpop.f32.mrf.mxu0
    %1708 = vdwg.mxu0
    %v1709 = vadd.f32 %v1517, %v1635
    %v1710 = vxor.u32 %v1709, 2147483648
    %v1711 = vmul.f32 %v1710, 1.442695
    %v1712 = vpow.pop %v1711
    %v1713 = vadd.f32 %v1712, 1.0
    %v1714 = vrcp.pop %v1713
    %v1715 = vmul.f32 1.0, %v1714
    %v1716 = vadd.f32 %v1518, %v1637
    %v1717 = vxor.u32 %v1716, 2147483648
    %v1718 = vmul.f32 %v1717, 1.442695
    %v1719 = vpow.pop %v1718
    %v1720 = vadd.f32 %v1719, 1.0
    %v1721 = vrcp.pop %v1720
    %v1722 = vmul.f32 1.0, %v1721
    %v1723 = vld [vmem:[%s4] sm:$0x1]
    %v1725 = vlaneseq
    %v1726 = vshrl.u32 %v1725, 7
    %v1727 = vsub.s32 0, %v1726
    %v1728 = vrot.slane %v1723, %v1727
    %v1730 = vadd.f32 %v1706, %v1728
    %v1731 = vmul.f32 %v1715, %v1730
    %v1732 = vadd.f32 %v1519, %v1731
    %v1733 = vtanh.pop %v1732
    %v1734 = vsub.f32 1.0, %v1722
    %v1735 = vmul.f32 %v1734, %v1733
    %v1736 = vmul.f32 %v1722, %v1513
    %v1737 = vadd.f32 %v1735, %v1736
    %s1738 = scalar_lea.vmem [#allocation4], 40
    %1739 = vst [vmem:[%s1738] sm:$0xff] %v1737
    %s1740 = scalar_lea.vmem [#allocation3], 144
    %v1741 = vld [vmem:[%s1740] sm:$0xff]
    %v1742 = vld [vmem:[%s1740 + $0x8] sm:$0xff]
    %v1743 = vld [vmem:[%s1740 + $0x10] sm:$0xff]
    %v1744 = vld [vmem:[#allocation10] sm:$0xff]
    %v1745 = vld [vmem:[#allocation10 + $0x8] sm:$0xff]
    %v1746 = vld [vmem:[#allocation10 + $0x10] sm:$0xff]
    %v1747 = vld [vmem:[#allocation10 + $0x18] sm:$0xff]
    %v1748 = vld [vmem:[#allocation10 + $0x20] sm:$0xff]
    %v1749 = vld [vmem:[#allocation10 + $0x28] sm:$0xff]
    %v1750 = vld [vmem:[#allocation10 + $0x30] sm:$0xff]
    %v1751 = vld [vmem:[#allocation10 + $0x38] sm:$0xff]
    %v1752 = vld [vmem:[#allocation10 + $0x40] sm:$0xff]
    %v1753 = vld [vmem:[#allocation10 + $0x48] sm:$0xff]
    %v1754 = vld [vmem:[#allocation10 + $0x50] sm:$0xff]
    %v1755 = vld [vmem:[#allocation10 + $0x58] sm:$0xff]
    %v1756 = vld [vmem:[#allocation10 + $0x60] sm:$0xff]
    %v1757 = vld [vmem:[#allocation10 + $0x68] sm:$0xff]
    %v1758 = vld [vmem:[#allocation10 + $0x70] sm:$0xff]
    %v1759 = vld [vmem:[#allocation10 + $0x78] sm:$0xff]
    %v1760 = vld [vmem:[#allocation10 + $0x80] sm:$0xff]
    %v1761 = vld [vmem:[#allocation10 + $0x88] sm:$0xff]
    %v1762 = vld [vmem:[#allocation10 + $0x90] sm:$0xff]
    %v1763 = vld [vmem:[#allocation10 + $0x98] sm:$0xff]
    %v1764 = vld [vmem:[#allocation10 + $0xa0] sm:$0xff]
    %v1765 = vld [vmem:[#allocation10 + $0xa8] sm:$0xff]
    %v1766 = vld [vmem:[#allocation10 + $0xb0] sm:$0xff]
    %v1767 = vld [vmem:[#allocation10 + $0xb8] sm:$0xff]
    %v1768 = vld [vmem:[#allocation10 + $0xc0] sm:$0xff]
    %v1769 = vld [vmem:[#allocation10 + $0xc8] sm:$0xff]
    %v1770 = vld [vmem:[#allocation10 + $0xd0] sm:$0xff]
    %v1771 = vld [vmem:[#allocation10 + $0xd8] sm:$0xff]
    %v1772 = vld [vmem:[#allocation10 + $0xe0] sm:$0xff]
    %v1773 = vld [vmem:[#allocation10 + $0xe8] sm:$0xff]
    %v1774 = vld [vmem:[#allocation10 + $0xf0] sm:$0xff]
    %v1775 = vld [vmem:[#allocation10 + $0xf8] sm:$0xff]
    %v1776 = vld [vmem:[#allocation10 + $0x100] sm:$0xff]
    %v1777 = vld [vmem:[#allocation10 + $0x108] sm:$0xff]
    %v1778 = vld [vmem:[#allocation10 + $0x110] sm:$0xff]
    %v1779 = vld [vmem:[#allocation10 + $0x118] sm:$0xff]
    %v1780 = vld [vmem:[#allocation10 + $0x120] sm:$0xff]
    %v1781 = vld [vmem:[#allocation10 + $0x128] sm:$0xff]
    %v1782 = vld [vmem:[#allocation10 + $0x130] sm:$0xff]
    %v1783 = vld [vmem:[#allocation10 + $0x138] sm:$0xff]
    %v1784 = vld [vmem:[#allocation10 + $0x140] sm:$0xff]
    %v1785 = vld [vmem:[#allocation10 + $0x148] sm:$0xff]
    %v1786 = vld [vmem:[#allocation10 + $0x150] sm:$0xff]
    %v1787 = vld [vmem:[#allocation10 + $0x158] sm:$0xff]
    %v1788 = vld [vmem:[#allocation10 + $0x160] sm:$0xff]
    %v1789 = vld [vmem:[#allocation10 + $0x168] sm:$0xff]
    %v1790 = vld [vmem:[#allocation10 + $0x170] sm:$0xff]
    %v1791 = vld [vmem:[#allocation10 + $0x178] sm:$0xff]
    %1792 = vmatprep.subr.mxu0 %v1790
    %1793 = vmatpush1.msra.mxu0 %v1789
    %1794 = vmatprep.subr.mxu0 %v1787
    %1795 = vmatpush1.msra.mxu0 %v1786
    %1796 = vmatprep.subr.mxu0 %v1784
    %1797 = vmatpush1.msra.mxu0 %v1783
    %1798 = vmatprep.subr.mxu0 %v1781
    %1799 = vmatpush1.msra.mxu0 %v1780
    %1800 = vmatprep.subr.mxu0 %v1778
    %1801 = vmatpush1.msra.mxu0 %v1777
    %1802 = vmatprep.subr.mxu0 %v1775
    %1803 = vmatpush1.msra.mxu0 %v1774
    %1804 = vmatprep.subr.mxu0 %v1772
    %1805 = vmatpush1.msra.mxu0 %v1771
    %1806 = vmatprep.subr.mxu0 %v1769
    %1807 = vmatpush1.msra.mxu0 %v1768
    %1808 = vmatprep.subr.mxu0 %v1766
    %1809 = vmatpush1.msra.mxu0 %v1765
    %1810 = vmatprep.subr.mxu0 %v1763
    %1811 = vmatpush1.msra.mxu0 %v1762
    %1812 = vmatprep.subr.mxu0 %v1760
    %1813 = vmatpush1.msra.mxu0 %v1759
    %1814 = vmatprep.subr.mxu0 %v1757
    %1815 = vmatpush1.msra.mxu0 %v1756
    %1816 = vmatprep.subr.mxu0 %v1754
    %1817 = vmatpush1.msra.mxu0 %v1753
    %1818 = vmatprep.subr.mxu0 %v1751
    %1819 = vmatpush1.msra.mxu0 %v1750
    %1820 = vmatprep.subr.mxu0 %v1748
    %1821 = vmatpush1.msra.mxu0 %v1747
    %1822 = vmatprep.subr.mxu0 %v1745
    %1823 = vmatpush1.msra.mxu0 %v1744
    %1824 = vmatprep.subr.mxu0 0.0
    %1825 = vmatpush2.msra.mxu0 0.0
    %1826 = vmatprep.subr.mxu0 0.0
    %1827 = vmatpush2.msra.mxu0 0.0
    %1828 = vmatprep.subr.mxu0 0.0
    %1829 = vmatpush2.msra.mxu0 0.0
    %1830 = vmatprep.subr.mxu0 0.0
    %1831 = vmatpush2.msra.mxu0 0.0
    %1832 = vmatprep.subr.mxu0 0.0
    %1833 = vmatpush2.msra.mxu0 0.0
    %1834 = vmatprep.subr.mxu0 0.0
    %1835 = vmatpush2.msra.mxu0 0.0
    %1836 = vmatprep.subr.mxu0 0.0
    %1837 = vmatpush2.msra.mxu0 0.0
    %1838 = vmatprep.subr.mxu0 0.0
    %1839 = vmatpush2.msra.mxu0 0.0
    %1840 = vmatprep.subr.mxu0 0.0
    %1841 = vmatpush2.msra.mxu0 0.0
    %1842 = vmatprep.subr.mxu0 0.0
    %1843 = vmatpush2.msra.mxu0 0.0
    %1844 = vmatprep.subr.mxu0 0.0
    %1845 = vmatpush2.msra.mxu0 0.0
    %1846 = vmatprep.subr.mxu0 0.0
    %1847 = vmatpush2.msra.mxu0 0.0
    %1848 = vmatprep.subr.mxu0 0.0
    %1849 = vmatpush2.msra.mxu0 0.0
    %1850 = vmatprep.subr.mxu0 0.0
    %1851 = vmatpush2.msra.mxu0 0.0
    %1852 = vmatprep.subr.mxu0 0.0
    %1853 = vmatpush2.msra.mxu0 0.0
    %1854 = vmatprep.subr.mxu0 0.0
    %1855 = vmatpush2.msra.mxu0 0.0
    %1856 = vmatprep.mubr.f32.mxu0 0.0
    %1857 = vmatmul.mubr.f32.gmra.mxu0 %v1737
    %v1858 = vpop.f32.mrf.mxu0
    %v1859 = vadd.f32 0.0, %v1858
    %v1860 = vpop.f32.mrf.mxu0
    %v1861 = vadd.f32 0.0, %v1860
    %1862 = vdwg.mxu0
    %1863 = vmatprep.subr.mxu0 0.0
    %1864 = vmatpush1.msra.mxu0 %v1791
    %1865 = vmatprep.subr.mxu0 0.0
    %1866 = vmatpush1.msra.mxu0 %v1788
    %1867 = vmatprep.subr.mxu0 0.0
    %1868 = vmatpush1.msra.mxu0 %v1785
    %1869 = vmatprep.subr.mxu0 0.0
    %1870 = vmatpush1.msra.mxu0 %v1782
    %1871 = vmatprep.subr.mxu0 0.0
    %1872 = vmatpush1.msra.mxu0 %v1779
    %1873 = vmatprep.subr.mxu0 0.0
    %1874 = vmatpush1.msra.mxu0 %v1776
    %1875 = vmatprep.subr.mxu0 0.0
    %1876 = vmatpush1.msra.mxu0 %v1773
    %1877 = vmatprep.subr.mxu0 0.0
    %1878 = vmatpush1.msra.mxu0 %v1770
    %1879 = vmatprep.subr.mxu0 0.0
    %1880 = vmatpush1.msra.mxu0 %v1767
    %1881 = vmatprep.subr.mxu0 0.0
    %1882 = vmatpush1.msra.mxu0 %v1764
    %1883 = vmatprep.subr.mxu0 0.0
    %1884 = vmatpush1.msra.mxu0 %v1761
    %1885 = vmatprep.subr.mxu0 0.0
    %1886 = vmatpush1.msra.mxu0 %v1758
    %1887 = vmatprep.subr.mxu0 0.0
    %1888 = vmatpush1.msra.mxu0 %v1755
    %1889 = vmatprep.subr.mxu0 0.0
    %1890 = vmatpush1.msra.mxu0 %v1752
    %1891 = vmatprep.subr.mxu0 0.0
    %1892 = vmatpush1.msra.mxu0 %v1749
    %1893 = vmatprep.subr.mxu0 0.0
    %1894 = vmatpush1.msra.mxu0 %v1746
    %1895 = vmatprep.subr.mxu0 0.0
    %1896 = vmatpush2.msra.mxu0 0.0
    %1897 = vmatprep.subr.mxu0 0.0
    %1898 = vmatpush2.msra.mxu0 0.0
    %1899 = vmatprep.subr.mxu0 0.0
    %1900 = vmatpush2.msra.mxu0 0.0
    %1901 = vmatprep.subr.mxu0 0.0
    %1902 = vmatpush2.msra.mxu0 0.0
    %1903 = vmatprep.subr.mxu0 0.0
    %1904 = vmatpush2.msra.mxu0 0.0
    %1905 = vmatprep.subr.mxu0 0.0
    %1906 = vmatpush2.msra.mxu0 0.0
    %1907 = vmatprep.subr.mxu0 0.0
    %1908 = vmatpush2.msra.mxu0 0.0
    %1909 = vmatprep.subr.mxu0 0.0
    %1910 = vmatpush2.msra.mxu0 0.0
    %1911 = vmatprep.subr.mxu0 0.0
    %1912 = vmatpush2.msra.mxu0 0.0
    %1913 = vmatprep.subr.mxu0 0.0
    %1914 = vmatpush2.msra.mxu0 0.0
    %1915 = vmatprep.subr.mxu0 0.0
    %1916 = vmatpush2.msra.mxu0 0.0
    %1917 = vmatprep.subr.mxu0 0.0
    %1918 = vmatpush2.msra.mxu0 0.0
    %1919 = vmatprep.subr.mxu0 0.0
    %1920 = vmatpush2.msra.mxu0 0.0
    %1921 = vmatprep.subr.mxu0 0.0
    %1922 = vmatpush2.msra.mxu0 0.0
    %1923 = vmatprep.subr.mxu0 0.0
    %1924 = vmatpush2.msra.mxu0 0.0
    %1925 = vmatprep.subr.mxu0 0.0
    %1926 = vmatpush2.msra.mxu0 0.0
    %1927 = vmatprep.mubr.f32.mxu0 0.0
    %1928 = vmatmul.mubr.f32.gmra.mxu0 %v1737
    %v1929 = vpop.f32.mrf.mxu0
    %v1930 = vadd.f32 0.0, %v1929
    %v1931 = vpop.f32.mrf.mxu0
    %1932 = vdwg.mxu0
    %v1933 = vadd.f32 %v1741, %v1859
    %v1934 = vxor.u32 %v1933, 2147483648
    %v1935 = vmul.f32 %v1934, 1.442695
    %v1936 = vpow.pop %v1935
    %v1937 = vadd.f32 %v1936, 1.0
    %v1938 = vrcp.pop %v1937
    %v1939 = vmul.f32 1.0, %v1938
    %v1940 = vadd.f32 %v1742, %v1861
    %v1941 = vxor.u32 %v1940, 2147483648
    %v1942 = vmul.f32 %v1941, 1.442695
    %v1943 = vpow.pop %v1942
    %v1944 = vadd.f32 %v1943, 1.0
    %v1945 = vrcp.pop %v1944
    %v1946 = vmul.f32 1.0, %v1945
    %v1947 = vld [vmem:[%s4] sm:$0x1]
    %v1949 = vlaneseq
    %v1950 = vshrl.u32 %v1949, 7
    %v1951 = vsub.s32 0, %v1950
    %v1952 = vrot.slane %v1947, %v1951
    %v1954 = vadd.f32 %v1930, %v1952
    %v1955 = vmul.f32 %v1939, %v1954
    %v1956 = vadd.f32 %v1743, %v1955
    %v1957 = vtanh.pop %v1956
    %v1958 = vsub.f32 1.0, %v1946
    %v1959 = vmul.f32 %v1958, %v1957
    %v1960 = vmul.f32 %v1946, %v1737
    %v1961 = vadd.f32 %v1959, %v1960
    %s1962 = scalar_lea.vmem [#allocation4], 48
    %1963 = vst [vmem:[%s1962] sm:$0xff] %v1961
    %s1964 = scalar_lea.vmem [#allocation3], 168
    %v1965 = vld [vmem:[%s1964] sm:$0xff]
    %v1966 = vld [vmem:[%s1964 + $0x8] sm:$0xff]
    %v1967 = vld [vmem:[%s1964 + $0x10] sm:$0xff]
    %v1968 = vld [vmem:[#allocation10] sm:$0xff]
    %v1969 = vld [vmem:[#allocation10 + $0x8] sm:$0xff]
    %v1970 = vld [vmem:[#allocation10 + $0x10] sm:$0xff]
    %v1971 = vld [vmem:[#allocation10 + $0x18] sm:$0xff]
    %v1972 = vld [vmem:[#allocation10 + $0x20] sm:$0xff]
    %v1973 = vld [vmem:[#allocation10 + $0x28] sm:$0xff]
    %v1974 = vld [vmem:[#allocation10 + $0x30] sm:$0xff]
    %v1975 = vld [vmem:[#allocation10 + $0x38] sm:$0xff]
    %v1976 = vld [vmem:[#allocation10 + $0x40] sm:$0xff]
    %v1977 = vld [vmem:[#allocation10 + $0x48] sm:$0xff]
    %v1978 = vld [vmem:[#allocation10 + $0x50] sm:$0xff]
    %v1979 = vld [vmem:[#allocation10 + $0x58] sm:$0xff]
    %v1980 = vld [vmem:[#allocation10 + $0x60] sm:$0xff]
    %v1981 = vld [vmem:[#allocation10 + $0x68] sm:$0xff]
    %v1982 = vld [vmem:[#allocation10 + $0x70] sm:$0xff]
    %v1983 = vld [vmem:[#allocation10 + $0x78] sm:$0xff]
    %v1984 = vld [vmem:[#allocation10 + $0x80] sm:$0xff]
    %v1985 = vld [vmem:[#allocation10 + $0x88] sm:$0xff]
    %v1986 = vld [vmem:[#allocation10 + $0x90] sm:$0xff]
    %v1987 = vld [vmem:[#allocation10 + $0x98] sm:$0xff]
    %v1988 = vld [vmem:[#allocation10 + $0xa0] sm:$0xff]
    %v1989 = vld [vmem:[#allocation10 + $0xa8] sm:$0xff]
    %v1990 = vld [vmem:[#allocation10 + $0xb0] sm:$0xff]
    %v1991 = vld [vmem:[#allocation10 + $0xb8] sm:$0xff]
    %v1992 = vld [vmem:[#allocation10 + $0xc0] sm:$0xff]
    %v1993 = vld [vmem:[#allocation10 + $0xc8] sm:$0xff]
    %v1994 = vld [vmem:[#allocation10 + $0xd0] sm:$0xff]
    %v1995 = vld [vmem:[#allocation10 + $0xd8] sm:$0xff]
    %v1996 = vld [vmem:[#allocation10 + $0xe0] sm:$0xff]
    %v1997 = vld [vmem:[#allocation10 + $0xe8] sm:$0xff]
    %v1998 = vld [vmem:[#allocation10 + $0xf0] sm:$0xff]
    %v1999 = vld [vmem:[#allocation10 + $0xf8] sm:$0xff]
    %v2000 = vld [vmem:[#allocation10 + $0x100] sm:$0xff]
    %v2001 = vld [vmem:[#allocation10 + $0x108] sm:$0xff]
    %v2002 = vld [vmem:[#allocation10 + $0x110] sm:$0xff]
    %v2003 = vld [vmem:[#allocation10 + $0x118] sm:$0xff]
    %v2004 = vld [vmem:[#allocation10 + $0x120] sm:$0xff]
    %v2005 = vld [vmem:[#allocation10 + $0x128] sm:$0xff]
    %v2006 = vld [vmem:[#allocation10 + $0x130] sm:$0xff]
    %v2007 = vld [vmem:[#allocation10 + $0x138] sm:$0xff]
    %v2008 = vld [vmem:[#allocation10 + $0x140] sm:$0xff]
    %v2009 = vld [vmem:[#allocation10 + $0x148] sm:$0xff]
    %v2010 = vld [vmem:[#allocation10 + $0x150] sm:$0xff]
    %v2011 = vld [vmem:[#allocation10 + $0x158] sm:$0xff]
    %v2012 = vld [vmem:[#allocation10 + $0x160] sm:$0xff]
    %v2013 = vld [vmem:[#allocation10 + $0x168] sm:$0xff]
    %v2014 = vld [vmem:[#allocation10 + $0x170] sm:$0xff]
    %v2015 = vld [vmem:[#allocation10 + $0x178] sm:$0xff]
    %2016 = vmatprep.subr.mxu0 %v2014
    %2017 = vmatpush1.msra.mxu0 %v2013
    %2018 = vmatprep.subr.mxu0 %v2011
    %2019 = vmatpush1.msra.mxu0 %v2010
    %2020 = vmatprep.subr.mxu0 %v2008
    %2021 = vmatpush1.msra.mxu0 %v2007
    %2022 = vmatprep.subr.mxu0 %v2005
    %2023 = vmatpush1.msra.mxu0 %v2004
    %2024 = vmatprep.subr.mxu0 %v2002
    %2025 = vmatpush1.msra.mxu0 %v2001
    %2026 = vmatprep.subr.mxu0 %v1999
    %2027 = vmatpush1.msra.mxu0 %v1998
    %2028 = vmatprep.subr.mxu0 %v1996
    %2029 = vmatpush1.msra.mxu0 %v1995
    %2030 = vmatprep.subr.mxu0 %v1993
    %2031 = vmatpush1.msra.mxu0 %v1992
    %2032 = vmatprep.subr.mxu0 %v1990
    %2033 = vmatpush1.msra.mxu0 %v1989
    %2034 = vmatprep.subr.mxu0 %v1987
    %2035 = vmatpush1.msra.mxu0 %v1986
    %2036 = vmatprep.subr.mxu0 %v1984
    %2037 = vmatpush1.msra.mxu0 %v1983
    %2038 = vmatprep.subr.mxu0 %v1981
    %2039 = vmatpush1.msra.mxu0 %v1980
    %2040 = vmatprep.subr.mxu0 %v1978
    %2041 = vmatpush1.msra.mxu0 %v1977
    %2042 = vmatprep.subr.mxu0 %v1975
    %2043 = vmatpush1.msra.mxu0 %v1974
    %2044 = vmatprep.subr.mxu0 %v1972
    %2045 = vmatpush1.msra.mxu0 %v1971
    %2046 = vmatprep.subr.mxu0 %v1969
    %2047 = vmatpush1.msra.mxu0 %v1968
    %2048 = vmatprep.subr.mxu0 0.0
    %2049 = vmatpush2.msra.mxu0 0.0
    %2050 = vmatprep.subr.mxu0 0.0
    %2051 = vmatpush2.msra.mxu0 0.0
    %2052 = vmatprep.subr.mxu0 0.0
    %2053 = vmatpush2.msra.mxu0 0.0
    %2054 = vmatprep.subr.mxu0 0.0
    %2055 = vmatpush2.msra.mxu0 0.0
    %2056 = vmatprep.subr.mxu0 0.0
    %2057 = vmatpush2.msra.mxu0 0.0
    %2058 = vmatprep.subr.mxu0 0.0
    %2059 = vmatpush2.msra.mxu0 0.0
    %2060 = vmatprep.subr.mxu0 0.0
    %2061 = vmatpush2.msra.mxu0 0.0
    %2062 = vmatprep.subr.mxu0 0.0
    %2063 = vmatpush2.msra.mxu0 0.0
    %2064 = vmatprep.subr.mxu0 0.0
    %2065 = vmatpush2.msra.mxu0 0.0
    %2066 = vmatprep.subr.mxu0 0.0
    %2067 = vmatpush2.msra.mxu0 0.0
    %2068 = vmatprep.subr.mxu0 0.0
    %2069 = vmatpush2.msra.mxu0 0.0
    %2070 = vmatprep.subr.mxu0 0.0
    %2071 = vmatpush2.msra.mxu0 0.0
    %2072 = vmatprep.subr.mxu0 0.0
    %2073 = vmatpush2.msra.mxu0 0.0
    %2074 = vmatprep.subr.mxu0 0.0
    %2075 = vmatpush2.msra.mxu0 0.0
    %2076 = vmatprep.subr.mxu0 0.0
    %2077 = vmatpush2.msra.mxu0 0.0
    %2078 = vmatprep.subr.mxu0 0.0
    %2079 = vmatpush2.msra.mxu0 0.0
    %2080 = vmatprep.mubr.f32.mxu0 0.0
    %2081 = vmatmul.mubr.f32.gmra.mxu0 %v1961
    %v2082 = vpop.f32.mrf.mxu0
    %v2083 = vadd.f32 0.0, %v2082
    %v2084 = vpop.f32.mrf.mxu0
    %v2085 = vadd.f32 0.0, %v2084
    %2086 = vdwg.mxu0
    %2087 = vmatprep.subr.mxu0 0.0
    %2088 = vmatpush1.msra.mxu0 %v2015
    %2089 = vmatprep.subr.mxu0 0.0
    %2090 = vmatpush1.msra.mxu0 %v2012
    %2091 = vmatprep.subr.mxu0 0.0
    %2092 = vmatpush1.msra.mxu0 %v2009
    %2093 = vmatprep.subr.mxu0 0.0
    %2094 = vmatpush1.msra.mxu0 %v2006
    %2095 = vmatprep.subr.mxu0 0.0
    %2096 = vmatpush1.msra.mxu0 %v2003
    %2097 = vmatprep.subr.mxu0 0.0
    %2098 = vmatpush1.msra.mxu0 %v2000
    %2099 = vmatprep.subr.mxu0 0.0
    %2100 = vmatpush1.msra.mxu0 %v1997
    %2101 = vmatprep.subr.mxu0 0.0
    %2102 = vmatpush1.msra.mxu0 %v1994
    %2103 = vmatprep.subr.mxu0 0.0
    %2104 = vmatpush1.msra.mxu0 %v1991
    %2105 = vmatprep.subr.mxu0 0.0
    %2106 = vmatpush1.msra.mxu0 %v1988
    %2107 = vmatprep.subr.mxu0 0.0
    %2108 = vmatpush1.msra.mxu0 %v1985
    %2109 = vmatprep.subr.mxu0 0.0
    %2110 = vmatpush1.msra.mxu0 %v1982
    %2111 = vmatprep.subr.mxu0 0.0
    %2112 = vmatpush1.msra.mxu0 %v1979
    %2113 = vmatprep.subr.mxu0 0.0
    %2114 = vmatpush1.msra.mxu0 %v1976
    %2115 = vmatprep.subr.mxu0 0.0
    %2116 = vmatpush1.msra.mxu0 %v1973
    %2117 = vmatprep.subr.mxu0 0.0
    %2118 = vmatpush1.msra.mxu0 %v1970
    %2119 = vmatprep.subr.mxu0 0.0
    %2120 = vmatpush2.msra.mxu0 0.0
    %2121 = vmatprep.subr.mxu0 0.0
    %2122 = vmatpush2.msra.mxu0 0.0
    %2123 = vmatprep.subr.mxu0 0.0
    %2124 = vmatpush2.msra.mxu0 0.0
    %2125 = vmatprep.subr.mxu0 0.0
    %2126 = vmatpush2.msra.mxu0 0.0
    %2127 = vmatprep.subr.mxu0 0.0
    %2128 = vmatpush2.msra.mxu0 0.0
    %2129 = vmatprep.subr.mxu0 0.0
    %2130 = vmatpush2.msra.mxu0 0.0
    %2131 = vmatprep.subr.mxu0 0.0
    %2132 = vmatpush2.msra.mxu0 0.0
    %2133 = vmatprep.subr.mxu0 0.0
    %2134 = vmatpush2.msra.mxu0 0.0
    %2135 = vmatprep.subr.mxu0 0.0
    %2136 = vmatpush2.msra.mxu0 0.0
    %2137 = vmatprep.subr.mxu0 0.0
    %2138 = vmatpush2.msra.mxu0 0.0
    %2139 = vmatprep.subr.mxu0 0.0
    %2140 = vmatpush2.msra.mxu0 0.0
    %2141 = vmatprep.subr.mxu0 0.0
    %2142 = vmatpush2.msra.mxu0 0.0
    %2143 = vmatprep.subr.mxu0 0.0
    %2144 = vmatpush2.msra.mxu0 0.0
    %2145 = vmatprep.subr.mxu0 0.0
    %2146 = vmatpush2.msra.mxu0 0.0
    %2147 = vmatprep.subr.mxu0 0.0
    %2148 = vmatpush2.msra.mxu0 0.0
    %2149 = vmatprep.subr.mxu0 0.0
    %2150 = vmatpush2.msra.mxu0 0.0
    %2151 = vmatprep.mubr.f32.mxu0 0.0
    %2152 = vmatmul.mubr.f32.gmra.mxu0 %v1961
    %v2153 = vpop.f32.mrf.mxu0
    %v2154 = vadd.f32 0.0, %v2153
    %v2155 = vpop.f32.mrf.mxu0
    %2156 = vdwg.mxu0
    %v2157 = vadd.f32 %v1965, %v2083
    %v2158 = vxor.u32 %v2157, 2147483648
    %v2159 = vmul.f32 %v2158, 1.442695
    %v2160 = vpow.pop %v2159
    %v2161 = vadd.f32 %v2160, 1.0
    %v2162 = vrcp.pop %v2161
    %v2163 = vmul.f32 1.0, %v2162
    %v2164 = vadd.f32 %v1966, %v2085
    %v2165 = vxor.u32 %v2164, 2147483648
    %v2166 = vmul.f32 %v2165, 1.442695
    %v2167 = vpow.pop %v2166
    %v2168 = vadd.f32 %v2167, 1.0
    %v2169 = vrcp.pop %v2168
    %v2170 = vmul.f32 1.0, %v2169
    %v2171 = vld [vmem:[%s4] sm:$0x1]
    %v2173 = vlaneseq
    %v2174 = vshrl.u32 %v2173, 7
    %v2175 = vsub.s32 0, %v2174
    %v2176 = vrot.slane %v2171, %v2175
    %v2178 = vadd.f32 %v2154, %v2176
    %v2179 = vmul.f32 %v2163, %v2178
    %v2180 = vadd.f32 %v1967, %v2179
    %v2181 = vtanh.pop %v2180
    %v2182 = vsub.f32 1.0, %v2170
    %v2183 = vmul.f32 %v2182, %v2181
    %v2184 = vmul.f32 %v2170, %v1961
    %v2185 = vadd.f32 %v2183, %v2184
    %s2186 = scalar_lea.vmem [#allocation4], 56
    %2187 = vst [vmem:[%s2186] sm:$0xff] %v2185
    %2188 = vst [vmem:[#allocation2] sm:$0xff] %v2185
    %v2189 = vld [vmem:[#allocation4] sm:$0xff]
    %v2190 = vld [vmem:[#allocation4 + $0x8] sm:$0xff]
    %v2191 = vld [vmem:[#allocation4 + $0x10] sm:$0xff]
    %v2192 = vld [vmem:[#allocation4 + $0x18] sm:$0xff]
    %v2193 = vld [vmem:[#allocation4 + $0x20] sm:$0xff]
    %v2194 = vld [vmem:[#allocation4 + $0x28] sm:$0xff]
    %v2195 = vld [vmem:[#allocation4 + $0x30] sm:$0xff]
    %v2196 = vld [vmem:[#allocation4 + $0x38] sm:$0xff]
    %s2197 = scalar_lea.vmem [#allocation8], 384
    %v2198 = vld [vmem:[%s2197] sm:$0xff]
    %v2199 = vld [vmem:[%s2197 + $0x8] sm:$0xff]
    %v2200 = vld [vmem:[%s2197 + $0x10] sm:$0xff]
    %v2201 = vld [vmem:[%s2197 + $0x18] sm:$0xff]
    %v2202 = vld [vmem:[%s2197 + $0x20] sm:$0xff]
    %v2203 = vld [vmem:[%s2197 + $0x28] sm:$0xff]
    %v2204 = vld [vmem:[%s2197 + $0x30] sm:$0xff]
    %v2205 = vld [vmem:[%s2197 + $0x38] sm:$0xff]
    %v2206 = vld [vmem:[%s2197 + $0x40] sm:$0xff]
    %v2207 = vld [vmem:[%s2197 + $0x48] sm:$0xff]
    %v2208 = vld [vmem:[%s2197 + $0x50] sm:$0xff]
    %v2209 = vld [vmem:[%s2197 + $0x58] sm:$0xff]
    %v2210 = vld [vmem:[%s2197 + $0x60] sm:$0xff]
    %v2211 = vld [vmem:[%s2197 + $0x68] sm:$0xff]
    %v2212 = vld [vmem:[%s2197 + $0x70] sm:$0xff]
    %v2213 = vld [vmem:[%s2197 + $0x78] sm:$0xff]
    %v2214 = vld [vmem:[%s2197 + $0x80] sm:$0xff]
    %v2215 = vld [vmem:[%s2197 + $0x88] sm:$0xff]
    %v2216 = vld [vmem:[%s2197 + $0x90] sm:$0xff]
    %v2217 = vld [vmem:[%s2197 + $0x98] sm:$0xff]
    %v2218 = vld [vmem:[%s2197 + $0xa0] sm:$0xff]
    %v2219 = vld [vmem:[%s2197 + $0xa8] sm:$0xff]
    %v2220 = vld [vmem:[%s2197 + $0xb0] sm:$0xff]
    %v2221 = vld [vmem:[%s2197 + $0xb8] sm:$0xff]
    %v2222 = vld [vmem:[%s2197 + $0xc0] sm:$0xff]
    %v2223 = vld [vmem:[%s2197 + $0xc8] sm:$0xff]
    %v2224 = vld [vmem:[%s2197 + $0xd0] sm:$0xff]
    %v2225 = vld [vmem:[%s2197 + $0xd8] sm:$0xff]
    %v2226 = vld [vmem:[%s2197 + $0xe0] sm:$0xff]
    %v2227 = vld [vmem:[%s2197 + $0xe8] sm:$0xff]
    %v2228 = vld [vmem:[%s2197 + $0xf0] sm:$0xff]
    %v2229 = vld [vmem:[%s2197 + $0xf8] sm:$0xff]
    %v2230 = vld [vmem:[%s2197 + $0x100] sm:$0xff]
    %v2231 = vld [vmem:[%s2197 + $0x108] sm:$0xff]
    %v2232 = vld [vmem:[%s2197 + $0x110] sm:$0xff]
    %v2233 = vld [vmem:[%s2197 + $0x118] sm:$0xff]
    %v2234 = vld [vmem:[%s2197 + $0x120] sm:$0xff]
    %v2235 = vld [vmem:[%s2197 + $0x128] sm:$0xff]
    %v2236 = vld [vmem:[%s2197 + $0x130] sm:$0xff]
    %v2237 = vld [vmem:[%s2197 + $0x138] sm:$0xff]
    %v2238 = vld [vmem:[%s2197 + $0x140] sm:$0xff]
    %v2239 = vld [vmem:[%s2197 + $0x148] sm:$0xff]
    %v2240 = vld [vmem:[%s2197 + $0x150] sm:$0xff]
    %v2241 = vld [vmem:[%s2197 + $0x158] sm:$0xff]
    %v2242 = vld [vmem:[%s2197 + $0x160] sm:$0xff]
    %v2243 = vld [vmem:[%s2197 + $0x168] sm:$0xff]
    %v2244 = vld [vmem:[%s2197 + $0x170] sm:$0xff]
    %v2245 = vld [vmem:[%s2197 + $0x178] sm:$0xff]
    %s2246 = scalar_lea.vmem [#allocation11], 3
    %v2247 = vld [vmem:[%s2246] sm:$0x7]
    %v2249 = vlaneseq
    %v2250 = vshrl.u32 %v2249, 7
    %v2251 = vsub.s32 0, %v2250
    %v2252 = vrot.slane %v2247, %v2251
    %v2253 = vlaneseq
    %v2254 = vshrl.u32 %v2253, 7
    %v2255 = vsub.s32 1, %v2254
    %v2256 = vrot.slane %v2247, %v2255
    %v2257 = vlaneseq
    %v2258 = vshrl.u32 %v2257, 7
    %v2259 = vsub.s32 2, %v2258
    %v2260 = vrot.slane %v2247, %v2259
    %2264 = vmatprep.subr.mxu0 %v2244
    %2265 = vmatpush1.msra.mxu0 %v2243
    %2266 = vmatprep.subr.mxu0 %v2241
    %2267 = vmatpush1.msra.mxu0 %v2240
    %2268 = vmatprep.subr.mxu0 %v2238
    %2269 = vmatpush1.msra.mxu0 %v2237
    %2270 = vmatprep.subr.mxu0 %v2235
    %2271 = vmatpush1.msra.mxu0 %v2234
    %2272 = vmatprep.subr.mxu0 %v2232
    %2273 = vmatpush1.msra.mxu0 %v2231
    %2274 = vmatprep.subr.mxu0 %v2229
    %2275 = vmatpush1.msra.mxu0 %v2228
    %2276 = vmatprep.subr.mxu0 %v2226
    %2277 = vmatpush1.msra.mxu0 %v2225
    %2278 = vmatprep.subr.mxu0 %v2223
    %2279 = vmatpush1.msra.mxu0 %v2222
    %2280 = vmatprep.subr.mxu0 %v2220
    %2281 = vmatpush1.msra.mxu0 %v2219
    %2282 = vmatprep.subr.mxu0 %v2217
    %2283 = vmatpush1.msra.mxu0 %v2216
    %2284 = vmatprep.subr.mxu0 %v2214
    %2285 = vmatpush1.msra.mxu0 %v2213
    %2286 = vmatprep.subr.mxu0 %v2211
    %2287 = vmatpush1.msra.mxu0 %v2210
    %2288 = vmatprep.subr.mxu0 %v2208
    %2289 = vmatpush1.msra.mxu0 %v2207
    %2290 = vmatprep.subr.mxu0 %v2205
    %2291 = vmatpush1.msra.mxu0 %v2204
    %2292 = vmatprep.subr.mxu0 %v2202
    %2293 = vmatpush1.msra.mxu0 %v2201
    %2294 = vmatprep.subr.mxu0 %v2199
    %2295 = vmatpush1.msra.mxu0 %v2198
    %2296 = vmatprep.subr.mxu0 0.0
    %2297 = vmatpush2.msra.mxu0 0.0
    %2298 = vmatprep.subr.mxu0 0.0
    %2299 = vmatpush2.msra.mxu0 0.0
    %2300 = vmatprep.subr.mxu0 0.0
    %2301 = vmatpush2.msra.mxu0 0.0
    %2302 = vmatprep.subr.mxu0 0.0
    %2303 = vmatpush2.msra.mxu0 0.0
    %2304 = vmatprep.subr.mxu0 0.0
    %2305 = vmatpush2.msra.mxu0 0.0
    %2306 = vmatprep.subr.mxu0 0.0
    %2307 = vmatpush2.msra.mxu0 0.0
    %2308 = vmatprep.subr.mxu0 0.0
    %2309 = vmatpush2.msra.mxu0 0.0
    %2310 = vmatprep.subr.mxu0 0.0
    %2311 = vmatpush2.msra.mxu0 0.0
    %2312 = vmatprep.subr.mxu0 0.0
    %2313 = vmatpush2.msra.mxu0 0.0
    %2314 = vmatprep.subr.mxu0 0.0
    %2315 = vmatpush2.msra.mxu0 0.0
    %2316 = vmatprep.subr.mxu0 0.0
    %2317 = vmatpush2.msra.mxu0 0.0
    %2318 = vmatprep.subr.mxu0 0.0
    %2319 = vmatpush2.msra.mxu0 0.0
    %2320 = vmatprep.subr.mxu0 0.0
    %2321 = vmatpush2.msra.mxu0 0.0
    %2322 = vmatprep.subr.mxu0 0.0
    %2323 = vmatpush2.msra.mxu0 0.0
    %2324 = vmatprep.subr.mxu0 0.0
    %2325 = vmatpush2.msra.mxu0 0.0
    %2326 = vmatprep.subr.mxu0 0.0
    %2327 = vmatpush2.msra.mxu0 0.0
    %2328 = vmatprep.mubr.f32.mxu0 0.0
    %2329 = vmatmul.mubr.f32.gmra.mxu0 %v2189
    %v2330 = vpop.f32.mrf.mxu0
    %v2331 = vadd.f32 %v2252, %v2330
    %v2332 = vpop.f32.mrf.mxu0
    %v2333 = vadd.f32 %v2256, %v2332
    %2334 = vmatprep.mubr.f32.mxu0 0.0
    %2335 = vmatmul.mubr.f32.gmra.mxu0 %v2190
    %v2336 = vpop.f32.mrf.mxu0
    %v2337 = vadd.f32 %v2252, %v2336
    %v2338 = vpop.f32.mrf.mxu0
    %v2339 = vadd.f32 %v2256, %v2338
    %2340 = vmatprep.mubr.f32.mxu0 0.0
    %2341 = vmatmul.mubr.f32.gmra.mxu0 %v2191
    %v2342 = vpop.f32.mrf.mxu0
    %v2343 = vadd.f32 %v2252, %v2342
    %v2344 = vpop.f32.mrf.mxu0
    %v2345 = vadd.f32 %v2256, %v2344
    %2346 = vmatprep.mubr.f32.mxu0 0.0
    %2347 = vmatmul.mubr.f32.gmra.mxu0 %v2192
    %v2348 = vpop.f32.mrf.mxu0
    %v2349 = vadd.f32 %v2252, %v2348
    %v2350 = vpop.f32.mrf.mxu0
    %v2351 = vadd.f32 %v2256, %v2350
    %2352 = vmatprep.mubr.f32.mxu0 0.0
    %2353 = vmatmul.mubr.f32.gmra.mxu0 %v2193
    %v2354 = vpop.f32.mrf.mxu0
    %v2355 = vadd.f32 %v2252, %v2354
    %v2356 = vpop.f32.mrf.mxu0
    %v2357 = vadd.f32 %v2256, %v2356
    %2358 = vmatprep.mubr.f32.mxu0 0.0
    %2359 = vmatmul.mubr.f32.gmra.mxu0 %v2194
    %v2360 = vpop.f32.mrf.mxu0
    %v2361 = vadd.f32 %v2252, %v2360
    %v2362 = vpop.f32.mrf.mxu0
    %v2363 = vadd.f32 %v2256, %v2362
    %2364 = vmatprep.mubr.f32.mxu0 0.0
    %2365 = vmatmul.mubr.f32.gmra.mxu0 %v2195
    %v2366 = vpop.f32.mrf.mxu0
    %v2367 = vadd.f32 %v2252, %v2366
    %v2368 = vpop.f32.mrf.mxu0
    %v2369 = vadd.f32 %v2256, %v2368
    %2370 = vmatprep.mubr.f32.mxu0 0.0
    %2371 = vmatmul.mubr.f32.gmra.mxu0 %v2196
    %v2372 = vpop.f32.mrf.mxu0
    %v2373 = vadd.f32 %v2252, %v2372
    %v2374 = vpop.f32.mrf.mxu0
    %v2375 = vadd.f32 %v2256, %v2374
    %2376 = vdwg.mxu0
    %2377 = vmatprep.subr.mxu0 0.0
    %2378 = vmatpush1.msra.mxu0 %v2245
    %2379 = vmatprep.subr.mxu0 0.0
    %2380 = vmatpush1.msra.mxu0 %v2242
    %2381 = vmatprep.subr.mxu0 0.0
    %2382 = vmatpush1.msra.mxu0 %v2239
    %2383 = vmatprep.subr.mxu0 0.0
    %2384 = vmatpush1.msra.mxu0 %v2236
    %2385 = vmatprep.subr.mxu0 0.0
    %2386 = vmatpush1.msra.mxu0 %v2233
    %2387 = vmatprep.subr.mxu0 0.0
    %2388 = vmatpush1.msra.mxu0 %v2230
    %2389 = vmatprep.subr.mxu0 0.0
    %2390 = vmatpush1.msra.mxu0 %v2227
    %2391 = vmatprep.subr.mxu0 0.0
    %2392 = vmatpush1.msra.mxu0 %v2224
    %2393 = vmatprep.subr.mxu0 0.0
    %2394 = vmatpush1.msra.mxu0 %v2221
    %2395 = vmatprep.subr.mxu0 0.0
    %2396 = vmatpush1.msra.mxu0 %v2218
    %2397 = vmatprep.subr.mxu0 0.0
    %2398 = vmatpush1.msra.mxu0 %v2215
    %2399 = vmatprep.subr.mxu0 0.0
    %2400 = vmatpush1.msra.mxu0 %v2212
    %2401 = vmatprep.subr.mxu0 0.0
    %2402 = vmatpush1.msra.mxu0 %v2209
    %2403 = vmatprep.subr.mxu0 0.0
    %2404 = vmatpush1.msra.mxu0 %v2206
    %2405 = vmatprep.subr.mxu0 0.0
    %2406 = vmatpush1.msra.mxu0 %v2203
    %2407 = vmatprep.subr.mxu0 0.0
    %2408 = vmatpush1.msra.mxu0 %v2200
    %2409 = vmatprep.subr.mxu0 0.0
    %2410 = vmatpush2.msra.mxu0 0.0
    %2411 = vmatprep.subr.mxu0 0.0
    %2412 = vmatpush2.msra.mxu0 0.0
    %2413 = vmatprep.subr.mxu0 0.0
    %2414 = vmatpush2.msra.mxu0 0.0
    %2415 = vmatprep.subr.mxu0 0.0
    %2416 = vmatpush2.msra.mxu0 0.0
    %2417 = vmatprep.subr.mxu0 0.0
    %2418 = vmatpush2.msra.mxu0 0.0
    %2419 = vmatprep.subr.mxu0 0.0
    %2420 = vmatpush2.msra.mxu0 0.0
    %2421 = vmatprep.subr.mxu0 0.0
    %2422 = vmatpush2.msra.mxu0 0.0
    %2423 = vmatprep.subr.mxu0 0.0
    %2424 = vmatpush2.msra.mxu0 0.0
    %2425 = vmatprep.subr.mxu0 0.0
    %2426 = vmatpush2.msra.mxu0 0.0
    %2427 = vmatprep.subr.mxu0 0.0
    %2428 = vmatpush2.msra.mxu0 0.0
    %2429 = vmatprep.subr.mxu0 0.0
    %2430 = vmatpush2.msra.mxu0 0.0
    %2431 = vmatprep.subr.mxu0 0.0
    %2432 = vmatpush2.msra.mxu0 0.0
    %2433 = vmatprep.subr.mxu0 0.0
    %2434 = vmatpush2.msra.mxu0 0.0
    %2435 = vmatprep.subr.mxu0 0.0
    %2436 = vmatpush2.msra.mxu0 0.0
    %2437 = vmatprep.subr.mxu0 0.0
    %2438 = vmatpush2.msra.mxu0 0.0
    %2439 = vmatprep.subr.mxu0 0.0
    %2440 = vmatpush2.msra.mxu0 0.0
    %2441 = vmatprep.mubr.f32.mxu0 0.0
    %2442 = vmatmul.mubr.f32.gmra.mxu0 %v2189
    %v2443 = vpop.f32.mrf.mxu0
    %v2444 = vadd.f32 %v2260, %v2443
    %v2445 = vpop.f32.mrf.mxu0
    %2446 = vmatprep.mubr.f32.mxu0 0.0
    %2447 = vmatmul.mubr.f32.gmra.mxu0 %v2190
    %v2448 = vpop.f32.mrf.mxu0
    %v2449 = vadd.f32 %v2260, %v2448
    %v2450 = vpop.f32.mrf.mxu0
    %2451 = vmatprep.mubr.f32.mxu0 0.0
    %2452 = vmatmul.mubr.f32.gmra.mxu0 %v2191
    %v2453 = vpop.f32.mrf.mxu0
    %v2454 = vadd.f32 %v2260, %v2453
    %v2455 = vpop.f32.mrf.mxu0
    %2456 = vmatprep.mubr.f32.mxu0 0.0
    %2457 = vmatmul.mubr.f32.gmra.mxu0 %v2192
    %v2458 = vpop.f32.mrf.mxu0
    %v2459 = vadd.f32 %v2260, %v2458
    %v2460 = vpop.f32.mrf.mxu0
    %2461 = vmatprep.mubr.f32.mxu0 0.0
    %2462 = vmatmul.mubr.f32.gmra.mxu0 %v2193
    %v2463 = vpop.f32.mrf.mxu0
    %v2464 = vadd.f32 %v2260, %v2463
    %v2465 = vpop.f32.mrf.mxu0
    %2466 = vmatprep.mubr.f32.mxu0 0.0
    %2467 = vmatmul.mubr.f32.gmra.mxu0 %v2194
    %v2468 = vpop.f32.mrf.mxu0
    %v2469 = vadd.f32 %v2260, %v2468
    %v2470 = vpop.f32.mrf.mxu0
    %2471 = vmatprep.mubr.f32.mxu0 0.0
    %2472 = vmatmul.mubr.f32.gmra.mxu0 %v2195
    %v2473 = vpop.f32.mrf.mxu0
    %v2474 = vadd.f32 %v2260, %v2473
    %v2475 = vpop.f32.mrf.mxu0
    %2476 = vmatprep.mubr.f32.mxu0 0.0
    %2477 = vmatmul.mubr.f32.gmra.mxu0 %v2196
    %v2478 = vpop.f32.mrf.mxu0
    %v2479 = vadd.f32 %v2260, %v2478
    %v2480 = vpop.f32.mrf.mxu0
    %2481 = vdwg.mxu0
    %2482 = vst [vmem:[#allocation3] sm:$0xff] %v2331
    %2483 = vst [vmem:[#allocation3 + $0x8] sm:$0xff] %v2333
    %2484 = vst [vmem:[#allocation3 + $0x10] sm:$0xff] %v2444
    %2485 = vst [vmem:[#allocation3 + $0x18] sm:$0xff] %v2337
    %2486 = vst [vmem:[#allocation3 + $0x20] sm:$0xff] %v2339
    %2487 = vst [vmem:[#allocation3 + $0x28] sm:$0xff] %v2449
    %2488 = vst [vmem:[#allocation3 + $0x30] sm:$0xff] %v2343
    %2489 = vst [vmem:[#allocation3 + $0x38] sm:$0xff] %v2345
    %2490 = vst [vmem:[#allocation3 + $0x40] sm:$0xff] %v2454
    %2491 = vst [vmem:[#allocation3 + $0x48] sm:$0xff] %v2349
    %2492 = vst [vmem:[#allocation3 + $0x50] sm:$0xff] %v2351
    %2493 = vst [vmem:[#allocation3 + $0x58] sm:$0xff] %v2459
    %2494 = vst [vmem:[#allocation3 + $0x60] sm:$0xff] %v2355
    %2495 = vst [vmem:[#allocation3 + $0x68] sm:$0xff] %v2357
    %2496 = vst [vmem:[#allocation3 + $0x70] sm:$0xff] %v2464
    %2497 = vst [vmem:[#allocation3 + $0x78] sm:$0xff] %v2361
    %2498 = vst [vmem:[#allocation3 + $0x80] sm:$0xff] %v2363
    %2499 = vst [vmem:[#allocation3 + $0x88] sm:$0xff] %v2469
    %2500 = vst [vmem:[#allocation3 + $0x90] sm:$0xff] %v2367
    %2501 = vst [vmem:[#allocation3 + $0x98] sm:$0xff] %v2369
    %2502 = vst [vmem:[#allocation3 + $0xa0] sm:$0xff] %v2474
    %2503 = vst [vmem:[#allocation3 + $0xa8] sm:$0xff] %v2373
    %2504 = vst [vmem:[#allocation3 + $0xb0] sm:$0xff] %v2375
    %2505 = vst [vmem:[#allocation3 + $0xb8] sm:$0xff] %v2479
    %s2506 = scalar_lea.vmem [#allocation2], 8
    %v2507 = vld [vmem:[%s2506] sm:$0xff]
    %v2508 = vld [vmem:[#allocation3] sm:$0xff]
    %v2509 = vld [vmem:[#allocation3 + $0x8] sm:$0xff]
    %v2510 = vld [vmem:[#allocation3 + $0x10] sm:$0xff]
    %s2511 = scalar_lea.vmem [#allocation10], 384
    %v2512 = vld [vmem:[%s2511] sm:$0xff]
    %v2513 = vld [vmem:[%s2511 + $0x8] sm:$0xff]
    %v2514 = vld [vmem:[%s2511 + $0x10] sm:$0xff]
    %v2515 = vld [vmem:[%s2511 + $0x18] sm:$0xff]
    %v2516 = vld [vmem:[%s2511 + $0x20] sm:$0xff]
    %v2517 = vld [vmem:[%s2511 + $0x28] sm:$0xff]
    %v2518 = vld [vmem:[%s2511 + $0x30] sm:$0xff]
    %v2519 = vld [vmem:[%s2511 + $0x38] sm:$0xff]
    %v2520 = vld [vmem:[%s2511 + $0x40] sm:$0xff]
    %v2521 = vld [vmem:[%s2511 + $0x48] sm:$0xff]
    %v2522 = vld [vmem:[%s2511 + $0x50] sm:$0xff]
    %v2523 = vld [vmem:[%s2511 + $0x58] sm:$0xff]
    %v2524 = vld [vmem:[%s2511 + $0x60] sm:$0xff]
    %v2525 = vld [vmem:[%s2511 + $0x68] sm:$0xff]
    %v2526 = vld [vmem:[%s2511 + $0x70] sm:$0xff]
    %v2527 = vld [vmem:[%s2511 + $0x78] sm:$0xff]
    %v2528 = vld [vmem:[%s2511 + $0x80] sm:$0xff]
    %v2529 = vld [vmem:[%s2511 + $0x88] sm:$0xff]
    %v2530 = vld [vmem:[%s2511 + $0x90] sm:$0xff]
    %v2531 = vld [vmem:[%s2511 + $0x98] sm:$0xff]
    %v2532 = vld [vmem:[%s2511 + $0xa0] sm:$0xff]
    %v2533 = vld [vmem:[%s2511 + $0xa8] sm:$0xff]
    %v2534 = vld [vmem:[%s2511 + $0xb0] sm:$0xff]
    %v2535 = vld [vmem:[%s2511 + $0xb8] sm:$0xff]
    %v2536 = vld [vmem:[%s2511 + $0xc0] sm:$0xff]
    %v2537 = vld [vmem:[%s2511 + $0xc8] sm:$0xff]
    %v2538 = vld [vmem:[%s2511 + $0xd0] sm:$0xff]
    %v2539 = vld [vmem:[%s2511 + $0xd8] sm:$0xff]
    %v2540 = vld [vmem:[%s2511 + $0xe0] sm:$0xff]
    %v2541 = vld [vmem:[%s2511 + $0xe8] sm:$0xff]
    %v2542 = vld [vmem:[%s2511 + $0xf0] sm:$0xff]
    %v2543 = vld [vmem:[%s2511 + $0xf8] sm:$0xff]
    %v2544 = vld [vmem:[%s2511 + $0x100] sm:$0xff]
    %v2545 = vld [vmem:[%s2511 + $0x108] sm:$0xff]
    %v2546 = vld [vmem:[%s2511 + $0x110] sm:$0xff]
    %v2547 = vld [vmem:[%s2511 + $0x118] sm:$0xff]
    %v2548 = vld [vmem:[%s2511 + $0x120] sm:$0xff]
    %v2549 = vld [vmem:[%s2511 + $0x128] sm:$0xff]
    %v2550 = vld [vmem:[%s2511 + $0x130] sm:$0xff]
    %v2551 = vld [vmem:[%s2511 + $0x138] sm:$0xff]
    %v2552 = vld [vmem:[%s2511 + $0x140] sm:$0xff]
    %v2553 = vld [vmem:[%s2511 + $0x148] sm:$0xff]
    %v2554 = vld [vmem:[%s2511 + $0x150] sm:$0xff]
    %v2555 = vld [vmem:[%s2511 + $0x158] sm:$0xff]
    %v2556 = vld [vmem:[%s2511 + $0x160] sm:$0xff]
    %v2557 = vld [vmem:[%s2511 + $0x168] sm:$0xff]
    %v2558 = vld [vmem:[%s2511 + $0x170] sm:$0xff]
    %v2559 = vld [vmem:[%s2511 + $0x178] sm:$0xff]
    %2560 = vmatprep.subr.mxu0 %v2558
    %2561 = vmatpush1.msra.mxu0 %v2557
    %2562 = vmatprep.subr.mxu0 %v2555
    %2563 = vmatpush1.msra.mxu0 %v2554
    %2564 = vmatprep.subr.mxu0 %v2552
    %2565 = vmatpush1.msra.mxu0 %v2551
    %2566 = vmatprep.subr.mxu0 %v2549
    %2567 = vmatpush1.msra.mxu0 %v2548
    %2568 = vmatprep.subr.mxu0 %v2546
    %2569 = vmatpush1.msra.mxu0 %v2545
    %2570 = vmatprep.subr.mxu0 %v2543
    %2571 = vmatpush1.msra.mxu0 %v2542
    %2572 = vmatprep.subr.mxu0 %v2540
    %2573 = vmatpush1.msra.mxu0 %v2539
    %2574 = vmatprep.subr.mxu0 %v2537
    %2575 = vmatpush1.msra.mxu0 %v2536
    %2576 = vmatprep.subr.mxu0 %v2534
    %2577 = vmatpush1.msra.mxu0 %v2533
    %2578 = vmatprep.subr.mxu0 %v2531
    %2579 = vmatpush1.msra.mxu0 %v2530
    %2580 = vmatprep.subr.mxu0 %v2528
    %2581 = vmatpush1.msra.mxu0 %v2527
    %2582 = vmatprep.subr.mxu0 %v2525
    %2583 = vmatpush1.msra.mxu0 %v2524
    %2584 = vmatprep.subr.mxu0 %v2522
    %2585 = vmatpush1.msra.mxu0 %v2521
    %2586 = vmatprep.subr.mxu0 %v2519
    %2587 = vmatpush1.msra.mxu0 %v2518
    %2588 = vmatprep.subr.mxu0 %v2516
    %2589 = vmatpush1.msra.mxu0 %v2515
    %2590 = vmatprep.subr.mxu0 %v2513
    %2591 = vmatpush1.msra.mxu0 %v2512
    %2592 = vmatprep.subr.mxu0 0.0
    %2593 = vmatpush2.msra.mxu0 0.0
    %2594 = vmatprep.subr.mxu0 0.0
    %2595 = vmatpush2.msra.mxu0 0.0
    %2596 = vmatprep.subr.mxu0 0.0
    %2597 = vmatpush2.msra.mxu0 0.0
    %2598 = vmatprep.subr.mxu0 0.0
    %2599 = vmatpush2.msra.mxu0 0.0
    %2600 = vmatprep.subr.mxu0 0.0
    %2601 = vmatpush2.msra.mxu0 0.0
    %2602 = vmatprep.subr.mxu0 0.0
    %2603 = vmatpush2.msra.mxu0 0.0
    %2604 = vmatprep.subr.mxu0 0.0
    %2605 = vmatpush2.msra.mxu0 0.0
    %2606 = vmatprep.subr.mxu0 0.0
    %2607 = vmatpush2.msra.mxu0 0.0
    %2608 = vmatprep.subr.mxu0 0.0
    %2609 = vmatpush2.msra.mxu0 0.0
    %2610 = vmatprep.subr.mxu0 0.0
    %2611 = vmatpush2.msra.mxu0 0.0
    %2612 = vmatprep.subr.mxu0 0.0
    %2613 = vmatpush2.msra.mxu0 0.0
    %2614 = vmatprep.subr.mxu0 0.0
    %2615 = vmatpush2.msra.mxu0 0.0
    %2616 = vmatprep.subr.mxu0 0.0
    %2617 = vmatpush2.msra.mxu0 0.0
    %2618 = vmatprep.subr.mxu0 0.0
    %2619 = vmatpush2.msra.mxu0 0.0
    %2620 = vmatprep.subr.mxu0 0.0
    %2621 = vmatpush2.msra.mxu0 0.0
    %2622 = vmatprep.subr.mxu0 0.0
    %2623 = vmatpush2.msra.mxu0 0.0
    %2624 = vmatprep.mubr.f32.mxu0 0.0
    %2625 = vmatmul.mubr.f32.gmra.mxu0 %v2507
    %v2626 = vpop.f32.mrf.mxu0
    %v2627 = vadd.f32 0.0, %v2626
    %v2628 = vpop.f32.mrf.mxu0
    %v2629 = vadd.f32 0.0, %v2628
    %2630 = vdwg.mxu0
    %2631 = vmatprep.subr.mxu0 0.0
    %2632 = vmatpush1.msra.mxu0 %v2559
    %2633 = vmatprep.subr.mxu0 0.0
    %2634 = vmatpush1.msra.mxu0 %v2556
    %2635 = vmatprep.subr.mxu0 0.0
    %2636 = vmatpush1.msra.mxu0 %v2553
    %2637 = vmatprep.subr.mxu0 0.0
    %2638 = vmatpush1.msra.mxu0 %v2550
    %2639 = vmatprep.subr.mxu0 0.0
    %2640 = vmatpush1.msra.mxu0 %v2547
    %2641 = vmatprep.subr.mxu0 0.0
    %2642 = vmatpush1.msra.mxu0 %v2544
    %2643 = vmatprep.subr.mxu0 0.0
    %2644 = vmatpush1.msra.mxu0 %v2541
    %2645 = vmatprep.subr.mxu0 0.0
    %2646 = vmatpush1.msra.mxu0 %v2538
    %2647 = vmatprep.subr.mxu0 0.0
    %2648 = vmatpush1.msra.mxu0 %v2535
    %2649 = vmatprep.subr.mxu0 0.0
    %2650 = vmatpush1.msra.mxu0 %v2532
    %2651 = vmatprep.subr.mxu0 0.0
    %2652 = vmatpush1.msra.mxu0 %v2529
    %2653 = vmatprep.subr.mxu0 0.0
    %2654 = vmatpush1.msra.mxu0 %v2526
    %2655 = vmatprep.subr.mxu0 0.0
    %2656 = vmatpush1.msra.mxu0 %v2523
    %2657 = vmatprep.subr.mxu0 0.0
    %2658 = vmatpush1.msra.mxu0 %v2520
    %2659 = vmatprep.subr.mxu0 0.0
    %2660 = vmatpush1.msra.mxu0 %v2517
    %2661 = vmatprep.subr.mxu0 0.0
    %2662 = vmatpush1.msra.mxu0 %v2514
    %2663 = vmatprep.subr.mxu0 0.0
    %2664 = vmatpush2.msra.mxu0 0.0
    %2665 = vmatprep.subr.mxu0 0.0
    %2666 = vmatpush2.msra.mxu0 0.0
    %2667 = vmatprep.subr.mxu0 0.0
    %2668 = vmatpush2.msra.mxu0 0.0
    %2669 = vmatprep.subr.mxu0 0.0
    %2670 = vmatpush2.msra.mxu0 0.0
    %2671 = vmatprep.subr.mxu0 0.0
    %2672 = vmatpush2.msra.mxu0 0.0
    %2673 = vmatprep.subr.mxu0 0.0
    %2674 = vmatpush2.msra.mxu0 0.0
    %2675 = vmatprep.subr.mxu0 0.0
    %2676 = vmatpush2.msra.mxu0 0.0
    %2677 = vmatprep.subr.mxu0 0.0
    %2678 = vmatpush2.msra.mxu0 0.0
    %2679 = vmatprep.subr.mxu0 0.0
    %2680 = vmatpush2.msra.mxu0 0.0
    %2681 = vmatprep.subr.mxu0 0.0
    %2682 = vmatpush2.msra.mxu0 0.0
    %2683 = vmatprep.subr.mxu0 0.0
    %2684 = vmatpush2.msra.mxu0 0.0
    %2685 = vmatprep.subr.mxu0 0.0
    %2686 = vmatpush2.msra.mxu0 0.0
    %2687 = vmatprep.subr.mxu0 0.0
    %2688 = vmatpush2.msra.mxu0 0.0
    %2689 = vmatprep.subr.mxu0 0.0
    %2690 = vmatpush2.msra.mxu0 0.0
    %2691 = vmatprep.subr.mxu0 0.0
    %2692 = vmatpush2.msra.mxu0 0.0
    %2693 = vmatprep.subr.mxu0 0.0
    %2694 = vmatpush2.msra.mxu0 0.0
    %2695 = vmatprep.mubr.f32.mxu0 0.0
    %2696 = vmatmul.mubr.f32.gmra.mxu0 %v2507
    %v2697 = vpop.f32.mrf.mxu0
    %v2698 = vadd.f32 0.0, %v2697
    %v2699 = vpop.f32.mrf.mxu0
    %2700 = vdwg.mxu0
    %v2701 = vadd.f32 %v2508, %v2627
    %v2702 = vxor.u32 %v2701, 2147483648
    %v2703 = vmul.f32 %v2702, 1.442695
    %v2704 = vpow.pop %v2703
    %v2705 = vadd.f32 %v2704, 1.0
    %v2706 = vrcp.pop %v2705
    %v2707 = vmul.f32 1.0, %v2706
    %v2708 = vadd.f32 %v2509, %v2629
    %v2709 = vxor.u32 %v2708, 2147483648
    %v2710 = vmul.f32 %v2709, 1.442695
    %v2711 = vpow.pop %v2710
    %v2712 = vadd.f32 %v2711, 1.0
    %v2713 = vrcp.pop %v2712
    %v2714 = vmul.f32 1.0, %v2713
    %s2715 = scalar_lea.vmem %s4, 1
    %v2716 = vld [vmem:[%s2715] sm:$0x1]
    %v2718 = vlaneseq
    %v2719 = vshrl.u32 %v2718, 7
    %v2720 = vsub.s32 0, %v2719
    %v2721 = vrot.slane %v2716, %v2720
    %v2723 = vadd.f32 %v2698, %v2721
    %v2724 = vmul.f32 %v2707, %v2723
    %v2725 = vadd.f32 %v2510, %v2724
    %v2726 = vtanh.pop %v2725
    %v2727 = vsub.f32 1.0, %v2714
    %v2728 = vmul.f32 %v2727, %v2726
    %v2729 = vmul.f32 %v2714, %v2507
    %v2730 = vadd.f32 %v2728, %v2729
    %2731 = vst [vmem:[#allocation4] sm:$0xff] %v2730
    %v2732 = vld [vmem:[%s620] sm:$0xff]
    %v2733 = vld [vmem:[%s620 + $0x8] sm:$0xff]
    %v2734 = vld [vmem:[%s620 + $0x10] sm:$0xff]
    %v2735 = vld [vmem:[%s2511] sm:$0xff]
    %v2736 = vld [vmem:[%s2511 + $0x8] sm:$0xff]
    %v2737 = vld [vmem:[%s2511 + $0x10] sm:$0xff]
    %v2738 = vld [vmem:[%s2511 + $0x18] sm:$0xff]
    %v2739 = vld [vmem:[%s2511 + $0x20] sm:$0xff]
    %v2740 = vld [vmem:[%s2511 + $0x28] sm:$0xff]
    %v2741 = vld [vmem:[%s2511 + $0x30] sm:$0xff]
    %v2742 = vld [vmem:[%s2511 + $0x38] sm:$0xff]
    %v2743 = vld [vmem:[%s2511 + $0x40] sm:$0xff]
    %v2744 = vld [vmem:[%s2511 + $0x48] sm:$0xff]
    %v2745 = vld [vmem:[%s2511 + $0x50] sm:$0xff]
    %v2746 = vld [vmem:[%s2511 + $0x58] sm:$0xff]
    %v2747 = vld [vmem:[%s2511 + $0x60] sm:$0xff]
    %v2748 = vld [vmem:[%s2511 + $0x68] sm:$0xff]
    %v2749 = vld [vmem:[%s2511 + $0x70] sm:$0xff]
    %v2750 = vld [vmem:[%s2511 + $0x78] sm:$0xff]
    %v2751 = vld [vmem:[%s2511 + $0x80] sm:$0xff]
    %v2752 = vld [vmem:[%s2511 + $0x88] sm:$0xff]
    %v2753 = vld [vmem:[%s2511 + $0x90] sm:$0xff]
    %v2754 = vld [vmem:[%s2511 + $0x98] sm:$0xff]
    %v2755 = vld [vmem:[%s2511 + $0xa0] sm:$0xff]
    %v2756 = vld [vmem:[%s2511 + $0xa8] sm:$0xff]
    %v2757 = vld [vmem:[%s2511 + $0xb0] sm:$0xff]
    %v2758 = vld [vmem:[%s2511 + $0xb8] sm:$0xff]
    %v2759 = vld [vmem:[%s2511 + $0xc0] sm:$0xff]
    %v2760 = vld [vmem:[%s2511 + $0xc8] sm:$0xff]
    %v2761 = vld [vmem:[%s2511 + $0xd0] sm:$0xff]
    %v2762 = vld [vmem:[%s2511 + $0xd8] sm:$0xff]
    %v2763 = vld [vmem:[%s2511 + $0xe0] sm:$0xff]
    %v2764 = vld [vmem:[%s2511 + $0xe8] sm:$0xff]
    %v2765 = vld [vmem:[%s2511 + $0xf0] sm:$0xff]
    %v2766 = vld [vmem:[%s2511 + $0xf8] sm:$0xff]
    %v2767 = vld [vmem:[%s2511 + $0x100] sm:$0xff]
    %v2768 = vld [vmem:[%s2511 + $0x108] sm:$0xff]
    %v2769 = vld [vmem:[%s2511 + $0x110] sm:$0xff]
    %v2770 = vld [vmem:[%s2511 + $0x118] sm:$0xff]
    %v2771 = vld [vmem:[%s2511 + $0x120] sm:$0xff]
    %v2772 = vld [vmem:[%s2511 + $0x128] sm:$0xff]
    %v2773 = vld [vmem:[%s2511 + $0x130] sm:$0xff]
    %v2774 = vld [vmem:[%s2511 + $0x138] sm:$0xff]
    %v2775 = vld [vmem:[%s2511 + $0x140] sm:$0xff]
    %v2776 = vld [vmem:[%s2511 + $0x148] sm:$0xff]
    %v2777 = vld [vmem:[%s2511 + $0x150] sm:$0xff]
    %v2778 = vld [vmem:[%s2511 + $0x158] sm:$0xff]
    %v2779 = vld [vmem:[%s2511 + $0x160] sm:$0xff]
    %v2780 = vld [vmem:[%s2511 + $0x168] sm:$0xff]
    %v2781 = vld [vmem:[%s2511 + $0x170] sm:$0xff]
    %v2782 = vld [vmem:[%s2511 + $0x178] sm:$0xff]
    %2783 = vmatprep.subr.mxu0 %v2781
    %2784 = vmatpush1.msra.mxu0 %v2780
    %2785 = vmatprep.subr.mxu0 %v2778
    %2786 = vmatpush1.msra.mxu0 %v2777
    %2787 = vmatprep.subr.mxu0 %v2775
    %2788 = vmatpush1.msra.mxu0 %v2774
    %2789 = vmatprep.subr.mxu0 %v2772
    %2790 = vmatpush1.msra.mxu0 %v2771
    %2791 = vmatprep.subr.mxu0 %v2769
    %2792 = vmatpush1.msra.mxu0 %v2768
    %2793 = vmatprep.subr.mxu0 %v2766
    %2794 = vmatpush1.msra.mxu0 %v2765
    %2795 = vmatprep.subr.mxu0 %v2763
    %2796 = vmatpush1.msra.mxu0 %v2762
    %2797 = vmatprep.subr.mxu0 %v2760
    %2798 = vmatpush1.msra.mxu0 %v2759
    %2799 = vmatprep.subr.mxu0 %v2757
    %2800 = vmatpush1.msra.mxu0 %v2756
    %2801 = vmatprep.subr.mxu0 %v2754
    %2802 = vmatpush1.msra.mxu0 %v2753
    %2803 = vmatprep.subr.mxu0 %v2751
    %2804 = vmatpush1.msra.mxu0 %v2750
    %2805 = vmatprep.subr.mxu0 %v2748
    %2806 = vmatpush1.msra.mxu0 %v2747
    %2807 = vmatprep.subr.mxu0 %v2745
    %2808 = vmatpush1.msra.mxu0 %v2744
    %2809 = vmatprep.subr.mxu0 %v2742
    %2810 = vmatpush1.msra.mxu0 %v2741
    %2811 = vmatprep.subr.mxu0 %v2739
    %2812 = vmatpush1.msra.mxu0 %v2738
    %2813 = vmatprep.subr.mxu0 %v2736
    %2814 = vmatpush1.msra.mxu0 %v2735
    %2815 = vmatprep.subr.mxu0 0.0
    %2816 = vmatpush2.msra.mxu0 0.0
    %2817 = vmatprep.subr.mxu0 0.0
    %2818 = vmatpush2.msra.mxu0 0.0
    %2819 = vmatprep.subr.mxu0 0.0
    %2820 = vmatpush2.msra.mxu0 0.0
    %2821 = vmatprep.subr.mxu0 0.0
    %2822 = vmatpush2.msra.mxu0 0.0
    %2823 = vmatprep.subr.mxu0 0.0
    %2824 = vmatpush2.msra.mxu0 0.0
    %2825 = vmatprep.subr.mxu0 0.0
    %2826 = vmatpush2.msra.mxu0 0.0
    %2827 = vmatprep.subr.mxu0 0.0
    %2828 = vmatpush2.msra.mxu0 0.0
    %2829 = vmatprep.subr.mxu0 0.0
    %2830 = vmatpush2.msra.mxu0 0.0
    %2831 = vmatprep.subr.mxu0 0.0
    %2832 = vmatpush2.msra.mxu0 0.0
    %2833 = vmatprep.subr.mxu0 0.0
    %2834 = vmatpush2.msra.mxu0 0.0
    %2835 = vmatprep.subr.mxu0 0.0
    %2836 = vmatpush2.msra.mxu0 0.0
    %2837 = vmatprep.subr.mxu0 0.0
    %2838 = vmatpush2.msra.mxu0 0.0
    %2839 = vmatprep.subr.mxu0 0.0
    %2840 = vmatpush2.msra.mxu0 0.0
    %2841 = vmatprep.subr.mxu0 0.0
    %2842 = vmatpush2.msra.mxu0 0.0
    %2843 = vmatprep.subr.mxu0 0.0
    %2844 = vmatpush2.msra.mxu0 0.0
    %2845 = vmatprep.subr.mxu0 0.0
    %2846 = vmatpush2.msra.mxu0 0.0
    %2847 = vmatprep.mubr.f32.mxu0 0.0
    %2848 = vmatmul.mubr.f32.gmra.mxu0 %v2730
    %v2849 = vpop.f32.mrf.mxu0
    %v2850 = vadd.f32 0.0, %v2849
    %v2851 = vpop.f32.mrf.mxu0
    %v2852 = vadd.f32 0.0, %v2851
    %2853 = vdwg.mxu0
    %2854 = vmatprep.subr.mxu0 0.0
    %2855 = vmatpush1.msra.mxu0 %v2782
    %2856 = vmatprep.subr.mxu0 0.0
    %2857 = vmatpush1.msra.mxu0 %v2779
    %2858 = vmatprep.subr.mxu0 0.0
    %2859 = vmatpush1.msra.mxu0 %v2776
    %2860 = vmatprep.subr.mxu0 0.0
    %2861 = vmatpush1.msra.mxu0 %v2773
    %2862 = vmatprep.subr.mxu0 0.0
    %2863 = vmatpush1.msra.mxu0 %v2770
    %2864 = vmatprep.subr.mxu0 0.0
    %2865 = vmatpush1.msra.mxu0 %v2767
    %2866 = vmatprep.subr.mxu0 0.0
    %2867 = vmatpush1.msra.mxu0 %v2764
    %2868 = vmatprep.subr.mxu0 0.0
    %2869 = vmatpush1.msra.mxu0 %v2761
    %2870 = vmatprep.subr.mxu0 0.0
    %2871 = vmatpush1.msra.mxu0 %v2758
    %2872 = vmatprep.subr.mxu0 0.0
    %2873 = vmatpush1.msra.mxu0 %v2755
    %2874 = vmatprep.subr.mxu0 0.0
    %2875 = vmatpush1.msra.mxu0 %v2752
    %2876 = vmatprep.subr.mxu0 0.0
    %2877 = vmatpush1.msra.mxu0 %v2749
    %2878 = vmatprep.subr.mxu0 0.0
    %2879 = vmatpush1.msra.mxu0 %v2746
    %2880 = vmatprep.subr.mxu0 0.0
    %2881 = vmatpush1.msra.mxu0 %v2743
    %2882 = vmatprep.subr.mxu0 0.0
    %2883 = vmatpush1.msra.mxu0 %v2740
    %2884 = vmatprep.subr.mxu0 0.0
    %2885 = vmatpush1.msra.mxu0 %v2737
    %2886 = vmatprep.subr.mxu0 0.0
    %2887 = vmatpush2.msra.mxu0 0.0
    %2888 = vmatprep.subr.mxu0 0.0
    %2889 = vmatpush2.msra.mxu0 0.0
    %2890 = vmatprep.subr.mxu0 0.0
    %2891 = vmatpush2.msra.mxu0 0.0
    %2892 = vmatprep.subr.mxu0 0.0
    %2893 = vmatpush2.msra.mxu0 0.0
    %2894 = vmatprep.subr.mxu0 0.0
    %2895 = vmatpush2.msra.mxu0 0.0
    %2896 = vmatprep.subr.mxu0 0.0
    %2897 = vmatpush2.msra.mxu0 0.0
    %2898 = vmatprep.subr.mxu0 0.0
    %2899 = vmatpush2.msra.mxu0 0.0
    %2900 = vmatprep.subr.mxu0 0.0
    %2901 = vmatpush2.msra.mxu0 0.0
    %2902 = vmatprep.subr.mxu0 0.0
    %2903 = vmatpush2.msra.mxu0 0.0
    %2904 = vmatprep.subr.mxu0 0.0
    %2905 = vmatpush2.msra.mxu0 0.0
    %2906 = vmatprep.subr.mxu0 0.0
    %2907 = vmatpush2.msra.mxu0 0.0
    %2908 = vmatprep.subr.mxu0 0.0
    %2909 = vmatpush2.msra.mxu0 0.0
    %2910 = vmatprep.subr.mxu0 0.0
    %2911 = vmatpush2.msra.mxu0 0.0
    %2912 = vmatprep.subr.mxu0 0.0
    %2913 = vmatpush2.msra.mxu0 0.0
    %2914 = vmatprep.subr.mxu0 0.0
    %2915 = vmatpush2.msra.mxu0 0.0
    %2916 = vmatprep.subr.mxu0 0.0
    %2917 = vmatpush2.msra.mxu0 0.0
    %2918 = vmatprep.mubr.f32.mxu0 0.0
    %2919 = vmatmul.mubr.f32.gmra.mxu0 %v2730
    %v2920 = vpop.f32.mrf.mxu0
    %v2921 = vadd.f32 0.0, %v2920
    %v2922 = vpop.f32.mrf.mxu0
    %2923 = vdwg.mxu0
    %v2924 = vadd.f32 %v2732, %v2850
    %v2925 = vxor.u32 %v2924, 2147483648
    %v2926 = vmul.f32 %v2925, 1.442695
    %v2927 = vpow.pop %v2926
    %v2928 = vadd.f32 %v2927, 1.0
    %v2929 = vrcp.pop %v2928
    %v2930 = vmul.f32 1.0, %v2929
    %v2931 = vadd.f32 %v2733, %v2852
    %v2932 = vxor.u32 %v2931, 2147483648
    %v2933 = vmul.f32 %v2932, 1.442695
    %v2934 = vpow.pop %v2933
    %v2935 = vadd.f32 %v2934, 1.0
    %v2936 = vrcp.pop %v2935
    %v2937 = vmul.f32 1.0, %v2936
    %v2938 = vld [vmem:[%s2715] sm:$0x1]
    %v2940 = vlaneseq
    %v2941 = vshrl.u32 %v2940, 7
    %v2942 = vsub.s32 0, %v2941
    %v2943 = vrot.slane %v2938, %v2942
    %v2945 = vadd.f32 %v2921, %v2943
    %v2946 = vmul.f32 %v2930, %v2945
    %v2947 = vadd.f32 %v2734, %v2946
    %v2948 = vtanh.pop %v2947
    %v2949 = vsub.f32 1.0, %v2937
    %v2950 = vmul.f32 %v2949, %v2948
    %v2951 = vmul.f32 %v2937, %v2730
    %v2952 = vadd.f32 %v2950, %v2951
    %2953 = vst [vmem:[%s842] sm:$0xff] %v2952
    %v2954 = vld [vmem:[%s844] sm:$0xff]
    %v2955 = vld [vmem:[%s844 + $0x8] sm:$0xff]
    %v2956 = vld [vmem:[%s844 + $0x10] sm:$0xff]
    %v2957 = vld [vmem:[%s2511] sm:$0xff]
    %v2958 = vld [vmem:[%s2511 + $0x8] sm:$0xff]
    %v2959 = vld [vmem:[%s2511 + $0x10] sm:$0xff]
    %v2960 = vld [vmem:[%s2511 + $0x18] sm:$0xff]
    %v2961 = vld [vmem:[%s2511 + $0x20] sm:$0xff]
    %v2962 = vld [vmem:[%s2511 + $0x28] sm:$0xff]
    %v2963 = vld [vmem:[%s2511 + $0x30] sm:$0xff]
    %v2964 = vld [vmem:[%s2511 + $0x38] sm:$0xff]
    %v2965 = vld [vmem:[%s2511 + $0x40] sm:$0xff]
    %v2966 = vld [vmem:[%s2511 + $0x48] sm:$0xff]
    %v2967 = vld [vmem:[%s2511 + $0x50] sm:$0xff]
    %v2968 = vld [vmem:[%s2511 + $0x58] sm:$0xff]
    %v2969 = vld [vmem:[%s2511 + $0x60] sm:$0xff]
    %v2970 = vld [vmem:[%s2511 + $0x68] sm:$0xff]
    %v2971 = vld [vmem:[%s2511 + $0x70] sm:$0xff]
    %v2972 = vld [vmem:[%s2511 + $0x78] sm:$0xff]
    %v2973 = vld [vmem:[%s2511 + $0x80] sm:$0xff]
    %v2974 = vld [vmem:[%s2511 + $0x88] sm:$0xff]
    %v2975 = vld [vmem:[%s2511 + $0x90] sm:$0xff]
    %v2976 = vld [vmem:[%s2511 + $0x98] sm:$0xff]
    %v2977 = vld [vmem:[%s2511 + $0xa0] sm:$0xff]
    %v2978 = vld [vmem:[%s2511 + $0xa8] sm:$0xff]
    %v2979 = vld [vmem:[%s2511 + $0xb0] sm:$0xff]
    %v2980 = vld [vmem:[%s2511 + $0xb8] sm:$0xff]
    %v2981 = vld [vmem:[%s2511 + $0xc0] sm:$0xff]
    %v2982 = vld [vmem:[%s2511 + $0xc8] sm:$0xff]
    %v2983 = vld [vmem:[%s2511 + $0xd0] sm:$0xff]
    %v2984 = vld [vmem:[%s2511 + $0xd8] sm:$0xff]
    %v2985 = vld [vmem:[%s2511 + $0xe0] sm:$0xff]
    %v2986 = vld [vmem:[%s2511 + $0xe8] sm:$0xff]
    %v2987 = vld [vmem:[%s2511 + $0xf0] sm:$0xff]
    %v2988 = vld [vmem:[%s2511 + $0xf8] sm:$0xff]
    %v2989 = vld [vmem:[%s2511 + $0x100] sm:$0xff]
    %v2990 = vld [vmem:[%s2511 + $0x108] sm:$0xff]
    %v2991 = vld [vmem:[%s2511 + $0x110] sm:$0xff]
    %v2992 = vld [vmem:[%s2511 + $0x118] sm:$0xff]
    %v2993 = vld [vmem:[%s2511 + $0x120] sm:$0xff]
    %v2994 = vld [vmem:[%s2511 + $0x128] sm:$0xff]
    %v2995 = vld [vmem:[%s2511 + $0x130] sm:$0xff]
    %v2996 = vld [vmem:[%s2511 + $0x138] sm:$0xff]
    %v2997 = vld [vmem:[%s2511 + $0x140] sm:$0xff]
    %v2998 = vld [vmem:[%s2511 + $0x148] sm:$0xff]
    %v2999 = vld [vmem:[%s2511 + $0x150] sm:$0xff]
    %v3000 = vld [vmem:[%s2511 + $0x158] sm:$0xff]
    %v3001 = vld [vmem:[%s2511 + $0x160] sm:$0xff]
    %v3002 = vld [vmem:[%s2511 + $0x168] sm:$0xff]
    %v3003 = vld [vmem:[%s2511 + $0x170] sm:$0xff]
    %v3004 = vld [vmem:[%s2511 + $0x178] sm:$0xff]
    %3005 = vmatprep.subr.mxu0 %v3003
    %3006 = vmatpush1.msra.mxu0 %v3002
    %3007 = vmatprep.subr.mxu0 %v3000
    %3008 = vmatpush1.msra.mxu0 %v2999
    %3009 = vmatprep.subr.mxu0 %v2997
    %3010 = vmatpush1.msra.mxu0 %v2996
    %3011 = vmatprep.subr.mxu0 %v2994
    %3012 = vmatpush1.msra.mxu0 %v2993
    %3013 = vmatprep.subr.mxu0 %v2991
    %3014 = vmatpush1.msra.mxu0 %v2990
    %3015 = vmatprep.subr.mxu0 %v2988
    %3016 = vmatpush1.msra.mxu0 %v2987
    %3017 = vmatprep.subr.mxu0 %v2985
    %3018 = vmatpush1.msra.mxu0 %v2984
    %3019 = vmatprep.subr.mxu0 %v2982
    %3020 = vmatpush1.msra.mxu0 %v2981
    %3021 = vmatprep.subr.mxu0 %v2979
    %3022 = vmatpush1.msra.mxu0 %v2978
    %3023 = vmatprep.subr.mxu0 %v2976
    %3024 = vmatpush1.msra.mxu0 %v2975
    %3025 = vmatprep.subr.mxu0 %v2973
    %3026 = vmatpush1.msra.mxu0 %v2972
    %3027 = vmatprep.subr.mxu0 %v2970
    %3028 = vmatpush1.msra.mxu0 %v2969
    %3029 = vmatprep.subr.mxu0 %v2967
    %3030 = vmatpush1.msra.mxu0 %v2966
    %3031 = vmatprep.subr.mxu0 %v2964
    %3032 = vmatpush1.msra.mxu0 %v2963
    %3033 = vmatprep.subr.mxu0 %v2961
    %3034 = vmatpush1.msra.mxu0 %v2960
    %3035 = vmatprep.subr.mxu0 %v2958
    %3036 = vmatpush1.msra.mxu0 %v2957
    %3037 = vmatprep.subr.mxu0 0.0
    %3038 = vmatpush2.msra.mxu0 0.0
    %3039 = vmatprep.subr.mxu0 0.0
    %3040 = vmatpush2.msra.mxu0 0.0
    %3041 = vmatprep.subr.mxu0 0.0
    %3042 = vmatpush2.msra.mxu0 0.0
    %3043 = vmatprep.subr.mxu0 0.0
    %3044 = vmatpush2.msra.mxu0 0.0
    %3045 = vmatprep.subr.mxu0 0.0
    %3046 = vmatpush2.msra.mxu0 0.0
    %3047 = vmatprep.subr.mxu0 0.0
    %3048 = vmatpush2.msra.mxu0 0.0
    %3049 = vmatprep.subr.mxu0 0.0
    %3050 = vmatpush2.msra.mxu0 0.0
    %3051 = vmatprep.subr.mxu0 0.0
    %3052 = vmatpush2.msra.mxu0 0.0
    %3053 = vmatprep.subr.mxu0 0.0
    %3054 = vmatpush2.msra.mxu0 0.0
    %3055 = vmatprep.subr.mxu0 0.0
    %3056 = vmatpush2.msra.mxu0 0.0
    %3057 = vmatprep.subr.mxu0 0.0
    %3058 = vmatpush2.msra.mxu0 0.0
    %3059 = vmatprep.subr.mxu0 0.0
    %3060 = vmatpush2.msra.mxu0 0.0
    %3061 = vmatprep.subr.mxu0 0.0
    %3062 = vmatpush2.msra.mxu0 0.0
    %3063 = vmatprep.subr.mxu0 0.0
    %3064 = vmatpush2.msra.mxu0 0.0
    %3065 = vmatprep.subr.mxu0 0.0
    %3066 = vmatpush2.msra.mxu0 0.0
    %3067 = vmatprep.subr.mxu0 0.0
    %3068 = vmatpush2.msra.mxu0 0.0
    %3069 = vmatprep.mubr.f32.mxu0 0.0
    %3070 = vmatmul.mubr.f32.gmra.mxu0 %v2952
    %v3071 = vpop.f32.mrf.mxu0
    %v3072 = vadd.f32 0.0, %v3071
    %v3073 = vpop.f32.mrf.mxu0
    %v3074 = vadd.f32 0.0, %v3073
    %3075 = vdwg.mxu0
    %3076 = vmatprep.subr.mxu0 0.0
    %3077 = vmatpush1.msra.mxu0 %v3004
    %3078 = vmatprep.subr.mxu0 0.0
    %3079 = vmatpush1.msra.mxu0 %v3001
    %3080 = vmatprep.subr.mxu0 0.0
    %3081 = vmatpush1.msra.mxu0 %v2998
    %3082 = vmatprep.subr.mxu0 0.0
    %3083 = vmatpush1.msra.mxu0 %v2995
    %3084 = vmatprep.subr.mxu0 0.0
    %3085 = vmatpush1.msra.mxu0 %v2992
    %3086 = vmatprep.subr.mxu0 0.0
    %3087 = vmatpush1.msra.mxu0 %v2989
    %3088 = vmatprep.subr.mxu0 0.0
    %3089 = vmatpush1.msra.mxu0 %v2986
    %3090 = vmatprep.subr.mxu0 0.0
    %3091 = vmatpush1.msra.mxu0 %v2983
    %3092 = vmatprep.subr.mxu0 0.0
    %3093 = vmatpush1.msra.mxu0 %v2980
    %3094 = vmatprep.subr.mxu0 0.0
    %3095 = vmatpush1.msra.mxu0 %v2977
    %3096 = vmatprep.subr.mxu0 0.0
    %3097 = vmatpush1.msra.mxu0 %v2974
    %3098 = vmatprep.subr.mxu0 0.0
    %3099 = vmatpush1.msra.mxu0 %v2971
    %3100 = vmatprep.subr.mxu0 0.0
    %3101 = vmatpush1.msra.mxu0 %v2968
    %3102 = vmatprep.subr.mxu0 0.0
    %3103 = vmatpush1.msra.mxu0 %v2965
    %3104 = vmatprep.subr.mxu0 0.0
    %3105 = vmatpush1.msra.mxu0 %v2962
    %3106 = vmatprep.subr.mxu0 0.0
    %3107 = vmatpush1.msra.mxu0 %v2959
    %3108 = vmatprep.subr.mxu0 0.0
    %3109 = vmatpush2.msra.mxu0 0.0
    %3110 = vmatprep.subr.mxu0 0.0
    %3111 = vmatpush2.msra.mxu0 0.0
    %3112 = vmatprep.subr.mxu0 0.0
    %3113 = vmatpush2.msra.mxu0 0.0
    %3114 = vmatprep.subr.mxu0 0.0
    %3115 = vmatpush2.msra.mxu0 0.0
    %3116 = vmatprep.subr.mxu0 0.0
    %3117 = vmatpush2.msra.mxu0 0.0
    %3118 = vmatprep.subr.mxu0 0.0
    %3119 = vmatpush2.msra.mxu0 0.0
    %3120 = vmatprep.subr.mxu0 0.0
    %3121 = vmatpush2.msra.mxu0 0.0
    %3122 = vmatprep.subr.mxu0 0.0
    %3123 = vmatpush2.msra.mxu0 0.0
    %3124 = vmatprep.subr.mxu0 0.0
    %3125 = vmatpush2.msra.mxu0 0.0
    %3126 = vmatprep.subr.mxu0 0.0
    %3127 = vmatpush2.msra.mxu0 0.0
    %3128 = vmatprep.subr.mxu0 0.0
    %3129 = vmatpush2.msra.mxu0 0.0
    %3130 = vmatprep.subr.mxu0 0.0
    %3131 = vmatpush2.msra.mxu0 0.0
    %3132 = vmatprep.subr.mxu0 0.0
    %3133 = vmatpush2.msra.mxu0 0.0
    %3134 = vmatprep.subr.mxu0 0.0
    %3135 = vmatpush2.msra.mxu0 0.0
    %3136 = vmatprep.subr.mxu0 0.0
    %3137 = vmatpush2.msra.mxu0 0.0
    %3138 = vmatprep.subr.mxu0 0.0
    %3139 = vmatpush2.msra.mxu0 0.0
    %3140 = vmatprep.mubr.f32.mxu0 0.0
    %3141 = vmatmul.mubr.f32.gmra.mxu0 %v2952
    %v3142 = vpop.f32.mrf.mxu0
    %v3143 = vadd.f32 0.0, %v3142
    %v3144 = vpop.f32.mrf.mxu0
    %3145 = vdwg.mxu0
    %v3146 = vadd.f32 %v2954, %v3072
    %v3147 = vxor.u32 %v3146, 2147483648
    %v3148 = vmul.f32 %v3147, 1.442695
    %v3149 = vpow.pop %v3148
    %v3150 = vadd.f32 %v3149, 1.0
    %v3151 = vrcp.pop %v3150
    %v3152 = vmul.f32 1.0, %v3151
    %v3153 = vadd.f32 %v2955, %v3074
    %v3154 = vxor.u32 %v3153, 2147483648
    %v3155 = vmul.f32 %v3154, 1.442695
    %v3156 = vpow.pop %v3155
    %v3157 = vadd.f32 %v3156, 1.0
    %v3158 = vrcp.pop %v3157
    %v3159 = vmul.f32 1.0, %v3158
    %v3160 = vld [vmem:[%s2715] sm:$0x1]
    %v3162 = vlaneseq
    %v3163 = vshrl.u32 %v3162, 7
    %v3164 = vsub.s32 0, %v3163
    %v3165 = vrot.slane %v3160, %v3164
    %v3167 = vadd.f32 %v3143, %v3165
    %v3168 = vmul.f32 %v3152, %v3167
    %v3169 = vadd.f32 %v2956, %v3168
    %v3170 = vtanh.pop %v3169
    %v3171 = vsub.f32 1.0, %v3159
    %v3172 = vmul.f32 %v3171, %v3170
    %v3173 = vmul.f32 %v3159, %v2952
    %v3174 = vadd.f32 %v3172, %v3173
    %3175 = vst [vmem:[%s1066] sm:$0xff] %v3174
    %v3176 = vld [vmem:[%s1068] sm:$0xff]
    %v3177 = vld [vmem:[%s1068 + $0x8] sm:$0xff]
    %v3178 = vld [vmem:[%s1068 + $0x10] sm:$0xff]
    %v3179 = vld [vmem:[%s2511] sm:$0xff]
    %v3180 = vld [vmem:[%s2511 + $0x8] sm:$0xff]
    %v3181 = vld [vmem:[%s2511 + $0x10] sm:$0xff]
    %v3182 = vld [vmem:[%s2511 + $0x18] sm:$0xff]
    %v3183 = vld [vmem:[%s2511 + $0x20] sm:$0xff]
    %v3184 = vld [vmem:[%s2511 + $0x28] sm:$0xff]
    %v3185 = vld [vmem:[%s2511 + $0x30] sm:$0xff]
    %v3186 = vld [vmem:[%s2511 + $0x38] sm:$0xff]
    %v3187 = vld [vmem:[%s2511 + $0x40] sm:$0xff]
    %v3188 = vld [vmem:[%s2511 + $0x48] sm:$0xff]
    %v3189 = vld [vmem:[%s2511 + $0x50] sm:$0xff]
    %v3190 = vld [vmem:[%s2511 + $0x58] sm:$0xff]
    %v3191 = vld [vmem:[%s2511 + $0x60] sm:$0xff]
    %v3192 = vld [vmem:[%s2511 + $0x68] sm:$0xff]
    %v3193 = vld [vmem:[%s2511 + $0x70] sm:$0xff]
    %v3194 = vld [vmem:[%s2511 + $0x78] sm:$0xff]
    %v3195 = vld [vmem:[%s2511 + $0x80] sm:$0xff]
    %v3196 = vld [vmem:[%s2511 + $0x88] sm:$0xff]
    %v3197 = vld [vmem:[%s2511 + $0x90] sm:$0xff]
    %v3198 = vld [vmem:[%s2511 + $0x98] sm:$0xff]
    %v3199 = vld [vmem:[%s2511 + $0xa0] sm:$0xff]
    %v3200 = vld [vmem:[%s2511 + $0xa8] sm:$0xff]
    %v3201 = vld [vmem:[%s2511 + $0xb0] sm:$0xff]
    %v3202 = vld [vmem:[%s2511 + $0xb8] sm:$0xff]
    %v3203 = vld [vmem:[%s2511 + $0xc0] sm:$0xff]
    %v3204 = vld [vmem:[%s2511 + $0xc8] sm:$0xff]
    %v3205 = vld [vmem:[%s2511 + $0xd0] sm:$0xff]
    %v3206 = vld [vmem:[%s2511 + $0xd8] sm:$0xff]
    %v3207 = vld [vmem:[%s2511 + $0xe0] sm:$0xff]
    %v3208 = vld [vmem:[%s2511 + $0xe8] sm:$0xff]
    %v3209 = vld [vmem:[%s2511 + $0xf0] sm:$0xff]
    %v3210 = vld [vmem:[%s2511 + $0xf8] sm:$0xff]
    %v3211 = vld [vmem:[%s2511 + $0x100] sm:$0xff]
    %v3212 = vld [vmem:[%s2511 + $0x108] sm:$0xff]
    %v3213 = vld [vmem:[%s2511 + $0x110] sm:$0xff]
    %v3214 = vld [vmem:[%s2511 + $0x118] sm:$0xff]
    %v3215 = vld [vmem:[%s2511 + $0x120] sm:$0xff]
    %v3216 = vld [vmem:[%s2511 + $0x128] sm:$0xff]
    %v3217 = vld [vmem:[%s2511 + $0x130] sm:$0xff]
    %v3218 = vld [vmem:[%s2511 + $0x138] sm:$0xff]
    %v3219 = vld [vmem:[%s2511 + $0x140] sm:$0xff]
    %v3220 = vld [vmem:[%s2511 + $0x148] sm:$0xff]
    %v3221 = vld [vmem:[%s2511 + $0x150] sm:$0xff]
    %v3222 = vld [vmem:[%s2511 + $0x158] sm:$0xff]
    %v3223 = vld [vmem:[%s2511 + $0x160] sm:$0xff]
    %v3224 = vld [vmem:[%s2511 + $0x168] sm:$0xff]
    %v3225 = vld [vmem:[%s2511 + $0x170] sm:$0xff]
    %v3226 = vld [vmem:[%s2511 + $0x178] sm:$0xff]
    %3227 = vmatprep.subr.mxu0 %v3225
    %3228 = vmatpush1.msra.mxu0 %v3224
    %3229 = vmatprep.subr.mxu0 %v3222
    %3230 = vmatpush1.msra.mxu0 %v3221
    %3231 = vmatprep.subr.mxu0 %v3219
    %3232 = vmatpush1.msra.mxu0 %v3218
    %3233 = vmatprep.subr.mxu0 %v3216
    %3234 = vmatpush1.msra.mxu0 %v3215
    %3235 = vmatprep.subr.mxu0 %v3213
    %3236 = vmatpush1.msra.mxu0 %v3212
    %3237 = vmatprep.subr.mxu0 %v3210
    %3238 = vmatpush1.msra.mxu0 %v3209
    %3239 = vmatprep.subr.mxu0 %v3207
    %3240 = vmatpush1.msra.mxu0 %v3206
    %3241 = vmatprep.subr.mxu0 %v3204
    %3242 = vmatpush1.msra.mxu0 %v3203
    %3243 = vmatprep.subr.mxu0 %v3201
    %3244 = vmatpush1.msra.mxu0 %v3200
    %3245 = vmatprep.subr.mxu0 %v3198
    %3246 = vmatpush1.msra.mxu0 %v3197
    %3247 = vmatprep.subr.mxu0 %v3195
    %3248 = vmatpush1.msra.mxu0 %v3194
    %3249 = vmatprep.subr.mxu0 %v3192
    %3250 = vmatpush1.msra.mxu0 %v3191
    %3251 = vmatprep.subr.mxu0 %v3189
    %3252 = vmatpush1.msra.mxu0 %v3188
    %3253 = vmatprep.subr.mxu0 %v3186
    %3254 = vmatpush1.msra.mxu0 %v3185
    %3255 = vmatprep.subr.mxu0 %v3183
    %3256 = vmatpush1.msra.mxu0 %v3182
    %3257 = vmatprep.subr.mxu0 %v3180
    %3258 = vmatpush1.msra.mxu0 %v3179
    %3259 = vmatprep.subr.mxu0 0.0
    %3260 = vmatpush2.msra.mxu0 0.0
    %3261 = vmatprep.subr.mxu0 0.0
    %3262 = vmatpush2.msra.mxu0 0.0
    %3263 = vmatprep.subr.mxu0 0.0
    %3264 = vmatpush2.msra.mxu0 0.0
    %3265 = vmatprep.subr.mxu0 0.0
    %3266 = vmatpush2.msra.mxu0 0.0
    %3267 = vmatprep.subr.mxu0 0.0
    %3268 = vmatpush2.msra.mxu0 0.0
    %3269 = vmatprep.subr.mxu0 0.0
    %3270 = vmatpush2.msra.mxu0 0.0
    %3271 = vmatprep.subr.mxu0 0.0
    %3272 = vmatpush2.msra.mxu0 0.0
    %3273 = vmatprep.subr.mxu0 0.0
    %3274 = vmatpush2.msra.mxu0 0.0
    %3275 = vmatprep.subr.mxu0 0.0
    %3276 = vmatpush2.msra.mxu0 0.0
    %3277 = vmatprep.subr.mxu0 0.0
    %3278 = vmatpush2.msra.mxu0 0.0
    %3279 = vmatprep.subr.mxu0 0.0
    %3280 = vmatpush2.msra.mxu0 0.0
    %3281 = vmatprep.subr.mxu0 0.0
    %3282 = vmatpush2.msra.mxu0 0.0
    %3283 = vmatprep.subr.mxu0 0.0
    %3284 = vmatpush2.msra.mxu0 0.0
    %3285 = vmatprep.subr.mxu0 0.0
    %3286 = vmatpush2.msra.mxu0 0.0
    %3287 = vmatprep.subr.mxu0 0.0
    %3288 = vmatpush2.msra.mxu0 0.0
    %3289 = vmatprep.subr.mxu0 0.0
    %3290 = vmatpush2.msra.mxu0 0.0
    %3291 = vmatprep.mubr.f32.mxu0 0.0
    %3292 = vmatmul.mubr.f32.gmra.mxu0 %v3174
    %v3293 = vpop.f32.mrf.mxu0
    %v3294 = vadd.f32 0.0, %v3293
    %v3295 = vpop.f32.mrf.mxu0
    %v3296 = vadd.f32 0.0, %v3295
    %3297 = vdwg.mxu0
    %3298 = vmatprep.subr.mxu0 0.0
    %3299 = vmatpush1.msra.mxu0 %v3226
    %3300 = vmatprep.subr.mxu0 0.0
    %3301 = vmatpush1.msra.mxu0 %v3223
    %3302 = vmatprep.subr.mxu0 0.0
    %3303 = vmatpush1.msra.mxu0 %v3220
    %3304 = vmatprep.subr.mxu0 0.0
    %3305 = vmatpush1.msra.mxu0 %v3217
    %3306 = vmatprep.subr.mxu0 0.0
    %3307 = vmatpush1.msra.mxu0 %v3214
    %3308 = vmatprep.subr.mxu0 0.0
    %3309 = vmatpush1.msra.mxu0 %v3211
    %3310 = vmatprep.subr.mxu0 0.0
    %3311 = vmatpush1.msra.mxu0 %v3208
    %3312 = vmatprep.subr.mxu0 0.0
    %3313 = vmatpush1.msra.mxu0 %v3205
    %3314 = vmatprep.subr.mxu0 0.0
    %3315 = vmatpush1.msra.mxu0 %v3202
    %3316 = vmatprep.subr.mxu0 0.0
    %3317 = vmatpush1.msra.mxu0 %v3199
    %3318 = vmatprep.subr.mxu0 0.0
    %3319 = vmatpush1.msra.mxu0 %v3196
    %3320 = vmatprep.subr.mxu0 0.0
    %3321 = vmatpush1.msra.mxu0 %v3193
    %3322 = vmatprep.subr.mxu0 0.0
    %3323 = vmatpush1.msra.mxu0 %v3190
    %3324 = vmatprep.subr.mxu0 0.0
    %3325 = vmatpush1.msra.mxu0 %v3187
    %3326 = vmatprep.subr.mxu0 0.0
    %3327 = vmatpush1.msra.mxu0 %v3184
    %3328 = vmatprep.subr.mxu0 0.0
    %3329 = vmatpush1.msra.mxu0 %v3181
    %3330 = vmatprep.subr.mxu0 0.0
    %3331 = vmatpush2.msra.mxu0 0.0
    %3332 = vmatprep.subr.mxu0 0.0
    %3333 = vmatpush2.msra.mxu0 0.0
    %3334 = vmatprep.subr.mxu0 0.0
    %3335 = vmatpush2.msra.mxu0 0.0
    %3336 = vmatprep.subr.mxu0 0.0
    %3337 = vmatpush2.msra.mxu0 0.0
    %3338 = vmatprep.subr.mxu0 0.0
    %3339 = vmatpush2.msra.mxu0 0.0
    %3340 = vmatprep.subr.mxu0 0.0
    %3341 = vmatpush2.msra.mxu0 0.0
    %3342 = vmatprep.subr.mxu0 0.0
    %3343 = vmatpush2.msra.mxu0 0.0
    %3344 = vmatprep.subr.mxu0 0.0
    %3345 = vmatpush2.msra.mxu0 0.0
    %3346 = vmatprep.subr.mxu0 0.0
    %3347 = vmatpush2.msra.mxu0 0.0
    %3348 = vmatprep.subr.mxu0 0.0
    %3349 = vmatpush2.msra.mxu0 0.0
    %3350 = vmatprep.subr.mxu0 0.0
    %3351 = vmatpush2.msra.mxu0 0.0
    %3352 = vmatprep.subr.mxu0 0.0
    %3353 = vmatpush2.msra.mxu0 0.0
    %3354 = vmatprep.subr.mxu0 0.0
    %3355 = vmatpush2.msra.mxu0 0.0
    %3356 = vmatprep.subr.mxu0 0.0
    %3357 = vmatpush2.msra.mxu0 0.0
    %3358 = vmatprep.subr.mxu0 0.0
    %3359 = vmatpush2.msra.mxu0 0.0
    %3360 = vmatprep.subr.mxu0 0.0
    %3361 = vmatpush2.msra.mxu0 0.0
    %3362 = vmatprep.mubr.f32.mxu0 0.0
    %3363 = vmatmul.mubr.f32.gmra.mxu0 %v3174
    %v3364 = vpop.f32.mrf.mxu0
    %v3365 = vadd.f32 0.0, %v3364
    %v3366 = vpop.f32.mrf.mxu0
    %3367 = vdwg.mxu0
    %v3368 = vadd.f32 %v3176, %v3294
    %v3369 = vxor.u32 %v3368, 2147483648
    %v3370 = vmul.f32 %v3369, 1.442695
    %v3371 = vpow.pop %v3370
    %v3372 = vadd.f32 %v3371, 1.0
    %v3373 = vrcp.pop %v3372
    %v3374 = vmul.f32 1.0, %v3373
    %v3375 = vadd.f32 %v3177, %v3296
    %v3376 = vxor.u32 %v3375, 2147483648
    %v3377 = vmul.f32 %v3376, 1.442695
    %v3378 = vpow.pop %v3377
    %v3379 = vadd.f32 %v3378, 1.0
    %v3380 = vrcp.pop %v3379
    %v3381 = vmul.f32 1.0, %v3380
    %v3382 = vld [vmem:[%s2715] sm:$0x1]
    %v3384 = vlaneseq
    %v3385 = vshrl.u32 %v3384, 7
    %v3386 = vsub.s32 0, %v3385
    %v3387 = vrot.slane %v3382, %v3386
    %v3389 = vadd.f32 %v3365, %v3387
    %v3390 = vmul.f32 %v3374, %v3389
    %v3391 = vadd.f32 %v3178, %v3390
    %v3392 = vtanh.pop %v3391
    %v3393 = vsub.f32 1.0, %v3381
    %v3394 = vmul.f32 %v3393, %v3392
    %v3395 = vmul.f32 %v3381, %v3174
    %v3396 = vadd.f32 %v3394, %v3395
    %3397 = vst [vmem:[%s1290] sm:$0xff] %v3396
    %v3398 = vld [vmem:[%s1292] sm:$0xff]
    %v3399 = vld [vmem:[%s1292 + $0x8] sm:$0xff]
    %v3400 = vld [vmem:[%s1292 + $0x10] sm:$0xff]
    %v3401 = vld [vmem:[%s2511] sm:$0xff]
    %v3402 = vld [vmem:[%s2511 + $0x8] sm:$0xff]
    %v3403 = vld [vmem:[%s2511 + $0x10] sm:$0xff]
    %v3404 = vld [vmem:[%s2511 + $0x18] sm:$0xff]
    %v3405 = vld [vmem:[%s2511 + $0x20] sm:$0xff]
    %v3406 = vld [vmem:[%s2511 + $0x28] sm:$0xff]
    %v3407 = vld [vmem:[%s2511 + $0x30] sm:$0xff]
    %v3408 = vld [vmem:[%s2511 + $0x38] sm:$0xff]
    %v3409 = vld [vmem:[%s2511 + $0x40] sm:$0xff]
    %v3410 = vld [vmem:[%s2511 + $0x48] sm:$0xff]
    %v3411 = vld [vmem:[%s2511 + $0x50] sm:$0xff]
    %v3412 = vld [vmem:[%s2511 + $0x58] sm:$0xff]
    %v3413 = vld [vmem:[%s2511 + $0x60] sm:$0xff]
    %v3414 = vld [vmem:[%s2511 + $0x68] sm:$0xff]
    %v3415 = vld [vmem:[%s2511 + $0x70] sm:$0xff]
    %v3416 = vld [vmem:[%s2511 + $0x78] sm:$0xff]
    %v3417 = vld [vmem:[%s2511 + $0x80] sm:$0xff]
    %v3418 = vld [vmem:[%s2511 + $0x88] sm:$0xff]
    %v3419 = vld [vmem:[%s2511 + $0x90] sm:$0xff]
    %v3420 = vld [vmem:[%s2511 + $0x98] sm:$0xff]
    %v3421 = vld [vmem:[%s2511 + $0xa0] sm:$0xff]
    %v3422 = vld [vmem:[%s2511 + $0xa8] sm:$0xff]
    %v3423 = vld [vmem:[%s2511 + $0xb0] sm:$0xff]
    %v3424 = vld [vmem:[%s2511 + $0xb8] sm:$0xff]
    %v3425 = vld [vmem:[%s2511 + $0xc0] sm:$0xff]
    %v3426 = vld [vmem:[%s2511 + $0xc8] sm:$0xff]
    %v3427 = vld [vmem:[%s2511 + $0xd0] sm:$0xff]
    %v3428 = vld [vmem:[%s2511 + $0xd8] sm:$0xff]
    %v3429 = vld [vmem:[%s2511 + $0xe0] sm:$0xff]
    %v3430 = vld [vmem:[%s2511 + $0xe8] sm:$0xff]
    %v3431 = vld [vmem:[%s2511 + $0xf0] sm:$0xff]
    %v3432 = vld [vmem:[%s2511 + $0xf8] sm:$0xff]
    %v3433 = vld [vmem:[%s2511 + $0x100] sm:$0xff]
    %v3434 = vld [vmem:[%s2511 + $0x108] sm:$0xff]
    %v3435 = vld [vmem:[%s2511 + $0x110] sm:$0xff]
    %v3436 = vld [vmem:[%s2511 + $0x118] sm:$0xff]
    %v3437 = vld [vmem:[%s2511 + $0x120] sm:$0xff]
    %v3438 = vld [vmem:[%s2511 + $0x128] sm:$0xff]
    %v3439 = vld [vmem:[%s2511 + $0x130] sm:$0xff]
    %v3440 = vld [vmem:[%s2511 + $0x138] sm:$0xff]
    %v3441 = vld [vmem:[%s2511 + $0x140] sm:$0xff]
    %v3442 = vld [vmem:[%s2511 + $0x148] sm:$0xff]
    %v3443 = vld [vmem:[%s2511 + $0x150] sm:$0xff]
    %v3444 = vld [vmem:[%s2511 + $0x158] sm:$0xff]
    %v3445 = vld [vmem:[%s2511 + $0x160] sm:$0xff]
    %v3446 = vld [vmem:[%s2511 + $0x168] sm:$0xff]
    %v3447 = vld [vmem:[%s2511 + $0x170] sm:$0xff]
    %v3448 = vld [vmem:[%s2511 + $0x178] sm:$0xff]
    %3449 = vmatprep.subr.mxu0 %v3447
    %3450 = vmatpush1.msra.mxu0 %v3446
    %3451 = vmatprep.subr.mxu0 %v3444
    %3452 = vmatpush1.msra.mxu0 %v3443
    %3453 = vmatprep.subr.mxu0 %v3441
    %3454 = vmatpush1.msra.mxu0 %v3440
    %3455 = vmatprep.subr.mxu0 %v3438
    %3456 = vmatpush1.msra.mxu0 %v3437
    %3457 = vmatprep.subr.mxu0 %v3435
    %3458 = vmatpush1.msra.mxu0 %v3434
    %3459 = vmatprep.subr.mxu0 %v3432
    %3460 = vmatpush1.msra.mxu0 %v3431
    %3461 = vmatprep.subr.mxu0 %v3429
    %3462 = vmatpush1.msra.mxu0 %v3428
    %3463 = vmatprep.subr.mxu0 %v3426
    %3464 = vmatpush1.msra.mxu0 %v3425
    %3465 = vmatprep.subr.mxu0 %v3423
    %3466 = vmatpush1.msra.mxu0 %v3422
    %3467 = vmatprep.subr.mxu0 %v3420
    %3468 = vmatpush1.msra.mxu0 %v3419
    %3469 = vmatprep.subr.mxu0 %v3417
    %3470 = vmatpush1.msra.mxu0 %v3416
    %3471 = vmatprep.subr.mxu0 %v3414
    %3472 = vmatpush1.msra.mxu0 %v3413
    %3473 = vmatprep.subr.mxu0 %v3411
    %3474 = vmatpush1.msra.mxu0 %v3410
    %3475 = vmatprep.subr.mxu0 %v3408
    %3476 = vmatpush1.msra.mxu0 %v3407
    %3477 = vmatprep.subr.mxu0 %v3405
    %3478 = vmatpush1.msra.mxu0 %v3404
    %3479 = vmatprep.subr.mxu0 %v3402
    %3480 = vmatpush1.msra.mxu0 %v3401
    %3481 = vmatprep.subr.mxu0 0.0
    %3482 = vmatpush2.msra.mxu0 0.0
    %3483 = vmatprep.subr.mxu0 0.0
    %3484 = vmatpush2.msra.mxu0 0.0
    %3485 = vmatprep.subr.mxu0 0.0
    %3486 = vmatpush2.msra.mxu0 0.0
    %3487 = vmatprep.subr.mxu0 0.0
    %3488 = vmatpush2.msra.mxu0 0.0
    %3489 = vmatprep.subr.mxu0 0.0
    %3490 = vmatpush2.msra.mxu0 0.0
    %3491 = vmatprep.subr.mxu0 0.0
    %3492 = vmatpush2.msra.mxu0 0.0
    %3493 = vmatprep.subr.mxu0 0.0
    %3494 = vmatpush2.msra.mxu0 0.0
    %3495 = vmatprep.subr.mxu0 0.0
    %3496 = vmatpush2.msra.mxu0 0.0
    %3497 = vmatprep.subr.mxu0 0.0
    %3498 = vmatpush2.msra.mxu0 0.0
    %3499 = vmatprep.subr.mxu0 0.0
    %3500 = vmatpush2.msra.mxu0 0.0
    %3501 = vmatprep.subr.mxu0 0.0
    %3502 = vmatpush2.msra.mxu0 0.0
    %3503 = vmatprep.subr.mxu0 0.0
    %3504 = vmatpush2.msra.mxu0 0.0
    %3505 = vmatprep.subr.mxu0 0.0
    %3506 = vmatpush2.msra.mxu0 0.0
    %3507 = vmatprep.subr.mxu0 0.0
    %3508 = vmatpush2.msra.mxu0 0.0
    %3509 = vmatprep.subr.mxu0 0.0
    %3510 = vmatpush2.msra.mxu0 0.0
    %3511 = vmatprep.subr.mxu0 0.0
    %3512 = vmatpush2.msra.mxu0 0.0
    %3513 = vmatprep.mubr.f32.mxu0 0.0
    %3514 = vmatmul.mubr.f32.gmra.mxu0 %v3396
    %v3515 = vpop.f32.mrf.mxu0
    %v3516 = vadd.f32 0.0, %v3515
    %v3517 = vpop.f32.mrf.mxu0
    %v3518 = vadd.f32 0.0, %v3517
    %3519 = vdwg.mxu0
    %3520 = vmatprep.subr.mxu0 0.0
    %3521 = vmatpush1.msra.mxu0 %v3448
    %3522 = vmatprep.subr.mxu0 0.0
    %3523 = vmatpush1.msra.mxu0 %v3445
    %3524 = vmatprep.subr.mxu0 0.0
    %3525 = vmatpush1.msra.mxu0 %v3442
    %3526 = vmatprep.subr.mxu0 0.0
    %3527 = vmatpush1.msra.mxu0 %v3439
    %3528 = vmatprep.subr.mxu0 0.0
    %3529 = vmatpush1.msra.mxu0 %v3436
    %3530 = vmatprep.subr.mxu0 0.0
    %3531 = vmatpush1.msra.mxu0 %v3433
    %3532 = vmatprep.subr.mxu0 0.0
    %3533 = vmatpush1.msra.mxu0 %v3430
    %3534 = vmatprep.subr.mxu0 0.0
    %3535 = vmatpush1.msra.mxu0 %v3427
    %3536 = vmatprep.subr.mxu0 0.0
    %3537 = vmatpush1.msra.mxu0 %v3424
    %3538 = vmatprep.subr.mxu0 0.0
    %3539 = vmatpush1.msra.mxu0 %v3421
    %3540 = vmatprep.subr.mxu0 0.0
    %3541 = vmatpush1.msra.mxu0 %v3418
    %3542 = vmatprep.subr.mxu0 0.0
    %3543 = vmatpush1.msra.mxu0 %v3415
    %3544 = vmatprep.subr.mxu0 0.0
    %3545 = vmatpush1.msra.mxu0 %v3412
    %3546 = vmatprep.subr.mxu0 0.0
    %3547 = vmatpush1.msra.mxu0 %v3409
    %3548 = vmatprep.subr.mxu0 0.0
    %3549 = vmatpush1.msra.mxu0 %v3406
    %3550 = vmatprep.subr.mxu0 0.0
    %3551 = vmatpush1.msra.mxu0 %v3403
    %3552 = vmatprep.subr.mxu0 0.0
    %3553 = vmatpush2.msra.mxu0 0.0
    %3554 = vmatprep.subr.mxu0 0.0
    %3555 = vmatpush2.msra.mxu0 0.0
    %3556 = vmatprep.subr.mxu0 0.0
    %3557 = vmatpush2.msra.mxu0 0.0
    %3558 = vmatprep.subr.mxu0 0.0
    %3559 = vmatpush2.msra.mxu0 0.0
    %3560 = vmatprep.subr.mxu0 0.0
    %3561 = vmatpush2.msra.mxu0 0.0
    %3562 = vmatprep.subr.mxu0 0.0
    %3563 = vmatpush2.msra.mxu0 0.0
    %3564 = vmatprep.subr.mxu0 0.0
    %3565 = vmatpush2.msra.mxu0 0.0
    %3566 = vmatprep.subr.mxu0 0.0
    %3567 = vmatpush2.msra.mxu0 0.0
    %3568 = vmatprep.subr.mxu0 0.0
    %3569 = vmatpush2.msra.mxu0 0.0
    %3570 = vmatprep.subr.mxu0 0.0
    %3571 = vmatpush2.msra.mxu0 0.0
    %3572 = vmatprep.subr.mxu0 0.0
    %3573 = vmatpush2.msra.mxu0 0.0
    %3574 = vmatprep.subr.mxu0 0.0
    %3575 = vmatpush2.msra.mxu0 0.0
    %3576 = vmatprep.subr.mxu0 0.0
    %3577 = vmatpush2.msra.mxu0 0.0
    %3578 = vmatprep.subr.mxu0 0.0
    %3579 = vmatpush2.msra.mxu0 0.0
    %3580 = vmatprep.subr.mxu0 0.0
    %3581 = vmatpush2.msra.mxu0 0.0
    %3582 = vmatprep.subr.mxu0 0.0
    %3583 = vmatpush2.msra.mxu0 0.0
    %3584 = vmatprep.mubr.f32.mxu0 0.0
    %3585 = vmatmul.mubr.f32.gmra.mxu0 %v3396
    %v3586 = vpop.f32.mrf.mxu0
    %v3587 = vadd.f32 0.0, %v3586
    %v3588 = vpop.f32.mrf.mxu0
    %3589 = vdwg.mxu0
    %v3590 = vadd.f32 %v3398, %v3516
    %v3591 = vxor.u32 %v3590, 2147483648
    %v3592 = vmul.f32 %v3591, 1.442695
    %v3593 = vpow.pop %v3592
    %v3594 = vadd.f32 %v3593, 1.0
    %v3595 = vrcp.pop %v3594
    %v3596 = vmul.f32 1.0, %v3595
    %v3597 = vadd.f32 %v3399, %v3518
    %v3598 = vxor.u32 %v3597, 2147483648
    %v3599 = vmul.f32 %v3598, 1.442695
    %v3600 = vpow.pop %v3599
    %v3601 = vadd.f32 %v3600, 1.0
    %v3602 = vrcp.pop %v3601
    %v3603 = vmul.f32 1.0, %v3602
    %v3604 = vld [vmem:[%s2715] sm:$0x1]
    %v3606 = vlaneseq
    %v3607 = vshrl.u32 %v3606, 7
    %v3608 = vsub.s32 0, %v3607
    %v3609 = vrot.slane %v3604, %v3608
    %v3611 = vadd.f32 %v3587, %v3609
    %v3612 = vmul.f32 %v3596, %v3611
    %v3613 = vadd.f32 %v3400, %v3612
    %v3614 = vtanh.pop %v3613
    %v3615 = vsub.f32 1.0, %v3603
    %v3616 = vmul.f32 %v3615, %v3614
    %v3617 = vmul.f32 %v3603, %v3396
    %v3618 = vadd.f32 %v3616, %v3617
    %3619 = vst [vmem:[%s1514] sm:$0xff] %v3618
    %v3620 = vld [vmem:[%s1516] sm:$0xff]
    %v3621 = vld [vmem:[%s1516 + $0x8] sm:$0xff]
    %v3622 = vld [vmem:[%s1516 + $0x10] sm:$0xff]
    %v3623 = vld [vmem:[%s2511] sm:$0xff]
    %v3624 = vld [vmem:[%s2511 + $0x8] sm:$0xff]
    %v3625 = vld [vmem:[%s2511 + $0x10] sm:$0xff]
    %v3626 = vld [vmem:[%s2511 + $0x18] sm:$0xff]
    %v3627 = vld [vmem:[%s2511 + $0x20] sm:$0xff]
    %v3628 = vld [vmem:[%s2511 + $0x28] sm:$0xff]
    %v3629 = vld [vmem:[%s2511 + $0x30] sm:$0xff]
    %v3630 = vld [vmem:[%s2511 + $0x38] sm:$0xff]
    %v3631 = vld [vmem:[%s2511 + $0x40] sm:$0xff]
    %v3632 = vld [vmem:[%s2511 + $0x48] sm:$0xff]
    %v3633 = vld [vmem:[%s2511 + $0x50] sm:$0xff]
    %v3634 = vld [vmem:[%s2511 + $0x58] sm:$0xff]
    %v3635 = vld [vmem:[%s2511 + $0x60] sm:$0xff]
    %v3636 = vld [vmem:[%s2511 + $0x68] sm:$0xff]
    %v3637 = vld [vmem:[%s2511 + $0x70] sm:$0xff]
    %v3638 = vld [vmem:[%s2511 + $0x78] sm:$0xff]
    %v3639 = vld [vmem:[%s2511 + $0x80] sm:$0xff]
    %v3640 = vld [vmem:[%s2511 + $0x88] sm:$0xff]
    %v3641 = vld [vmem:[%s2511 + $0x90] sm:$0xff]
    %v3642 = vld [vmem:[%s2511 + $0x98] sm:$0xff]
    %v3643 = vld [vmem:[%s2511 + $0xa0] sm:$0xff]
    %v3644 = vld [vmem:[%s2511 + $0xa8] sm:$0xff]
    %v3645 = vld [vmem:[%s2511 + $0xb0] sm:$0xff]
    %v3646 = vld [vmem:[%s2511 + $0xb8] sm:$0xff]
    %v3647 = vld [vmem:[%s2511 + $0xc0] sm:$0xff]
    %v3648 = vld [vmem:[%s2511 + $0xc8] sm:$0xff]
    %v3649 = vld [vmem:[%s2511 + $0xd0] sm:$0xff]
    %v3650 = vld [vmem:[%s2511 + $0xd8] sm:$0xff]
    %v3651 = vld [vmem:[%s2511 + $0xe0] sm:$0xff]
    %v3652 = vld [vmem:[%s2511 + $0xe8] sm:$0xff]
    %v3653 = vld [vmem:[%s2511 + $0xf0] sm:$0xff]
    %v3654 = vld [vmem:[%s2511 + $0xf8] sm:$0xff]
    %v3655 = vld [vmem:[%s2511 + $0x100] sm:$0xff]
    %v3656 = vld [vmem:[%s2511 + $0x108] sm:$0xff]
    %v3657 = vld [vmem:[%s2511 + $0x110] sm:$0xff]
    %v3658 = vld [vmem:[%s2511 + $0x118] sm:$0xff]
    %v3659 = vld [vmem:[%s2511 + $0x120] sm:$0xff]
    %v3660 = vld [vmem:[%s2511 + $0x128] sm:$0xff]
    %v3661 = vld [vmem:[%s2511 + $0x130] sm:$0xff]
    %v3662 = vld [vmem:[%s2511 + $0x138] sm:$0xff]
    %v3663 = vld [vmem:[%s2511 + $0x140] sm:$0xff]
    %v3664 = vld [vmem:[%s2511 + $0x148] sm:$0xff]
    %v3665 = vld [vmem:[%s2511 + $0x150] sm:$0xff]
    %v3666 = vld [vmem:[%s2511 + $0x158] sm:$0xff]
    %v3667 = vld [vmem:[%s2511 + $0x160] sm:$0xff]
    %v3668 = vld [vmem:[%s2511 + $0x168] sm:$0xff]
    %v3669 = vld [vmem:[%s2511 + $0x170] sm:$0xff]
    %v3670 = vld [vmem:[%s2511 + $0x178] sm:$0xff]
    %3671 = vmatprep.subr.mxu0 %v3669
    %3672 = vmatpush1.msra.mxu0 %v3668
    %3673 = vmatprep.subr.mxu0 %v3666
    %3674 = vmatpush1.msra.mxu0 %v3665
    %3675 = vmatprep.subr.mxu0 %v3663
    %3676 = vmatpush1.msra.mxu0 %v3662
    %3677 = vmatprep.subr.mxu0 %v3660
    %3678 = vmatpush1.msra.mxu0 %v3659
    %3679 = vmatprep.subr.mxu0 %v3657
    %3680 = vmatpush1.msra.mxu0 %v3656
    %3681 = vmatprep.subr.mxu0 %v3654
    %3682 = vmatpush1.msra.mxu0 %v3653
    %3683 = vmatprep.subr.mxu0 %v3651
    %3684 = vmatpush1.msra.mxu0 %v3650
    %3685 = vmatprep.subr.mxu0 %v3648
    %3686 = vmatpush1.msra.mxu0 %v3647
    %3687 = vmatprep.subr.mxu0 %v3645
    %3688 = vmatpush1.msra.mxu0 %v3644
    %3689 = vmatprep.subr.mxu0 %v3642
    %3690 = vmatpush1.msra.mxu0 %v3641
    %3691 = vmatprep.subr.mxu0 %v3639
    %3692 = vmatpush1.msra.mxu0 %v3638
    %3693 = vmatprep.subr.mxu0 %v3636
    %3694 = vmatpush1.msra.mxu0 %v3635
    %3695 = vmatprep.subr.mxu0 %v3633
    %3696 = vmatpush1.msra.mxu0 %v3632
    %3697 = vmatprep.subr.mxu0 %v3630
    %3698 = vmatpush1.msra.mxu0 %v3629
    %3699 = vmatprep.subr.mxu0 %v3627
    %3700 = vmatpush1.msra.mxu0 %v3626
    %3701 = vmatprep.subr.mxu0 %v3624
    %3702 = vmatpush1.msra.mxu0 %v3623
    %3703 = vmatprep.subr.mxu0 0.0
    %3704 = vmatpush2.msra.mxu0 0.0
    %3705 = vmatprep.subr.mxu0 0.0
    %3706 = vmatpush2.msra.mxu0 0.0
    %3707 = vmatprep.subr.mxu0 0.0
    %3708 = vmatpush2.msra.mxu0 0.0
    %3709 = vmatprep.subr.mxu0 0.0
    %3710 = vmatpush2.msra.mxu0 0.0
    %3711 = vmatprep.subr.mxu0 0.0
    %3712 = vmatpush2.msra.mxu0 0.0
    %3713 = vmatprep.subr.mxu0 0.0
    %3714 = vmatpush2.msra.mxu0 0.0
    %3715 = vmatprep.subr.mxu0 0.0
    %3716 = vmatpush2.msra.mxu0 0.0
    %3717 = vmatprep.subr.mxu0 0.0
    %3718 = vmatpush2.msra.mxu0 0.0
    %3719 = vmatprep.subr.mxu0 0.0
    %3720 = vmatpush2.msra.mxu0 0.0
    %3721 = vmatprep.subr.mxu0 0.0
    %3722 = vmatpush2.msra.mxu0 0.0
    %3723 = vmatprep.subr.mxu0 0.0
    %3724 = vmatpush2.msra.mxu0 0.0
    %3725 = vmatprep.subr.mxu0 0.0
    %3726 = vmatpush2.msra.mxu0 0.0
    %3727 = vmatprep.subr.mxu0 0.0
    %3728 = vmatpush2.msra.mxu0 0.0
    %3729 = vmatprep.subr.mxu0 0.0
    %3730 = vmatpush2.msra.mxu0 0.0
    %3731 = vmatprep.subr.mxu0 0.0
    %3732 = vmatpush2.msra.mxu0 0.0
    %3733 = vmatprep.subr.mxu0 0.0
    %3734 = vmatpush2.msra.mxu0 0.0
    %3735 = vmatprep.mubr.f32.mxu0 0.0
    %3736 = vmatmul.mubr.f32.gmra.mxu0 %v3618
    %v3737 = vpop.f32.mrf.mxu0
    %v3738 = vadd.f32 0.0, %v3737
    %v3739 = vpop.f32.mrf.mxu0
    %v3740 = vadd.f32 0.0, %v3739
    %3741 = vdwg.mxu0
    %3742 = vmatprep.subr.mxu0 0.0
    %3743 = vmatpush1.msra.mxu0 %v3670
    %3744 = vmatprep.subr.mxu0 0.0
    %3745 = vmatpush1.msra.mxu0 %v3667
    %3746 = vmatprep.subr.mxu0 0.0
    %3747 = vmatpush1.msra.mxu0 %v3664
    %3748 = vmatprep.subr.mxu0 0.0
    %3749 = vmatpush1.msra.mxu0 %v3661
    %3750 = vmatprep.subr.mxu0 0.0
    %3751 = vmatpush1.msra.mxu0 %v3658
    %3752 = vmatprep.subr.mxu0 0.0
    %3753 = vmatpush1.msra.mxu0 %v3655
    %3754 = vmatprep.subr.mxu0 0.0
    %3755 = vmatpush1.msra.mxu0 %v3652
    %3756 = vmatprep.subr.mxu0 0.0
    %3757 = vmatpush1.msra.mxu0 %v3649
    %3758 = vmatprep.subr.mxu0 0.0
    %3759 = vmatpush1.msra.mxu0 %v3646
    %3760 = vmatprep.subr.mxu0 0.0
    %3761 = vmatpush1.msra.mxu0 %v3643
    %3762 = vmatprep.subr.mxu0 0.0
    %3763 = vmatpush1.msra.mxu0 %v3640
    %3764 = vmatprep.subr.mxu0 0.0
    %3765 = vmatpush1.msra.mxu0 %v3637
    %3766 = vmatprep.subr.mxu0 0.0
    %3767 = vmatpush1.msra.mxu0 %v3634
    %3768 = vmatprep.subr.mxu0 0.0
    %3769 = vmatpush1.msra.mxu0 %v3631
    %3770 = vmatprep.subr.mxu0 0.0
    %3771 = vmatpush1.msra.mxu0 %v3628
    %3772 = vmatprep.subr.mxu0 0.0
    %3773 = vmatpush1.msra.mxu0 %v3625
    %3774 = vmatprep.subr.mxu0 0.0
    %3775 = vmatpush2.msra.mxu0 0.0
    %3776 = vmatprep.subr.mxu0 0.0
    %3777 = vmatpush2.msra.mxu0 0.0
    %3778 = vmatprep.subr.mxu0 0.0
    %3779 = vmatpush2.msra.mxu0 0.0
    %3780 = vmatprep.subr.mxu0 0.0
    %3781 = vmatpush2.msra.mxu0 0.0
    %3782 = vmatprep.subr.mxu0 0.0
    %3783 = vmatpush2.msra.mxu0 0.0
    %3784 = vmatprep.subr.mxu0 0.0
    %3785 = vmatpush2.msra.mxu0 0.0
    %3786 = vmatprep.subr.mxu0 0.0
    %3787 = vmatpush2.msra.mxu0 0.0
    %3788 = vmatprep.subr.mxu0 0.0
    %3789 = vmatpush2.msra.mxu0 0.0
    %3790 = vmatprep.subr.mxu0 0.0
    %3791 = vmatpush2.msra.mxu0 0.0
    %3792 = vmatprep.subr.mxu0 0.0
    %3793 = vmatpush2.msra.mxu0 0.0
    %3794 = vmatprep.subr.mxu0 0.0
    %3795 = vmatpush2.msra.mxu0 0.0
    %3796 = vmatprep.subr.mxu0 0.0
    %3797 = vmatpush2.msra.mxu0 0.0
    %3798 = vmatprep.subr.mxu0 0.0
    %3799 = vmatpush2.msra.mxu0 0.0
    %3800 = vmatprep.subr.mxu0 0.0
    %3801 = vmatpush2.msra.mxu0 0.0
    %3802 = vmatprep.subr.mxu0 0.0
    %3803 = vmatpush2.msra.mxu0 0.0
    %3804 = vmatprep.subr.mxu0 0.0
    %3805 = vmatpush2.msra.mxu0 0.0
    %3806 = vmatprep.mubr.f32.mxu0 0.0
    %3807 = vmatmul.mubr.f32.gmra.mxu0 %v3618
    %v3808 = vpop.f32.mrf.mxu0
    %v3809 = vadd.f32 0.0, %v3808
    %v3810 = vpop.f32.mrf.mxu0
    %3811 = vdwg.mxu0
    %v3812 = vadd.f32 %v3620, %v3738
    %v3813 = vxor.u32 %v3812, 2147483648
    %v3814 = vmul.f32 %v3813, 1.442695
    %v3815 = vpow.pop %v3814
    %v3816 = vadd.f32 %v3815, 1.0
    %v3817 = vrcp.pop %v3816
    %v3818 = vmul.f32 1.0, %v3817
    %v3819 = vadd.f32 %v3621, %v3740
    %v3820 = vxor.u32 %v3819, 2147483648
    %v3821 = vmul.f32 %v3820, 1.442695
    %v3822 = vpow.pop %v3821
    %v3823 = vadd.f32 %v3822, 1.0
    %v3824 = vrcp.pop %v3823
    %v3825 = vmul.f32 1.0, %v3824
    %v3826 = vld [vmem:[%s2715] sm:$0x1]
    %v3828 = vlaneseq
    %v3829 = vshrl.u32 %v3828, 7
    %v3830 = vsub.s32 0, %v3829
    %v3831 = vrot.slane %v3826, %v3830
    %v3833 = vadd.f32 %v3809, %v3831
    %v3834 = vmul.f32 %v3818, %v3833
    %v3835 = vadd.f32 %v3622, %v3834
    %v3836 = vtanh.pop %v3835
    %v3837 = vsub.f32 1.0, %v3825
    %v3838 = vmul.f32 %v3837, %v3836
    %v3839 = vmul.f32 %v3825, %v3618
    %v3840 = vadd.f32 %v3838, %v3839
    %3841 = vst [vmem:[%s1738] sm:$0xff] %v3840
    %v3842 = vld [vmem:[%s1740] sm:$0xff]
    %v3843 = vld [vmem:[%s1740 + $0x8] sm:$0xff]
    %v3844 = vld [vmem:[%s1740 + $0x10] sm:$0xff]
    %v3845 = vld [vmem:[%s2511] sm:$0xff]
    %v3846 = vld [vmem:[%s2511 + $0x8] sm:$0xff]
    %v3847 = vld [vmem:[%s2511 + $0x10] sm:$0xff]
    %v3848 = vld [vmem:[%s2511 + $0x18] sm:$0xff]
    %v3849 = vld [vmem:[%s2511 + $0x20] sm:$0xff]
    %v3850 = vld [vmem:[%s2511 + $0x28] sm:$0xff]
    %v3851 = vld [vmem:[%s2511 + $0x30] sm:$0xff]
    %v3852 = vld [vmem:[%s2511 + $0x38] sm:$0xff]
    %v3853 = vld [vmem:[%s2511 + $0x40] sm:$0xff]
    %v3854 = vld [vmem:[%s2511 + $0x48] sm:$0xff]
    %v3855 = vld [vmem:[%s2511 + $0x50] sm:$0xff]
    %v3856 = vld [vmem:[%s2511 + $0x58] sm:$0xff]
    %v3857 = vld [vmem:[%s2511 + $0x60] sm:$0xff]
    %v3858 = vld [vmem:[%s2511 + $0x68] sm:$0xff]
    %v3859 = vld [vmem:[%s2511 + $0x70] sm:$0xff]
    %v3860 = vld [vmem:[%s2511 + $0x78] sm:$0xff]
    %v3861 = vld [vmem:[%s2511 + $0x80] sm:$0xff]
    %v3862 = vld [vmem:[%s2511 + $0x88] sm:$0xff]
    %v3863 = vld [vmem:[%s2511 + $0x90] sm:$0xff]
    %v3864 = vld [vmem:[%s2511 + $0x98] sm:$0xff]
    %v3865 = vld [vmem:[%s2511 + $0xa0] sm:$0xff]
    %v3866 = vld [vmem:[%s2511 + $0xa8] sm:$0xff]
    %v3867 = vld [vmem:[%s2511 + $0xb0] sm:$0xff]
    %v3868 = vld [vmem:[%s2511 + $0xb8] sm:$0xff]
    %v3869 = vld [vmem:[%s2511 + $0xc0] sm:$0xff]
    %v3870 = vld [vmem:[%s2511 + $0xc8] sm:$0xff]
    %v3871 = vld [vmem:[%s2511 + $0xd0] sm:$0xff]
    %v3872 = vld [vmem:[%s2511 + $0xd8] sm:$0xff]
    %v3873 = vld [vmem:[%s2511 + $0xe0] sm:$0xff]
    %v3874 = vld [vmem:[%s2511 + $0xe8] sm:$0xff]
    %v3875 = vld [vmem:[%s2511 + $0xf0] sm:$0xff]
    %v3876 = vld [vmem:[%s2511 + $0xf8] sm:$0xff]
    %v3877 = vld [vmem:[%s2511 + $0x100] sm:$0xff]
    %v3878 = vld [vmem:[%s2511 + $0x108] sm:$0xff]
    %v3879 = vld [vmem:[%s2511 + $0x110] sm:$0xff]
    %v3880 = vld [vmem:[%s2511 + $0x118] sm:$0xff]
    %v3881 = vld [vmem:[%s2511 + $0x120] sm:$0xff]
    %v3882 = vld [vmem:[%s2511 + $0x128] sm:$0xff]
    %v3883 = vld [vmem:[%s2511 + $0x130] sm:$0xff]
    %v3884 = vld [vmem:[%s2511 + $0x138] sm:$0xff]
    %v3885 = vld [vmem:[%s2511 + $0x140] sm:$0xff]
    %v3886 = vld [vmem:[%s2511 + $0x148] sm:$0xff]
    %v3887 = vld [vmem:[%s2511 + $0x150] sm:$0xff]
    %v3888 = vld [vmem:[%s2511 + $0x158] sm:$0xff]
    %v3889 = vld [vmem:[%s2511 + $0x160] sm:$0xff]
    %v3890 = vld [vmem:[%s2511 + $0x168] sm:$0xff]
    %v3891 = vld [vmem:[%s2511 + $0x170] sm:$0xff]
    %v3892 = vld [vmem:[%s2511 + $0x178] sm:$0xff]
    %3893 = vmatprep.subr.mxu0 %v3891
    %3894 = vmatpush1.msra.mxu0 %v3890
    %3895 = vmatprep.subr.mxu0 %v3888
    %3896 = vmatpush1.msra.mxu0 %v3887
    %3897 = vmatprep.subr.mxu0 %v3885
    %3898 = vmatpush1.msra.mxu0 %v3884
    %3899 = vmatprep.subr.mxu0 %v3882
    %3900 = vmatpush1.msra.mxu0 %v3881
    %3901 = vmatprep.subr.mxu0 %v3879
    %3902 = vmatpush1.msra.mxu0 %v3878
    %3903 = vmatprep.subr.mxu0 %v3876
    %3904 = vmatpush1.msra.mxu0 %v3875
    %3905 = vmatprep.subr.mxu0 %v3873
    %3906 = vmatpush1.msra.mxu0 %v3872
    %3907 = vmatprep.subr.mxu0 %v3870
    %3908 = vmatpush1.msra.mxu0 %v3869
    %3909 = vmatprep.subr.mxu0 %v3867
    %3910 = vmatpush1.msra.mxu0 %v3866
    %3911 = vmatprep.subr.mxu0 %v3864
    %3912 = vmatpush1.msra.mxu0 %v3863
    %3913 = vmatprep.subr.mxu0 %v3861
    %3914 = vmatpush1.msra.mxu0 %v3860
    %3915 = vmatprep.subr.mxu0 %v3858
    %3916 = vmatpush1.msra.mxu0 %v3857
    %3917 = vmatprep.subr.mxu0 %v3855
    %3918 = vmatpush1.msra.mxu0 %v3854
    %3919 = vmatprep.subr.mxu0 %v3852
    %3920 = vmatpush1.msra.mxu0 %v3851
    %3921 = vmatprep.subr.mxu0 %v3849
    %3922 = vmatpush1.msra.mxu0 %v3848
    %3923 = vmatprep.subr.mxu0 %v3846
    %3924 = vmatpush1.msra.mxu0 %v3845
    %3925 = vmatprep.subr.mxu0 0.0
    %3926 = vmatpush2.msra.mxu0 0.0
    %3927 = vmatprep.subr.mxu0 0.0
    %3928 = vmatpush2.msra.mxu0 0.0
    %3929 = vmatprep.subr.mxu0 0.0
    %3930 = vmatpush2.msra.mxu0 0.0
    %3931 = vmatprep.subr.mxu0 0.0
    %3932 = vmatpush2.msra.mxu0 0.0
    %3933 = vmatprep.subr.mxu0 0.0
    %3934 = vmatpush2.msra.mxu0 0.0
    %3935 = vmatprep.subr.mxu0 0.0
    %3936 = vmatpush2.msra.mxu0 0.0
    %3937 = vmatprep.subr.mxu0 0.0
    %3938 = vmatpush2.msra.mxu0 0.0
    %3939 = vmatprep.subr.mxu0 0.0
    %3940 = vmatpush2.msra.mxu0 0.0
    %3941 = vmatprep.subr.mxu0 0.0
    %3942 = vmatpush2.msra.mxu0 0.0
    %3943 = vmatprep.subr.mxu0 0.0
    %3944 = vmatpush2.msra.mxu0 0.0
    %3945 = vmatprep.subr.mxu0 0.0
    %3946 = vmatpush2.msra.mxu0 0.0
    %3947 = vmatprep.subr.mxu0 0.0
    %3948 = vmatpush2.msra.mxu0 0.0
    %3949 = vmatprep.subr.mxu0 0.0
    %3950 = vmatpush2.msra.mxu0 0.0
    %3951 = vmatprep.subr.mxu0 0.0
    %3952 = vmatpush2.msra.mxu0 0.0
    %3953 = vmatprep.subr.mxu0 0.0
    %3954 = vmatpush2.msra.mxu0 0.0
    %3955 = vmatprep.subr.mxu0 0.0
    %3956 = vmatpush2.msra.mxu0 0.0
    %3957 = vmatprep.mubr.f32.mxu0 0.0
    %3958 = vmatmul.mubr.f32.gmra.mxu0 %v3840
    %v3959 = vpop.f32.mrf.mxu0
    %v3960 = vadd.f32 0.0, %v3959
    %v3961 = vpop.f32.mrf.mxu0
    %v3962 = vadd.f32 0.0, %v3961
    %3963 = vdwg.mxu0
    %3964 = vmatprep.subr.mxu0 0.0
    %3965 = vmatpush1.msra.mxu0 %v3892
    %3966 = vmatprep.subr.mxu0 0.0
    %3967 = vmatpush1.msra.mxu0 %v3889
    %3968 = vmatprep.subr.mxu0 0.0
    %3969 = vmatpush1.msra.mxu0 %v3886
    %3970 = vmatprep.subr.mxu0 0.0
    %3971 = vmatpush1.msra.mxu0 %v3883
    %3972 = vmatprep.subr.mxu0 0.0
    %3973 = vmatpush1.msra.mxu0 %v3880
    %3974 = vmatprep.subr.mxu0 0.0
    %3975 = vmatpush1.msra.mxu0 %v3877
    %3976 = vmatprep.subr.mxu0 0.0
    %3977 = vmatpush1.msra.mxu0 %v3874
    %3978 = vmatprep.subr.mxu0 0.0
    %3979 = vmatpush1.msra.mxu0 %v3871
    %3980 = vmatprep.subr.mxu0 0.0
    %3981 = vmatpush1.msra.mxu0 %v3868
    %3982 = vmatprep.subr.mxu0 0.0
    %3983 = vmatpush1.msra.mxu0 %v3865
    %3984 = vmatprep.subr.mxu0 0.0
    %3985 = vmatpush1.msra.mxu0 %v3862
    %3986 = vmatprep.subr.mxu0 0.0
    %3987 = vmatpush1.msra.mxu0 %v3859
    %3988 = vmatprep.subr.mxu0 0.0
    %3989 = vmatpush1.msra.mxu0 %v3856
    %3990 = vmatprep.subr.mxu0 0.0
    %3991 = vmatpush1.msra.mxu0 %v3853
    %3992 = vmatprep.subr.mxu0 0.0
    %3993 = vmatpush1.msra.mxu0 %v3850
    %3994 = vmatprep.subr.mxu0 0.0
    %3995 = vmatpush1.msra.mxu0 %v3847
    %3996 = vmatprep.subr.mxu0 0.0
    %3997 = vmatpush2.msra.mxu0 0.0
    %3998 = vmatprep.subr.mxu0 0.0
    %3999 = vmatpush2.msra.mxu0 0.0
    %4000 = vmatprep.subr.mxu0 0.0
    %4001 = vmatpush2.msra.mxu0 0.0
    %4002 = vmatprep.subr.mxu0 0.0
    %4003 = vmatpush2.msra.mxu0 0.0
    %4004 = vmatprep.subr.mxu0 0.0
    %4005 = vmatpush2.msra.mxu0 0.0
    %4006 = vmatprep.subr.mxu0 0.0
    %4007 = vmatpush2.msra.mxu0 0.0
    %4008 = vmatprep.subr.mxu0 0.0
    %4009 = vmatpush2.msra.mxu0 0.0
    %4010 = vmatprep.subr.mxu0 0.0
    %4011 = vmatpush2.msra.mxu0 0.0
    %4012 = vmatprep.subr.mxu0 0.0
    %4013 = vmatpush2.msra.mxu0 0.0
    %4014 = vmatprep.subr.mxu0 0.0
    %4015 = vmatpush2.msra.mxu0 0.0
    %4016 = vmatprep.subr.mxu0 0.0
    %4017 = vmatpush2.msra.mxu0 0.0
    %4018 = vmatprep.subr.mxu0 0.0
    %4019 = vmatpush2.msra.mxu0 0.0
    %4020 = vmatprep.subr.mxu0 0.0
    %4021 = vmatpush2.msra.mxu0 0.0
    %4022 = vmatprep.subr.mxu0 0.0
    %4023 = vmatpush2.msra.mxu0 0.0
    %4024 = vmatprep.subr.mxu0 0.0
    %4025 = vmatpush2.msra.mxu0 0.0
    %4026 = vmatprep.subr.mxu0 0.0
    %4027 = vmatpush2.msra.mxu0 0.0
    %4028 = vmatprep.mubr.f32.mxu0 0.0
    %4029 = vmatmul.mubr.f32.gmra.mxu0 %v3840
    %v4030 = vpop.f32.mrf.mxu0
    %v4031 = vadd.f32 0.0, %v4030
    %v4032 = vpop.f32.mrf.mxu0
    %4033 = vdwg.mxu0
    %v4034 = vadd.f32 %v3842, %v3960
    %v4035 = vxor.u32 %v4034, 2147483648
    %v4036 = vmul.f32 %v4035, 1.442695
    %v4037 = vpow.pop %v4036
    %v4038 = vadd.f32 %v4037, 1.0
    %v4039 = vrcp.pop %v4038
    %v4040 = vmul.f32 1.0, %v4039
    %v4041 = vadd.f32 %v3843, %v3962
    %v4042 = vxor.u32 %v4041, 2147483648
    %v4043 = vmul.f32 %v4042, 1.442695
    %v4044 = vpow.pop %v4043
    %v4045 = vadd.f32 %v4044, 1.0
    %v4046 = vrcp.pop %v4045
    %v4047 = vmul.f32 1.0, %v4046
    %v4048 = vld [vmem:[%s2715] sm:$0x1]
    %v4050 = vlaneseq
    %v4051 = vshrl.u32 %v4050, 7
    %v4052 = vsub.s32 0, %v4051
    %v4053 = vrot.slane %v4048, %v4052
    %v4055 = vadd.f32 %v4031, %v4053
    %v4056 = vmul.f32 %v4040, %v4055
    %v4057 = vadd.f32 %v3844, %v4056
    %v4058 = vtanh.pop %v4057
    %v4059 = vsub.f32 1.0, %v4047
    %v4060 = vmul.f32 %v4059, %v4058
    %v4061 = vmul.f32 %v4047, %v3840
    %v4062 = vadd.f32 %v4060, %v4061
    %4063 = vst [vmem:[%s1962] sm:$0xff] %v4062
    %v4064 = vld [vmem:[%s1964] sm:$0xff]
    %v4065 = vld [vmem:[%s1964 + $0x8] sm:$0xff]
    %v4066 = vld [vmem:[%s1964 + $0x10] sm:$0xff]
    %v4067 = vld [vmem:[%s2511] sm:$0xff]
    %v4068 = vld [vmem:[%s2511 + $0x8] sm:$0xff]
    %v4069 = vld [vmem:[%s2511 + $0x10] sm:$0xff]
    %v4070 = vld [vmem:[%s2511 + $0x18] sm:$0xff]
    %v4071 = vld [vmem:[%s2511 + $0x20] sm:$0xff]
    %v4072 = vld [vmem:[%s2511 + $0x28] sm:$0xff]
    %v4073 = vld [vmem:[%s2511 + $0x30] sm:$0xff]
    %v4074 = vld [vmem:[%s2511 + $0x38] sm:$0xff]
    %v4075 = vld [vmem:[%s2511 + $0x40] sm:$0xff]
    %v4076 = vld [vmem:[%s2511 + $0x48] sm:$0xff]
    %v4077 = vld [vmem:[%s2511 + $0x50] sm:$0xff]
    %v4078 = vld [vmem:[%s2511 + $0x58] sm:$0xff]
    %v4079 = vld [vmem:[%s2511 + $0x60] sm:$0xff]
    %v4080 = vld [vmem:[%s2511 + $0x68] sm:$0xff]
    %v4081 = vld [vmem:[%s2511 + $0x70] sm:$0xff]
    %v4082 = vld [vmem:[%s2511 + $0x78] sm:$0xff]
    %v4083 = vld [vmem:[%s2511 + $0x80] sm:$0xff]
    %v4084 = vld [vmem:[%s2511 + $0x88] sm:$0xff]
    %v4085 = vld [vmem:[%s2511 + $0x90] sm:$0xff]
    %v4086 = vld [vmem:[%s2511 + $0x98] sm:$0xff]
    %v4087 = vld [vmem:[%s2511 + $0xa0] sm:$0xff]
    %v4088 = vld [vmem:[%s2511 + $0xa8] sm:$0xff]
    %v4089 = vld [vmem:[%s2511 + $0xb0] sm:$0xff]
    %v4090 = vld [vmem:[%s2511 + $0xb8] sm:$0xff]
    %v4091 = vld [vmem:[%s2511 + $0xc0] sm:$0xff]
    %v4092 = vld [vmem:[%s2511 + $0xc8] sm:$0xff]
    %v4093 = vld [vmem:[%s2511 + $0xd0] sm:$0xff]
    %v4094 = vld [vmem:[%s2511 + $0xd8] sm:$0xff]
    %v4095 = vld [vmem:[%s2511 + $0xe0] sm:$0xff]
    %v4096 = vld [vmem:[%s2511 + $0xe8] sm:$0xff]
    %v4097 = vld [vmem:[%s2511 + $0xf0] sm:$0xff]
    %v4098 = vld [vmem:[%s2511 + $0xf8] sm:$0xff]
    %v4099 = vld [vmem:[%s2511 + $0x100] sm:$0xff]
    %v4100 = vld [vmem:[%s2511 + $0x108] sm:$0xff]
    %v4101 = vld [vmem:[%s2511 + $0x110] sm:$0xff]
    %v4102 = vld [vmem:[%s2511 + $0x118] sm:$0xff]
    %v4103 = vld [vmem:[%s2511 + $0x120] sm:$0xff]
    %v4104 = vld [vmem:[%s2511 + $0x128] sm:$0xff]
    %v4105 = vld [vmem:[%s2511 + $0x130] sm:$0xff]
    %v4106 = vld [vmem:[%s2511 + $0x138] sm:$0xff]
    %v4107 = vld [vmem:[%s2511 + $0x140] sm:$0xff]
    %v4108 = vld [vmem:[%s2511 + $0x148] sm:$0xff]
    %v4109 = vld [vmem:[%s2511 + $0x150] sm:$0xff]
    %v4110 = vld [vmem:[%s2511 + $0x158] sm:$0xff]
    %v4111 = vld [vmem:[%s2511 + $0x160] sm:$0xff]
    %v4112 = vld [vmem:[%s2511 + $0x168] sm:$0xff]
    %v4113 = vld [vmem:[%s2511 + $0x170] sm:$0xff]
    %v4114 = vld [vmem:[%s2511 + $0x178] sm:$0xff]
    %4115 = vmatprep.subr.mxu0 %v4113
    %4116 = vmatpush1.msra.mxu0 %v4112
    %4117 = vmatprep.subr.mxu0 %v4110
    %4118 = vmatpush1.msra.mxu0 %v4109
    %4119 = vmatprep.subr.mxu0 %v4107
    %4120 = vmatpush1.msra.mxu0 %v4106
    %4121 = vmatprep.subr.mxu0 %v4104
    %4122 = vmatpush1.msra.mxu0 %v4103
    %4123 = vmatprep.subr.mxu0 %v4101
    %4124 = vmatpush1.msra.mxu0 %v4100
    %4125 = vmatprep.subr.mxu0 %v4098
    %4126 = vmatpush1.msra.mxu0 %v4097
    %4127 = vmatprep.subr.mxu0 %v4095
    %4128 = vmatpush1.msra.mxu0 %v4094
    %4129 = vmatprep.subr.mxu0 %v4092
    %4130 = vmatpush1.msra.mxu0 %v4091
    %4131 = vmatprep.subr.mxu0 %v4089
    %4132 = vmatpush1.msra.mxu0 %v4088
    %4133 = vmatprep.subr.mxu0 %v4086
    %4134 = vmatpush1.msra.mxu0 %v4085
    %4135 = vmatprep.subr.mxu0 %v4083
    %4136 = vmatpush1.msra.mxu0 %v4082
    %4137 = vmatprep.subr.mxu0 %v4080
    %4138 = vmatpush1.msra.mxu0 %v4079
    %4139 = vmatprep.subr.mxu0 %v4077
    %4140 = vmatpush1.msra.mxu0 %v4076
    %4141 = vmatprep.subr.mxu0 %v4074
    %4142 = vmatpush1.msra.mxu0 %v4073
    %4143 = vmatprep.subr.mxu0 %v4071
    %4144 = vmatpush1.msra.mxu0 %v4070
    %4145 = vmatprep.subr.mxu0 %v4068
    %4146 = vmatpush1.msra.mxu0 %v4067
    %4147 = vmatprep.subr.mxu0 0.0
    %4148 = vmatpush2.msra.mxu0 0.0
    %4149 = vmatprep.subr.mxu0 0.0
    %4150 = vmatpush2.msra.mxu0 0.0
    %4151 = vmatprep.subr.mxu0 0.0
    %4152 = vmatpush2.msra.mxu0 0.0
    %4153 = vmatprep.subr.mxu0 0.0
    %4154 = vmatpush2.msra.mxu0 0.0
    %4155 = vmatprep.subr.mxu0 0.0
    %4156 = vmatpush2.msra.mxu0 0.0
    %4157 = vmatprep.subr.mxu0 0.0
    %4158 = vmatpush2.msra.mxu0 0.0
    %4159 = vmatprep.subr.mxu0 0.0
    %4160 = vmatpush2.msra.mxu0 0.0
    %4161 = vmatprep.subr.mxu0 0.0
    %4162 = vmatpush2.msra.mxu0 0.0
    %4163 = vmatprep.subr.mxu0 0.0
    %4164 = vmatpush2.msra.mxu0 0.0
    %4165 = vmatprep.subr.mxu0 0.0
    %4166 = vmatpush2.msra.mxu0 0.0
    %4167 = vmatprep.subr.mxu0 0.0
    %4168 = vmatpush2.msra.mxu0 0.0
    %4169 = vmatprep.subr.mxu0 0.0
    %4170 = vmatpush2.msra.mxu0 0.0
    %4171 = vmatprep.subr.mxu0 0.0
    %4172 = vmatpush2.msra.mxu0 0.0
    %4173 = vmatprep.subr.mxu0 0.0
    %4174 = vmatpush2.msra.mxu0 0.0
    %4175 = vmatprep.subr.mxu0 0.0
    %4176 = vmatpush2.msra.mxu0 0.0
    %4177 = vmatprep.subr.mxu0 0.0
    %4178 = vmatpush2.msra.mxu0 0.0
    %4179 = vmatprep.mubr.f32.mxu0 0.0
    %4180 = vmatmul.mubr.f32.gmra.mxu0 %v4062
    %v4181 = vpop.f32.mrf.mxu0
    %v4182 = vadd.f32 0.0, %v4181
    %v4183 = vpop.f32.mrf.mxu0
    %v4184 = vadd.f32 0.0, %v4183
    %4185 = vdwg.mxu0
    %4186 = vmatprep.subr.mxu0 0.0
    %4187 = vmatpush1.msra.mxu0 %v4114
    %4188 = vmatprep.subr.mxu0 0.0
    %4189 = vmatpush1.msra.mxu0 %v4111
    %4190 = vmatprep.subr.mxu0 0.0
    %4191 = vmatpush1.msra.mxu0 %v4108
    %4192 = vmatprep.subr.mxu0 0.0
    %4193 = vmatpush1.msra.mxu0 %v4105
    %4194 = vmatprep.subr.mxu0 0.0
    %4195 = vmatpush1.msra.mxu0 %v4102
    %4196 = vmatprep.subr.mxu0 0.0
    %4197 = vmatpush1.msra.mxu0 %v4099
    %4198 = vmatprep.subr.mxu0 0.0
    %4199 = vmatpush1.msra.mxu0 %v4096
    %4200 = vmatprep.subr.mxu0 0.0
    %4201 = vmatpush1.msra.mxu0 %v4093
    %4202 = vmatprep.subr.mxu0 0.0
    %4203 = vmatpush1.msra.mxu0 %v4090
    %4204 = vmatprep.subr.mxu0 0.0
    %4205 = vmatpush1.msra.mxu0 %v4087
    %4206 = vmatprep.subr.mxu0 0.0
    %4207 = vmatpush1.msra.mxu0 %v4084
    %4208 = vmatprep.subr.mxu0 0.0
    %4209 = vmatpush1.msra.mxu0 %v4081
    %4210 = vmatprep.subr.mxu0 0.0
    %4211 = vmatpush1.msra.mxu0 %v4078
    %4212 = vmatprep.subr.mxu0 0.0
    %4213 = vmatpush1.msra.mxu0 %v4075
    %4214 = vmatprep.subr.mxu0 0.0
    %4215 = vmatpush1.msra.mxu0 %v4072
    %4216 = vmatprep.subr.mxu0 0.0
    %4217 = vmatpush1.msra.mxu0 %v4069
    %4218 = vmatprep.subr.mxu0 0.0
    %4219 = vmatpush2.msra.mxu0 0.0
    %4220 = vmatprep.subr.mxu0 0.0
    %4221 = vmatpush2.msra.mxu0 0.0
    %4222 = vmatprep.subr.mxu0 0.0
    %4223 = vmatpush2.msra.mxu0 0.0
    %4224 = vmatprep.subr.mxu0 0.0
    %4225 = vmatpush2.msra.mxu0 0.0
    %4226 = vmatprep.subr.mxu0 0.0
    %4227 = vmatpush2.msra.mxu0 0.0
    %4228 = vmatprep.subr.mxu0 0.0
    %4229 = vmatpush2.msra.mxu0 0.0
    %4230 = vmatprep.subr.mxu0 0.0
    %4231 = vmatpush2.msra.mxu0 0.0
    %4232 = vmatprep.subr.mxu0 0.0
    %4233 = vmatpush2.msra.mxu0 0.0
    %4234 = vmatprep.subr.mxu0 0.0
    %4235 = vmatpush2.msra.mxu0 0.0
    %4236 = vmatprep.subr.mxu0 0.0
    %4237 = vmatpush2.msra.mxu0 0.0
    %4238 = vmatprep.subr.mxu0 0.0
    %4239 = vmatpush2.msra.mxu0 0.0
    %4240 = vmatprep.subr.mxu0 0.0
    %4241 = vmatpush2.msra.mxu0 0.0
    %4242 = vmatprep.subr.mxu0 0.0
    %4243 = vmatpush2.msra.mxu0 0.0
    %4244 = vmatprep.subr.mxu0 0.0
    %4245 = vmatpush2.msra.mxu0 0.0
    %4246 = vmatprep.subr.mxu0 0.0
    %4247 = vmatpush2.msra.mxu0 0.0
    %4248 = vmatprep.subr.mxu0 0.0
    %4249 = vmatpush2.msra.mxu0 0.0
    %4250 = vmatprep.mubr.f32.mxu0 0.0
    %4251 = vmatmul.mubr.f32.gmra.mxu0 %v4062
    %v4252 = vpop.f32.mrf.mxu0
    %v4253 = vadd.f32 0.0, %v4252
    %v4254 = vpop.f32.mrf.mxu0
    %4255 = vdwg.mxu0
    %v4256 = vadd.f32 %v4064, %v4182
    %v4257 = vxor.u32 %v4256, 2147483648
    %v4258 = vmul.f32 %v4257, 1.442695
    %v4259 = vpow.pop %v4258
    %v4260 = vadd.f32 %v4259, 1.0
    %v4261 = vrcp.pop %v4260
    %v4262 = vmul.f32 1.0, %v4261
    %v4263 = vadd.f32 %v4065, %v4184
    %v4264 = vxor.u32 %v4263, 2147483648
    %v4265 = vmul.f32 %v4264, 1.442695
    %v4266 = vpow.pop %v4265
    %v4267 = vadd.f32 %v4266, 1.0
    %v4268 = vrcp.pop %v4267
    %v4269 = vmul.f32 1.0, %v4268
    %v4270 = vld [vmem:[%s2715] sm:$0x1]
    %v4272 = vlaneseq
    %v4273 = vshrl.u32 %v4272, 7
    %v4274 = vsub.s32 0, %v4273
    %v4275 = vrot.slane %v4270, %v4274
    %v4277 = vadd.f32 %v4253, %v4275
    %v4278 = vmul.f32 %v4262, %v4277
    %v4279 = vadd.f32 %v4066, %v4278
    %v4280 = vtanh.pop %v4279
    %v4281 = vsub.f32 1.0, %v4269
    %v4282 = vmul.f32 %v4281, %v4280
    %v4283 = vmul.f32 %v4269, %v4062
    %v4284 = vadd.f32 %v4282, %v4283
    %4285 = vst [vmem:[%s2186] sm:$0xff] %v4284
    %4286 = vst [vmem:[%s2506] sm:$0xff] %v4284
    %v4287 = vld [vmem:[#allocation4] sm:$0xff]
    %v4288 = vld [vmem:[#allocation4 + $0x8] sm:$0xff]
    %v4289 = vld [vmem:[#allocation4 + $0x10] sm:$0xff]
    %v4290 = vld [vmem:[#allocation4 + $0x18] sm:$0xff]
    %v4291 = vld [vmem:[#allocation4 + $0x20] sm:$0xff]
    %v4292 = vld [vmem:[#allocation4 + $0x28] sm:$0xff]
    %v4293 = vld [vmem:[#allocation4 + $0x30] sm:$0xff]
    %v4294 = vld [vmem:[#allocation4 + $0x38] sm:$0xff]
    %4295 = vst [vmem:[#allocation13] sm:$0xff] %v4287
    %4296 = vst [vmem:[#allocation13 + $0x8] sm:$0xff] %v4288
    %4297 = vst [vmem:[#allocation13 + $0x10] sm:$0xff] %v4289
    %4298 = vst [vmem:[#allocation13 + $0x18] sm:$0xff] %v4290
    %4299 = vst [vmem:[#allocation13 + $0x20] sm:$0xff] %v4291
    %4300 = vst [vmem:[#allocation13 + $0x28] sm:$0xff] %v4292
    %4301 = vst [vmem:[#allocation13 + $0x30] sm:$0xff] %v4293
    %4302 = vst [vmem:[#allocation13 + $0x38] sm:$0xff] %v4294
    // Predicated region
    $region42: #{tpu_custom_call.1} parent=1 // pred_check
      _
    $region43: #{tpu_custom_call.1} parent=1 // pred_check_branch
      %4304 = sbr.rel (0) target = $region45
    $region44: #{tpu_custom_call.1} parent=1 // pred_region
      %s4306 = ssub.s32 1024, 1024
      %4307 = vsyncadd [#allocation7], %s4306
      %s4308 = sshll.u32 [#allocation13], 4
      %s4309 = int_to_ptr.vmem [resolvable:$true] %s4308
      %4314 = dma.vmem_to_hbm [thread:$0]  %s4309, 1024, %s5, [#allocation7], 128, 128, 8
    $region45: #{tpu_custom_call.1} parent=1 // pred_fallthru
      _
    // Predicated region
    $region46: #{tpu_custom_call.1} parent=1 // pred_check
      _
    $region47: #{tpu_custom_call.1} parent=1 // pred_check_branch
      %4316 = sbr.rel (0) target = $region49
    $region48: #{tpu_custom_call.1} parent=1 // pred_region
      %4317 = dma.done [#allocation7], 1024
    $region49: #{tpu_custom_call.1} parent=1 // pred_fallthru
      _
    %4318 = vsyncpa [#allocation6], 1
    %4319 = vsyncpa [#allocation9], 1
    %4320 = vsyncpa [#allocation12], 1
    %4321 = vsyncpa [#allocation7], 1

</llo_original>
